<compile_context>
chip_gen: v6e
topology: v6e:2x2x1
jax: 0.10.0
libtpu: 0.0.40
codegen_flags: <defaults>
</compile_context>

<pallas_src>
import functools

import jax
import jax.numpy as jnp
from jax.experimental import pallas as pl
from jax.experimental.pallas import tpu as pltpu

DILATIONS = (1, 2, 3, 4, 5)
DMAX = max(DILATIONS)
TK_FUSED = 128                       # channel tile of the fused dilated-conv kernel


def _query_vmem_bytes():
    try:
        info = pltpu.get_tpu_info()
        for attr in ("vmem_capacity_bytes", "vmem_size_bytes", "vmem_bytes"):
            v = getattr(info, attr, None)
            if v:
                return int(v)
    except Exception:
        pass
    return 64 * 1024 * 1024          # conservative default (v7x per-TensorCore VMEM)


# Generation-aware scoped-VMEM budget: ~48 MiB on v7x (64 MiB physical),
# ~96 MiB on v5e / v6e (128 MiB physical).
VMEM_LIMIT = max(32 * 1024 * 1024,
                 min(_query_vmem_bytes() * 3 // 4, 100 * 1024 * 1024))


def _tile_candidates(dim, quantum=128):
    """All tile sizes that divide `dim` exactly: multiples of 128 plus the full dim."""
    cands = {dim}
    t = quantum
    while t < dim:
        if dim % t == 0:
            cands.add(t)
        t += quantum
    return sorted(cands, reverse=True)


def _pick_gemm_tiles(M, K, Nf, tk_cap, tn_cap, out_bytes):
    tn_c = [t for t in _tile_candidates(Nf) if t <= tn_cap]
    tn = tn_c[0] if tn_c else Nf
    budget = int(VMEM_LIMIT * 0.6)
    tk_c = [t for t in _tile_candidates(K) if t <= tk_cap] or [K]
    for tk in tk_c:
        vmem = 2 * (M * tk + tk * tn) * 2 + 2 * M * tn * out_bytes + M * tn * 4
        if vmem <= budget:
            return tk, tn
    return tk_c[-1], tn


# --------------------------------------------------------------------------------------
# Pallas kernel 1: branch-grouped GEMM   out = relu(A[g] @ W[g] + bias[g])
#   - bf16 operands on the MXU, f32 accumulator scratch, fused bias + ReLU epilogue
#   - grid = (group, N-tiles, K-tiles); K innermost "arbitrary", group & N "parallel"
#   - output is written lane-dense as (M, G*Nf) directly (no post-transpose) when the
#     per-group column width is 128-aligned
# --------------------------------------------------------------------------------------
def _gmm_kernel(a_ref, w_ref, b_ref, o_ref, acc_ref, *, relu):
    @pl.when(pl.program_id(2) == 0)
    def _():
        acc_ref[...] = jnp.zeros_like(acc_ref)

    acc_ref[...] += jnp.dot(a_ref[0], w_ref[0], preferred_element_type=jnp.float32)

    @pl.when(pl.program_id(2) == pl.num_programs(2) - 1)
    def _():
        r = acc_ref[...] + b_ref[0]
        if relu:
            r = jnp.maximum(r, 0.0)
        o_ref[...] = r.reshape(o_ref.shape).astype(o_ref.dtype)


_gmm_cache = {}


def group_matmul(a, w, bias, *, relu, out_dtype=jnp.bfloat16, flat_out=None,
                 tk_cap=4096, tn_cap=512):
    """a: (G, M, K), w: (G, K, Nf), bias: (G, Nf).

    Returns a lane-dense (M, G*Nf) array (group g in columns [g*Nf, (g+1)*Nf)) when
    `flat_out` (requires G == 1 or Nf % 128 == 0); otherwise the grouped (G, M, Nf)."""
    G, M, K = a.shape
    Nf = w.shape[-1]
    if flat_out is None:
        flat_out = (G == 1) or (Nf % 128 == 0)
    assert (not flat_out) or G == 1 or Nf % 128 == 0
    out_bytes = 4 if out_dtype == jnp.float32 else 2
    tk, tn = _pick_gemm_tiles(M, K, Nf, tk_cap, tn_cap, out_bytes)
    ntn = Nf // tn
    key = (G, M, K, Nf, tk, tn, relu, flat_out, out_dtype)
    if key not in _gmm_cache:
        if flat_out:
            out_shape = jax.ShapeDtypeStruct((M, G * Nf), out_dtype)
            out_spec = pl.BlockSpec((M, tn), lambda g, n, k: (0, g * ntn + n))
        else:
            out_shape = jax.ShapeDtypeStruct((G, M, Nf), out_dtype)
            out_spec = pl.BlockSpec((1, M, tn), lambda g, n, k: (g, 0, n))
        _gmm_cache[key] = pl.pallas_call(
            functools.partial(_gmm_kernel, relu=relu),
            out_shape=out_shape,
            grid_spec=pltpu.PrefetchScalarGridSpec(
                num_scalar_prefetch=0,
                grid=(G, ntn, K // tk),
                in_specs=[
                    pl.BlockSpec((1, M, tk), lambda g, n, k: (g, 0, k)),
                    pl.BlockSpec((1, tk, tn), lambda g, n, k: (g, k, n)),
                    pl.BlockSpec((1, 1, tn), lambda g, n, k: (g, 0, n)),
                ],
                out_specs=out_spec,
                scratch_shapes=[pltpu.VMEM((M, tn), jnp.float32)],
            ),
            compiler_params=pltpu.CompilerParams(
                dimension_semantics=("parallel", "parallel", "arbitrary"),
                vmem_limit_bytes=VMEM_LIMIT),
        )
    return _gmm_cache[key](a.astype(jnp.bfloat16), w.astype(jnp.bfloat16),
                           bias.reshape(G, 1, Nf).astype(jnp.float32))


# --------------------------------------------------------------------------------------
# Pallas kernel 2: fused dilated conv.  grid = (branch, K-tiles):
#   branch ("parallel")  -> per-branch 9-tap weight block, (M, nf) accumulator scratch,
#                           and a lane-dense output column block;
#   K     ("arbitrary")  -> 128-wide channel tiles (operands padded to a 128 multiple),
#                           so weight/slab DMA double-buffers behind the MXU.
# Per grid step only the 9 taps of the current dilation run (static offsets, dispatched
# on the branch grid index with pl.when).
# --------------------------------------------------------------------------------------
def _dconv_taps_kernel(x_ref, w_ref, b_ref, o_ref, acc_ref, *, n_img, h_out, w_out):
    # x_ref: (N, Hp, Wp, TK) bf16   w_ref: (1, 9, TK, nf) bf16   b_ref: (1, 1, nf) f32
    # o_ref: (M, nf) or (1, M, nf) bf16                          acc_ref: (M, nf) f32
    br = pl.program_id(0)
    k = pl.program_id(1)
    tk = x_ref.shape[-1]
    m = n_img * h_out * w_out

    @pl.when(k == 0)
    def _():
        acc_ref[...] = jnp.zeros_like(acc_ref)

    for bi, d in enumerate(DILATIONS):
        @pl.when(br == bi)
        def _(d=d):
            for ki in range(3):
                ro = DMAX + (ki - 1) * d
                for kj in range(3):
                    co = DMAX + (kj - 1) * d
                    a = x_ref[:, ro:ro + h_out, co:co + w_out, :].reshape(m, tk)
                    acc_ref[...] += jnp.dot(a, w_ref[0, ki * 3 + kj],
                                            preferred_element_type=jnp.float32)

    @pl.when(k == pl.num_programs(1) - 1)
    def _():
        r = jnp.maximum(acc_ref[...] + b_ref[0], 0.0)
        o_ref[...] = r.reshape(o_ref.shape).astype(o_ref.dtype)


_fused_cache = {}


def _dconv_fused(x, w, b):
    N, H, W, C = x.shape
    nf = w.shape[-1]
    Cp = ((C + TK_FUSED - 1) // TK_FUSED) * TK_FUSED   # lane-align K (e.g. 320 -> 384)
    Hp, Wp = H + 2 * DMAX, W + 2 * DMAX
    M = N * H * W
    nk = Cp // TK_FUSED
    flat = (nf % 128 == 0)   # lane-dense (M, 5*nf) output needs 128-aligned columns

    xp = jnp.pad(x.astype(jnp.bfloat16),
                 ((0, 0), (DMAX, DMAX), (DMAX, DMAX), (0, Cp - C)))
    wp = w.astype(jnp.bfloat16)
    if Cp != C:
        wp = jnp.pad(wp, ((0, 0), (0, 0), (0, 0), (0, Cp - C), (0, 0)))
    wp = wp.reshape(5, 9, Cp, nf)
    bias = b.reshape(5, 1, nf).astype(jnp.float32)

    key = (N, H, W, C, nf, flat)
    if key not in _fused_cache:
        if flat:
            out_shape = jax.ShapeDtypeStruct((M, 5 * nf), jnp.bfloat16)
            out_spec = pl.BlockSpec((M, nf), lambda br, k: (0, br))
        else:
            out_shape = jax.ShapeDtypeStruct((5, M, nf), jnp.bfloat16)
            out_spec = pl.BlockSpec((1, M, nf), lambda br, k: (br, 0, 0))
        kern = functools.partial(_dconv_taps_kernel, n_img=N, h_out=H, w_out=W)
        _fused_cache[key] = pl.pallas_call(
            kern,
            out_shape=out_shape,
            grid_spec=pltpu.PrefetchScalarGridSpec(
                num_scalar_prefetch=0,
                grid=(5, nk),
                in_specs=[
                    pl.BlockSpec((N, Hp, Wp, TK_FUSED), lambda br, k: (0, 0, 0, k)),
                    pl.BlockSpec((1, 9, TK_FUSED, nf), lambda br, k: (br, 0, k, 0)),
                    pl.BlockSpec((1, 1, nf), lambda br, k: (br, 0, 0)),
                ],
                out_specs=out_spec,
                scratch_shapes=[pltpu.VMEM((M, nf), jnp.float32)],
            ),
            compiler_params=pltpu.CompilerParams(
                dimension_semantics=("parallel", "arbitrary"),
                vmem_limit_bytes=VMEM_LIMIT),
        )
    out = _fused_cache[key](xp, wp, bias)
    if not flat:   # nf = 64 (block 1 only): tiny (M, 320) relayout outside the kernel
        out = jnp.transpose(out, (1, 0, 2)).reshape(M, 5 * nf)
    return out.reshape(N, H, W, 5 * nf)


def _dconv_im2col(x, w, b):
    """Fallback path: per-branch im2col patches (glue) + ONE branch-grouped Pallas GEMM.
    Used only where the patch matrices are tiny (the C=3 first layer and the 4x4 / 2x2
    deep blocks), so the extra HBM traffic is negligible versus the weight stream."""
    N, H, W, C = x.shape
    nf = w.shape[-1]
    xp = jnp.pad(x.astype(jnp.bfloat16), ((0, 0), (DMAX, DMAX), (DMAX, DMAX), (0, 0)))
    taps = []
    for d in DILATIONS:
        cols = [xp[:, DMAX + (ki - 1) * d: DMAX + (ki - 1) * d + H,
                   DMAX + (kj - 1) * d: DMAX + (kj - 1) * d + W, :]
                for ki in range(3) for kj in range(3)]
        taps.append(jnp.concatenate(cols, axis=-1).reshape(N * H * W, 9 * C))
    patches = jnp.stack(taps)                                        # (5, M, 9*C)
    flat = (nf % 128 == 0)
    out = group_matmul(patches, w.reshape(5, 9 * C, nf), b, relu=True, flat_out=flat)
    if not flat:
        out = jnp.transpose(out, (1, 0, 2)).reshape(N * H * W, 5 * nf)
    return out.reshape(N, H, W, 5 * nf)


def _fused_vmem_ok(N, H, W, nf):
    Hp, Wp = H + 2 * DMAX, W + 2 * DMAX
    M = N * H * W
    est = (2 * N * Hp * Wp * TK_FUSED * 2     # double-buffered activation slab (bf16)
           + 2 * 9 * TK_FUSED * nf * 2        # double-buffered 9-tap weight block (bf16)
           + M * nf * 4                       # f32 accumulator scratch
           + 2 * M * nf * 2                   # double-buffered output block (bf16)
           + M * TK_FUSED * 2 + M * nf * 4)   # in-flight tap slice / dot result
    return est <= VMEM_LIMIT // 2


def dconv2d_relu(x, w, b):
    N, H, W, C = x.shape
    nf = w.shape[-1]
    if C >= 128 and min(H, W) >= 8 and _fused_vmem_ok(N, H, W, nf):
        return _dconv_fused(x, w, b)
    return _dconv_im2col(x, w, b)


# --------------------------------------------------------------------------------------
# Pallas kernel 3: 2x2 stride-2 max pool; as many output rows per grid step as fit ~6 MiB
# --------------------------------------------------------------------------------------
def _maxpool_kernel(x_ref, o_ref):
    v = x_ref[...]                                      # (R, 2, Wo, 2, C)
    o_ref[...] = jnp.max(jnp.max(v, axis=3), axis=1)    # -> (R, Wo, C)


_pool_cache = {}


def maxpool2x2(x):
    N, H, W, C = x.shape
    Ho, Wo = H // 2, W // 2
    x = x[:, :2 * Ho, :2 * Wo, :]                       # floor odd dims (torch semantics)
    rows = N * Ho
    x5 = x.reshape(rows, 2, Wo, 2, C)                   # free row-major regrouping
    row_bytes = 2 * Wo * 2 * C * x.dtype.itemsize
    r = rows
    while r > 1 and r * row_bytes > 6 * 1024 * 1024:    # largest divisor under ~6 MiB
        r -= 1
        while rows % r:
            r -= 1
    key = (N, Ho, Wo, C, r, x.dtype)
    if key not in _pool_cache:
        _pool_cache[key] = pl.pallas_call(
            _maxpool_kernel,
            out_shape=jax.ShapeDtypeStruct((rows, Wo, C), x.dtype),
            grid_spec=pltpu.PrefetchScalarGridSpec(
                num_scalar_prefetch=0,
                grid=(rows // r,),
                in_specs=[pl.BlockSpec((r, 2, Wo, 2, C), lambda i: (i, 0, 0, 0, 0))],
                out_specs=pl.BlockSpec((r, Wo, C), lambda i: (i, 0, 0)),
            ),
            compiler_params=pltpu.CompilerParams(
                dimension_semantics=("parallel",),
                vmem_limit_bytes=VMEM_LIMIT),
        )
    return _pool_cache[key](x5).reshape(N, Ho, Wo, C)


# --------------------------------------------------------------------------------------
# Thin wrappers around the grouped GEMM + plain-JAX glue
# --------------------------------------------------------------------------------------
def conv1x1(x, w, b, relu=False):
    N, H, W, C = x.shape
    out = group_matmul(x.reshape(1, N * H * W, C), w[None], b[None], relu=relu)
    return out.reshape(N, H, W, w.shape[-1])


def fully_connected(x, w, b, relu, out_dtype=jnp.bfloat16):
    return group_matmul(x[None], w[None], b[None], relu=relu, out_dtype=out_dtype)


def adaptive_avg_pool_7(x):
    # Tiny reduction (7x7xC output) -> plain-JAX glue; torch adaptive-pool windows:
    # start=floor(i*S/7), end=ceil((i+1)*S/7).
    N, H, W, C = x.shape

    def pool_matrix(size):
        rows = []
        for i in range(7):
            s = (i * size) // 7
            e = ((i + 1) * size + 6) // 7
            rows.append(jnp.zeros((size,), jnp.float32).at[s:e].set(1.0 / (e - s)))
        return jnp.stack(rows)  # (7, size)

    xf = x.astype(jnp.float32)
    xf = jnp.einsum('ph,nhwc->npwc', pool_matrix(H), xf)
    xf = jnp.einsum('qw,npwc->npqc', pool_matrix(W), xf)
    return xf  # (N, 7, 7, C) f32


# --------------------------------------------------------------------------------------
# Parameter init (deterministic, synthetic; bf16 weights / f32 biases) and forward pass
# --------------------------------------------------------------------------------------
BLOCK_DEFS = [  # (num DConv2d layers, in_channels of first layer (None = model input), n_filters)
    (2, None, 64),
    (2, 320, 128),
    (4, 640, 256),
    (4, 1280, 512),
    (4, 2560, 512),
]


def init_params(key, in_channels, n_class):
    keys = iter(jax.random.split(key, 64))
    params = {"blocks": []}
    for (n_layers, cin0, nf) in BLOCK_DEFS:
        cin = in_channels if cin0 is None else cin0
        layers = []
        for li in range(n_layers):
            c = cin if li == 0 else nf * 5
            std = (2.0 / (9 * c)) ** 0.5
            w = std * jax.random.normal(next(keys), (5, 3, 3, c, nf), jnp.bfloat16)
            b = jnp.zeros((5, nf), jnp.float32)
            layers.append((w, b))
        params["blocks"].append(layers)
    params["k1_w"] = ((2.0 / 2560) ** 0.5 *
                      jax.random.normal(next(keys), (2560, 512), jnp.bfloat16))
    params["k1_b"] = jnp.zeros((512,), jnp.float32)
    fcs = []
    for (fi, fo) in [(512 * 7 * 7, 2048), (2048, 2048), (2048, n_class)]:
        std = (2.0 / fi) ** 0.5
        fcs.append((std * jax.random.normal(next(keys), (fi, fo), jnp.bfloat16),
                    jnp.zeros((fo,), jnp.float32)))
    params["fc"] = fcs
    # FC1 folded over the 49 identical adaptive-pool positions: exact (and only used)
    # when the pre-avgpool feature map is 1x1.  Precomputed once here so the forward
    # never streams the full 25088x2048 FC1 weight in that regime.
    w1 = fcs[0][0]
    params["fc1_folded_w"] = (w1.astype(jnp.float32).reshape(512, 49, 2048)
                              .sum(axis=1).astype(jnp.bfloat16))
    return params


def dcnn_vgg19_forward(params, x_nchw):
    x = jnp.transpose(x_nchw, (0, 2, 3, 1)).astype(jnp.bfloat16)   # NCHW -> NHWC, bf16
    # dconv blocks: (DConv2d + ReLU) x {2 or 4}, then MaxPool(2,2)
    for layers in params["blocks"]:
        for (w, b) in layers:
            x = dconv2d_relu(x, w, b)
        x = maxpool2x2(x)
    # kernel_1_conv: 1x1 conv 2560 -> 512 (no activation)
    x = conv1x1(x, params["k1_w"], params["k1_b"], relu=False)
    N, H, W, C = x.shape
    (w1, b1), (w2, b2), (w3, b3) = params["fc"]
    if H == 1 and W == 1:
        # AdaptiveAvgPool2d((7,7)) of a 1x1 map broadcasts one value per channel to all
        # 49 positions; fold FC1's K over those positions (exact) -> 512-wide GEMM.
        x = fully_connected(x.reshape(N, C), params["fc1_folded_w"], b1, relu=True)
    else:
        x = adaptive_avg_pool_7(x)
        x = jnp.transpose(x, (0, 3, 1, 2)).reshape(N, -1)          # torch Flatten on NCHW
        x = fully_connected(x.astype(jnp.bfloat16), w1, b1, relu=True)
    # Dropout(p=0.5) -> eval-mode identity (see TODO at top of file)
    x = fully_connected(x, w2, b2, relu=True)
    x = fully_connected(x, w3, b3, relu=False, out_dtype=jnp.float32)
    return x


if __name__ == "__main__":
    key = jax.random.PRNGKey(0)
    pkey, xkey = jax.random.split(key)
    in_channels, n_class = 3, 10
    params = init_params(pkey, in_channels, n_class)
    # small input: batch=2, 3 channels, 32x32 spatial (32 -> 1 after five 2x2 pools)
    x = jax.random.normal(xkey, (2, in_channels, 32, 32), jnp.float32)
    y = dcnn_vgg19_forward(params, x)
    y = jax.block_until_ready(y)
    assert y.shape == (2, n_class)
    assert bool(jnp.all(jnp.isfinite(y)))
    print("KERNEL_OK")
</pallas_src>

<mosaic_0001>
module attributes {stable_mosaic.version = 11 : i64} {
  func.func @_gmm_kernel(%arg0: i32, %arg1: i32, %arg2: i32, %arg3: memref<1x2048x27xbf16, #tpu.memory_space<vmem>>, %arg4: memref<1x27x64xbf16, #tpu.memory_space<vmem>>, %arg5: memref<1x1x64xf32, #tpu.memory_space<vmem>>, %arg6: memref<1x2048x64xbf16, #tpu.memory_space<vmem>>, %arg7: memref<2048x64xf32, #tpu.memory_space<vmem>>) attributes {dimension_semantics = [#tpu.dimension_semantics<parallel>, #tpu.dimension_semantics<parallel>, #tpu.dimension_semantics<arbitrary>], iteration_bounds = array<i64: 5, 1, 1>, scalar_prefetch = 0 : i64, scratch_operands = 1 : i64, tpu.core_type = #tpu.core_type<tc>, window_params = [{transform_indices = @transform_0, window_bounds = array<i64: 1, 2048, 27>}, {transform_indices = @transform_1, window_bounds = array<i64: 1, 27, 64>}, {transform_indices = @transform_2, window_bounds = array<i64: 1, 1, 64>}, {transform_indices = @transform_3, window_bounds = array<i64: 1, 2048, 64>}]} {
    %c0_i32 = arith.constant 0 : i32
    %0 = arith.cmpi eq, %arg2, %c0_i32 : i32
    %1 = arith.extui %0 : i1 to i32
    %c0_i32_0 = arith.constant 0 : i32
    %2 = arith.cmpi ne, %1, %c0_i32_0 : i32
    scf.if %2 {
      %cst_12 = arith.constant 0.000000e+00 : f32
      %14 = vector.broadcast %cst_12 : f32 to vector<2048x64xf32>
      %c0_13 = arith.constant 0 : index
      %c0_14 = arith.constant 0 : index
      %15 = vector.load %arg7[%c0_13, %c0_14] : memref<2048x64xf32, #tpu.memory_space<vmem>>, vector<2048x64xf32>
      tpu.vector_store %arg7[%c0_13, %c0_14], %14 {strides = array<i32>} : memref<2048x64xf32, #tpu.memory_space<vmem>>, vector<2048x64xf32>,
    } else {
    }
    %c0 = arith.constant 0 : index
    %c0_1 = arith.constant 0 : index
    %3 = vector.load %arg7[%c0, %c0_1] : memref<2048x64xf32, #tpu.memory_space<vmem>>, vector<2048x64xf32>
    %c0_2 = arith.constant 0 : index
    %c0_3 = arith.constant 0 : index
    %c0_4 = arith.constant 0 : index
    %4 = vector.load %arg3[%c0_2, %c0_3, %c0_4] : memref<1x2048x27xbf16, #tpu.memory_space<vmem>>, vector<1x2048x27xbf16>
    %5 = vector.shape_cast %4 : vector<1x2048x27xbf16> to vector<2048x27xbf16>
    %c0_5 = arith.constant 0 : index
    %c0_6 = arith.constant 0 : index
    %c0_7 = arith.constant 0 : index
    %6 = vector.load %arg4[%c0_5, %c0_6, %c0_7] : memref<1x27x64xbf16, #tpu.memory_space<vmem>>, vector<1x27x64xbf16>
    %7 = vector.shape_cast %6 : vector<1x27x64xbf16> to vector<27x64xbf16>
    %cst = arith.constant dense<0.000000e+00> : vector<2048x64xf32>
    %8 = tpu.matmul %5, %7, %cst {dimension_numbers = #tpu.dot_dimension_numbers<[1], [0], [0], [1], [0, 0, 1, 1], [], []>} : vector<2048x27xbf16>, vector<27x64xbf16>, vector<2048x64xf32> -> vector<2048x64xf32>
    %9 = arith.addf %3, %8 : vector<2048x64xf32>
    %c0_8 = arith.constant 0 : index
    %c0_9 = arith.constant 0 : index
    %10 = vector.load %arg7[%c0_8, %c0_9] : memref<2048x64xf32, #tpu.memory_space<vmem>>, vector<2048x64xf32>
    tpu.vector_store %arg7[%c0_8, %c0_9], %9 {strides = array<i32>} : memref<2048x64xf32, #tpu.memory_space<vmem>>, vector<2048x64xf32>,
    %c0_i32_10 = arith.constant 0 : i32
    %11 = arith.cmpi eq, %arg2, %c0_i32_10 : i32
    %12 = arith.extui %11 : i1 to i32
    %c0_i32_11 = arith.constant 0 : i32
    %13 = arith.cmpi ne, %12, %c0_i32_11 : i32
    scf.if %13 {
      %c0_12 = arith.constant 0 : index
      %c0_13 = arith.constant 0 : index
      %14 = vector.load %arg7[%c0_12, %c0_13] : memref<2048x64xf32, #tpu.memory_space<vmem>>, vector<2048x64xf32>
      %c0_14 = arith.constant 0 : index
      %c0_15 = arith.constant 0 : index
      %c0_16 = arith.constant 0 : index
      %15 = vector.load %arg5[%c0_14, %c0_15, %c0_16] : memref<1x1x64xf32, #tpu.memory_space<vmem>>, vector<1x1x64xf32>
      %16 = vector.shape_cast %15 : vector<1x1x64xf32> to vector<1x64xf32>
      %17 = vector.broadcast %16 : vector<1x64xf32> to vector<2048x64xf32>
      %18 = arith.addf %14, %17 : vector<2048x64xf32>
      %cst_17 = arith.constant 0.000000e+00 : f32
      %19 = vector.broadcast %cst_17 : f32 to vector<2048x64xf32>
      %20 = arith.maximumf %18, %19 : vector<2048x64xf32>
      %21 = vector.shape_cast %20 : vector<2048x64xf32> to vector<1x2048x64xf32>
      %22 = arith.truncf %21 : vector<1x2048x64xf32> to vector<1x2048x64xbf16>
      %c0_18 = arith.constant 0 : index
      %c0_19 = arith.constant 0 : index
      %c0_20 = arith.constant 0 : index
      %23 = vector.load %arg6[%c0_18, %c0_19, %c0_20] : memref<1x2048x64xbf16, #tpu.memory_space<vmem>>, vector<1x2048x64xbf16>
      tpu.vector_store %arg6[%c0_18, %c0_19, %c0_20], %22 {strides = array<i32>} : memref<1x2048x64xbf16, #tpu.memory_space<vmem>>, vector<1x2048x64xbf16>,
    } else {
    }
    return
  }
  func.func @transform_0(%arg0: i32, %arg1: i32, %arg2: i32) -> (i32, i32, i32) {
    %c0_i32 = arith.constant 0 : i32
    %c0_i32_0 = arith.constant 0 : i32
    return %arg0, %c0_i32, %arg2 : i32, i32, i32
  }
  func.func @transform_1(%arg0: i32, %arg1: i32, %arg2: i32) -> (i32, i32, i32) {
    %c0_i32 = arith.constant 0 : i32
    return %arg0, %arg2, %arg1 : i32, i32, i32
  }
  func.func @transform_2(%arg0: i32, %arg1: i32, %arg2: i32) -> (i32, i32, i32) {
    %c0_i32 = arith.constant 0 : i32
    %c0_i32_0 = arith.constant 0 : i32
    return %arg0, %c0_i32, %arg1 : i32, i32, i32
  }
  func.func @transform_3(%arg0: i32, %arg1: i32, %arg2: i32) -> (i32, i32, i32) {
    %c0_i32 = arith.constant 0 : i32
    %c0_i32_0 = arith.constant 0 : i32
    return %arg0, %c0_i32, %arg1 : i32, i32, i32
  }
}

</mosaic_0001>

<llo_original>
// kernel: tpu_custom_call.1
$region0: #{tpu_custom_call.1}
  #allocation0 [shape = 'u32[]', space=smem, size = 0x4, offset = 0x4, fixed_abs, tag = 'smem constant byte address 0x4 - core index']
  #allocation1 [shape = 'u32[144,128]{1,0:T(1,128)}', space=vmem, size = 0x12000, scoped, tag = 'internal scratch']
  #allocation2 [shape = 'f32[2048,64]{1,0:T(8,128)}', space=vmem, size = 0x100000, scoped, tag = 'scratch operand']
  %s0 = inlined_call_operand.vmem [shape: bf16[5,2048,27], index: 0, kind: input, shape index: {}]
  %s1 = inlined_call_operand.vmem [shape: bf16[5,27,64], index: 1, kind: input, shape index: {}]
  %s2 = inlined_call_operand.vmem [shape: f32[5,1,64], index: 2, kind: input, shape index: {}]
  %s3 = inlined_call_operand.vmem [shape: bf16[5,2048,64], index: 3, kind: output, shape index: {}]
  %s4 = sld [smem:[#allocation0]]
  $region53: #{tpu_custom_call.1} parent=0
    _
  %s6 = ssub.s32 1, %s4
  %s7 = scalar_select 0, %s6, %s4
  loop: start=0, step=1, limit=7
  $region2: #{tpu_custom_call.1} parent=0 // loop_pre_header
    _
  $region3: #{tpu_custom_call.1} parent=0 // loop_header
    %s9 = sphi 0, %s13
    %p10 = scmp.ge.s32.totalorder %s9, 7
    %s16 = sphi 0, %s35
    %s17 = sphi 0, %s31
    %s18 = sphi 0, %s27
    %s19 = sphi 0, %s16
    %s20 = sphi 0, %s17
    %s21 = sphi 0, %s18
    %s22 = sphi 0, %s19
    %s23 = sphi 0, %s20
    %s24 = sphi 0, %s21
    %s40 = sphi 0, %s42
    %s43 = sphi 0, %s40
    %s44 = sphi 0, %s43
    %s60 = sphi 0, %s44
    %s70 = sphi 0, %s72
    %s73 = sphi 0, %s70
    %s74 = sphi 0, %s73
    %s90 = sphi 0, %s74
    %s98 = sphi 0, %s100
    %s101 = sphi 0, %s98
    %s102 = sphi 0, %s101
    %s118 = sphi 0, %s102
    %s126 = sphi 0, %s128
    %s129 = sphi 0, %s126
    %s130 = sphi 0, %s129
    %s146 = sphi 0, %s130
  $region4: #{tpu_custom_call.1} parent=0 // loop_header_branch
    %12 = sbr.rel (%p10) target = $region8
  $region5: #{tpu_custom_call.1} parent=0 // loop_body
    %s14 = ssub.s32 %s9, 1
    %s15 = ssub.s32 %s9, 2
    %s25 = sadd.s32 1, %s18
    %p26 = scmp.ge.s32.totalorder %s25, 1
    %s27 = scalar_select %p26, 0, %s25
    %s28 = sadd.s32 1, %s17
    %s29 = scalar_select %p26, %s28, %s17
    %p30 = scmp.ge.s32.totalorder %s29, 1
    %s31 = scalar_select %p30, 0, %s29
    %s32 = sadd.s32 1, %s16
    %s33 = scalar_select %p30, %s32, %s16
    %p34 = scmp.ge.s32.totalorder %s33, 5
    %s35 = scalar_select %p34, 0, %s33
    %s36 = ssub.s32 %s16, %s35
    %s37 = ssub.s32 %s18, %s27
    %s38 = sor.u32 %s36, %s37
    %p39 = scmp.eq.s32.totalorder %s38, 0
    %s41 = sadd.s32 %s40, 1
    %s42 = scalar_select %p39, %s40, %s41
    %p45 = pneg %p39
    %p46 = scmp.eq.s32.totalorder %s9, 4
    %p47 = por %p45, %p46
    %p48 = scmp.ne.s32.totalorder %s40, %s43
    %p49 = scmp.eq.s32.totalorder %s9, 0
    %p50 = por %p48, %p49
    %p51 = scmp.ne.s32.totalorder %s40, %s43
    %p52 = scmp.eq.s32.totalorder %s14, 4
    %p53 = por %p51, %p52
    %p54 = scmp.ne.s32.totalorder %s43, %s44
    %p55 = scmp.eq.s32.totalorder %s14, 0
    %p56 = por %p54, %p55
    %p57 = scmp.ne.s32.totalorder %s43, %s44
    %p58 = scmp.eq.s32.totalorder %s15, 4
    %p59 = por %p57, %p58
    %p61 = scmp.ne.s32.totalorder %s44, %s60
    %p62 = scmp.eq.s32.totalorder %s15, 0
    %p63 = por %p61, %p62
    %s64 = ssub.s32 %s16, %s35
    %s65 = ssub.s32 %s18, %s27
    %s66 = sor.u32 %s64, %s65
    %s67 = ssub.s32 %s17, %s31
    %s68 = sor.u32 %s66, %s67
    %p69 = scmp.eq.s32.totalorder %s68, 0
    %s71 = sadd.s32 %s70, 1
    %s72 = scalar_select %p69, %s70, %s71
    %p75 = pneg %p69
    %p76 = scmp.eq.s32.totalorder %s9, 4
    %p77 = por %p75, %p76
    %p78 = scmp.ne.s32.totalorder %s70, %s73
    %p79 = scmp.eq.s32.totalorder %s9, 0
    %p80 = por %p78, %p79
    %p81 = scmp.ne.s32.totalorder %s70, %s73
    %p82 = scmp.eq.s32.totalorder %s14, 4
    %p83 = por %p81, %p82
    %p84 = scmp.ne.s32.totalorder %s73, %s74
    %p85 = scmp.eq.s32.totalorder %s14, 0
    %p86 = por %p84, %p85
    %p87 = scmp.ne.s32.totalorder %s73, %s74
    %p88 = scmp.eq.s32.totalorder %s15, 4
    %p89 = por %p87, %p88
    %p91 = scmp.ne.s32.totalorder %s74, %s90
    %p92 = scmp.eq.s32.totalorder %s15, 0
    %p93 = por %p91, %p92
    %s94 = ssub.s32 %s16, %s35
    %s95 = ssub.s32 %s17, %s31
    %s96 = sor.u32 %s94, %s95
    %p97 = scmp.eq.s32.totalorder %s96, 0
    %s99 = sadd.s32 %s98, 1
    %s100 = scalar_select %p97, %s98, %s99
    %p103 = pneg %p97
    %p104 = scmp.eq.s32.totalorder %s9, 4
    %p105 = por %p103, %p104
    %p106 = scmp.ne.s32.totalorder %s98, %s101
    %p107 = scmp.eq.s32.totalorder %s9, 0
    %p108 = por %p106, %p107
    %p109 = scmp.ne.s32.totalorder %s98, %s101
    %p110 = scmp.eq.s32.totalorder %s14, 4
    %p111 = por %p109, %p110
    %p112 = scmp.ne.s32.totalorder %s101, %s102
    %p113 = scmp.eq.s32.totalorder %s14, 0
    %p114 = por %p112, %p113
    %p115 = scmp.ne.s32.totalorder %s101, %s102
    %p116 = scmp.eq.s32.totalorder %s15, 4
    %p117 = por %p115, %p116
    %p119 = scmp.ne.s32.totalorder %s102, %s118
    %p120 = scmp.eq.s32.totalorder %s15, 0
    %p121 = por %p119, %p120
    %s122 = ssub.s32 %s16, %s35
    %s123 = ssub.s32 %s17, %s31
    %s124 = sor.u32 %s122, %s123
    %p125 = scmp.eq.s32.totalorder %s124, 0
    %s127 = sadd.s32 %s126, 1
    %s128 = scalar_select %p125, %s126, %s127
    %p131 = pneg %p125
    %p132 = scmp.eq.s32.totalorder %s9, 4
    %p133 = por %p131, %p132
    %p134 = scmp.ne.s32.totalorder %s126, %s129
    %p135 = scmp.eq.s32.totalorder %s9, 0
    %p136 = por %p134, %p135
    %p137 = scmp.ne.s32.totalorder %s126, %s129
    %p138 = scmp.eq.s32.totalorder %s14, 4
    %p139 = por %p137, %p138
    %p140 = scmp.ne.s32.totalorder %s129, %s130
    %p141 = scmp.eq.s32.totalorder %s14, 0
    %p142 = por %p140, %p141
    %p143 = scmp.ne.s32.totalorder %s129, %s130
    %p144 = scmp.eq.s32.totalorder %s15, 4
    %p145 = por %p143, %p144
    %p147 = scmp.ne.s32.totalorder %s130, %s146
    %p148 = scmp.eq.s32.totalorder %s15, 0
    %p149 = por %p147, %p148
    %p150 = scmp.le.s32.totalorder 1, %s9
    %p151 = scmp.lt.s32.totalorder %s9, 6
    %p152 = pnand %p150, %p151
    %p153 = pneg %p152
    // Predicated region
    $region9: #{tpu_custom_call.1} parent=5 // pred_check
      _
    $region10: #{tpu_custom_call.1} parent=5 // pred_check_branch
      %155 = sbr.rel (%p152) target = $region12
    $region11: #{tpu_custom_call.1} parent=5 // pred_region
      %s156 = ssub.s32 %s9, 1
    $region12: #{tpu_custom_call.1} parent=5 // pred_fallthru
      _
    %p157 = scmp.lt.s32.totalorder %s9, 5
    // Predicated region
    $region13: #{tpu_custom_call.1} parent=5 // pred_check
      %p158 = pneg %p157
    $region14: #{tpu_custom_call.1} parent=5 // pred_check_branch
      %160 = sbr.rel (%p158) target = $region16
    $region15: #{tpu_custom_call.1} parent=5 // pred_region
      // Predicated region
      $region17: #{tpu_custom_call.1} parent=15 // pred_check
        %p161 = pneg %p50
      $region18: #{tpu_custom_call.1} parent=15 // pred_check_branch
        %163 = sbr.rel (%p161) target = $region20
      $region19: #{tpu_custom_call.1} parent=15 // pred_region
        %p164 = scmp.lt.s32.totalorder %s16, 4
        %s165 = scalar_select %p164, %s16, 4
        %p166 = scmp.lt.s32.totalorder %s18, 0
        %s167 = scalar_select %p166, %s18, 0
        %s168 = smul.addr %s165, 256
        %s169 = sadd.s32 %s167, %s168
        %s170 = smul.addr %s169, 4
        %s171 = scalar_lea.vmem %s0, %s170
      $region20: #{tpu_custom_call.1} parent=15 // pred_fallthru
        _
      // Predicated region
      $region21: #{tpu_custom_call.1} parent=15 // pred_check
        %p172 = pneg %p80
      $region22: #{tpu_custom_call.1} parent=15 // pred_check_branch
        %174 = sbr.rel (%p172) target = $region24
      $region23: #{tpu_custom_call.1} parent=15 // pred_region
        %s175 = smul.u32 4, %s18
        %p176 = scmp.lt.s32.totalorder %s16, 4
        %s177 = scalar_select %p176, %s16, 4
        %p178 = scmp.lt.s32.totalorder %s175, 3
        %s179 = scalar_select %p178, %s175, 3
        %p180 = scmp.lt.s32.totalorder %s17, 0
        %s181 = scalar_select %p180, %s17, 0
        %s182 = sadd.s32 %s181, %s179
        %s183 = smul.addr %s177, 4
        %s184 = sadd.s32 %s182, %s183
        %s185 = smul.addr %s184, 4
        %s186 = scalar_lea.vmem %s1, %s185
        %s187 = smul.u32 4, %s18
      $region24: #{tpu_custom_call.1} parent=15 // pred_fallthru
        _
      // Predicated region
      $region25: #{tpu_custom_call.1} parent=15 // pred_check
        %p188 = pneg %p108
      $region26: #{tpu_custom_call.1} parent=15 // pred_check_branch
        %190 = sbr.rel (%p188) target = $region28
      $region27: #{tpu_custom_call.1} parent=15 // pred_region
        %p191 = scmp.lt.s32.totalorder %s16, 4
        %s192 = scalar_select %p191, %s16, 4
        %p193 = scmp.lt.s32.totalorder %s17, 0
        %s194 = scalar_select %p193, %s17, 0
        %s195 = sadd.s32 %s194, %s192
        %s196 = scalar_lea.vmem %s2, %s195
      $region28: #{tpu_custom_call.1} parent=15 // pred_fallthru
        _
    $region16: #{tpu_custom_call.1} parent=5 // pred_fallthru
      _
    %p197 = scmp.le.s32.totalorder 1, %s9
    %p198 = scmp.lt.s32.totalorder %s9, 6
    %p199 = pnand %p197, %p198
    %p200 = pneg %p199
    // Predicated region
    $region29: #{tpu_custom_call.1} parent=5 // pred_check
      _
    $region30: #{tpu_custom_call.1} parent=5 // pred_check_branch
      %202 = sbr.rel (%p199) target = $region32
    $region31: #{tpu_custom_call.1} parent=5 // pred_region
      %s203 = ssub.s32 %s9, 1
      %p204 = scmp.lt.s32.totalorder %s19, 4
      %s205 = scalar_select %p204, %s19, 4
      %p206 = scmp.lt.s32.totalorder %s21, 0
      %s207 = scalar_select %p206, %s21, 0
      %s208 = smul.addr %s205, 256
      %s209 = sadd.s32 %s207, %s208
      %s210 = smul.addr %s209, 4
      %s211 = scalar_lea.vmem %s0, %s210
      %p212 = pneg %p56
      %p213 = pneg %p53
      %s214 = smul.u32 4, %s21
      %p215 = scmp.lt.s32.totalorder %s19, 4
      %s216 = scalar_select %p215, %s19, 4
      %p217 = scmp.lt.s32.totalorder %s214, 3
      %s218 = scalar_select %p217, %s214, 3
      %p219 = scmp.lt.s32.totalorder %s20, 0
      %s220 = scalar_select %p219, %s20, 0
      %s221 = sadd.s32 %s220, %s218
      %s222 = smul.addr %s216, 4
      %s223 = sadd.s32 %s221, %s222
      %s224 = smul.addr %s223, 4
      %s225 = scalar_lea.vmem %s1, %s224
      %p226 = pneg %p86
      %p227 = pneg %p83
      %p228 = scmp.lt.s32.totalorder %s19, 4
      %s229 = scalar_select %p228, %s19, 4
      %p230 = scmp.lt.s32.totalorder %s20, 0
      %s231 = scalar_select %p230, %s20, 0
      %s232 = sadd.s32 %s231, %s229
      %s233 = scalar_lea.vmem %s2, %s232
      %p234 = pneg %p114
      %p235 = pneg %p111
      %p236 = pneg %p142
      %p237 = pneg %p139
      %p238 = scmp.lt.s32.totalorder %s19, 4
      %s239 = scalar_select %p238, %s19, 4
      %p240 = scmp.lt.s32.totalorder %s20, 0
      %s241 = scalar_select %p240, %s20, 0
      %s242 = smul.addr %s239, 256
      %s243 = sadd.s32 %s241, %s242
      %s244 = smul.addr %s243, 4
      %s245 = scalar_lea.vmem %s3, %s244
      %p246 = scmp.lt.s32.totalorder %s19, 4
      %s247 = scalar_select %p246, %s19, 4
      %p248 = scmp.lt.s32.totalorder %s21, 0
      %s249 = scalar_select %p248, %s21, 0
      %s250 = smul.addr %s247, 256
      %s251 = sadd.s32 %s249, %s250
      %s252 = smul.addr %s251, 4
      %s253 = scalar_lea.vmem %s0, %s252
      %s254 = smul.u32 4, %s21
      %p255 = scmp.lt.s32.totalorder %s19, 4
      %s256 = scalar_select %p255, %s19, 4
      %p257 = scmp.lt.s32.totalorder %s254, 3
      %s258 = scalar_select %p257, %s254, 3
      %p259 = scmp.lt.s32.totalorder %s20, 0
      %s260 = scalar_select %p259, %s20, 0
      %s261 = sadd.s32 %s260, %s258
      %s262 = smul.addr %s256, 4
      %s263 = sadd.s32 %s261, %s262
      %s264 = smul.addr %s263, 4
      %s265 = scalar_lea.vmem %s1, %s264
      %s266 = smul.u32 4, %s21
      %p267 = scmp.lt.s32.totalorder %s19, 4
      %s268 = scalar_select %p267, %s19, 4
      %p269 = scmp.lt.s32.totalorder %s20, 0
      %s270 = scalar_select %p269, %s20, 0
      %s271 = sadd.s32 %s270, %s268
      %s272 = scalar_lea.vmem %s2, %s271
      %p273 = scmp.lt.s32.totalorder %s19, 4
      %s274 = scalar_select %p273, %s19, 4
      %p275 = scmp.lt.s32.totalorder %s20, 0
      %s276 = scalar_select %p275, %s20, 0
      %s277 = smul.addr %s274, 256
      %s278 = sadd.s32 %s276, %s277
      %s279 = smul.addr %s278, 4
      %s280 = scalar_lea.vmem %s3, %s279
      %p282 = scmp.eq.s32.totalorder %s21, 0
      // Predicated region
      $region33: #{tpu_custom_call.1} parent=31 // pred_check
        %p283 = pneg %p282
      $region34: #{tpu_custom_call.1} parent=31 // pred_check_branch
        %285 = sbr.rel (%p283) target = $region36
      $region35: #{tpu_custom_call.1} parent=31 // pred_region
        %vm286 = vcmask 523264
        %287 = vst.msk [vmem:[#allocation2] sm:$0xff] %vm286, 0.0
        %288 = vst.msk [vmem:[#allocation2 + $0x8] sm:$0xff] %vm286, 0.0
        %289 = vst.msk [vmem:[#allocation2 + $0x10] sm:$0xff] %vm286, 0.0
        %290 = vst.msk [vmem:[#allocation2 + $0x18] sm:$0xff] %vm286, 0.0
        %291 = vst.msk [vmem:[#allocation2 + $0x20] sm:$0xff] %vm286, 0.0
        %292 = vst.msk [vmem:[#allocation2 + $0x28] sm:$0xff] %vm286, 0.0
        %293 = vst.msk [vmem:[#allocation2 + $0x30] sm:$0xff] %vm286, 0.0
        %294 = vst.msk [vmem:[#allocation2 + $0x38] sm:$0xff] %vm286, 0.0
        %295 = vst.msk [vmem:[#allocation2 + $0x40] sm:$0xff] %vm286, 0.0
        %296 = vst.msk [vmem:[#allocation2 + $0x48] sm:$0xff] %vm286, 0.0
        %297 = vst.msk [vmem:[#allocation2 + $0x50] sm:$0xff] %vm286, 0.0
        %298 = vst.msk [vmem:[#allocation2 + $0x58] sm:$0xff] %vm286, 0.0
        %299 = vst.msk [vmem:[#allocation2 + $0x60] sm:$0xff] %vm286, 0.0
        %300 = vst.msk [vmem:[#allocation2 + $0x68] sm:$0xff] %vm286, 0.0
        %301 = vst.msk [vmem:[#allocation2 + $0x70] sm:$0xff] %vm286, 0.0
        %302 = vst.msk [vmem:[#allocation2 + $0x78] sm:$0xff] %vm286, 0.0
        %303 = vst.msk [vmem:[#allocation2 + $0x80] sm:$0xff] %vm286, 0.0
        %304 = vst.msk [vmem:[#allocation2 + $0x88] sm:$0xff] %vm286, 0.0
        %305 = vst.msk [vmem:[#allocation2 + $0x90] sm:$0xff] %vm286, 0.0
        %306 = vst.msk [vmem:[#allocation2 + $0x98] sm:$0xff] %vm286, 0.0
        %307 = vst.msk [vmem:[#allocation2 + $0xa0] sm:$0xff] %vm286, 0.0
        %308 = vst.msk [vmem:[#allocation2 + $0xa8] sm:$0xff] %vm286, 0.0
        %309 = vst.msk [vmem:[#allocation2 + $0xb0] sm:$0xff] %vm286, 0.0
        %310 = vst.msk [vmem:[#allocation2 + $0xb8] sm:$0xff] %vm286, 0.0
        %311 = vst.msk [vmem:[#allocation2 + $0xc0] sm:$0xff] %vm286, 0.0
        %312 = vst.msk [vmem:[#allocation2 + $0xc8] sm:$0xff] %vm286, 0.0
        %313 = vst.msk [vmem:[#allocation2 + $0xd0] sm:$0xff] %vm286, 0.0
        %314 = vst.msk [vmem:[#allocation2 + $0xd8] sm:$0xff] %vm286, 0.0
        %315 = vst.msk [vmem:[#allocation2 + $0xe0] sm:$0xff] %vm286, 0.0
        %316 = vst.msk [vmem:[#allocation2 + $0xe8] sm:$0xff] %vm286, 0.0
        %317 = vst.msk [vmem:[#allocation2 + $0xf0] sm:$0xff] %vm286, 0.0
        %318 = vst.msk [vmem:[#allocation2 + $0xf8] sm:$0xff] %vm286, 0.0
        %319 = vst.msk [vmem:[#allocation2 + $0x100] sm:$0xff] %vm286, 0.0
        %320 = vst.msk [vmem:[#allocation2 + $0x108] sm:$0xff] %vm286, 0.0
        %321 = vst.msk [vmem:[#allocation2 + $0x110] sm:$0xff] %vm286, 0.0
        %322 = vst.msk [vmem:[#allocation2 + $0x118] sm:$0xff] %vm286, 0.0
        %323 = vst.msk [vmem:[#allocation2 + $0x120] sm:$0xff] %vm286, 0.0
        %324 = vst.msk [vmem:[#allocation2 + $0x128] sm:$0xff] %vm286, 0.0
        %325 = vst.msk [vmem:[#allocation2 + $0x130] sm:$0xff] %vm286, 0.0
        %326 = vst.msk [vmem:[#allocation2 + $0x138] sm:$0xff] %vm286, 0.0
        %327 = vst.msk [vmem:[#allocation2 + $0x140] sm:$0xff] %vm286, 0.0
        %328 = vst.msk [vmem:[#allocation2 + $0x148] sm:$0xff] %vm286, 0.0
        %329 = vst.msk [vmem:[#allocation2 + $0x150] sm:$0xff] %vm286, 0.0
        %330 = vst.msk [vmem:[#allocation2 + $0x158] sm:$0xff] %vm286, 0.0
        %331 = vst.msk [vmem:[#allocation2 + $0x160] sm:$0xff] %vm286, 0.0
        %332 = vst.msk [vmem:[#allocation2 + $0x168] sm:$0xff] %vm286, 0.0
        %333 = vst.msk [vmem:[#allocation2 + $0x170] sm:$0xff] %vm286, 0.0
        %334 = vst.msk [vmem:[#allocation2 + $0x178] sm:$0xff] %vm286, 0.0
        %335 = vst.msk [vmem:[#allocation2 + $0x180] sm:$0xff] %vm286, 0.0
        %336 = vst.msk [vmem:[#allocation2 + $0x188] sm:$0xff] %vm286, 0.0
        %337 = vst.msk [vmem:[#allocation2 + $0x190] sm:$0xff] %vm286, 0.0
        %338 = vst.msk [vmem:[#allocation2 + $0x198] sm:$0xff] %vm286, 0.0
        %339 = vst.msk [vmem:[#allocation2 + $0x1a0] sm:$0xff] %vm286, 0.0
        %340 = vst.msk [vmem:[#allocation2 + $0x1a8] sm:$0xff] %vm286, 0.0
        %341 = vst.msk [vmem:[#allocation2 + $0x1b0] sm:$0xff] %vm286, 0.0
        %342 = vst.msk [vmem:[#allocation2 + $0x1b8] sm:$0xff] %vm286, 0.0
        %343 = vst.msk [vmem:[#allocation2 + $0x1c0] sm:$0xff] %vm286, 0.0
        %344 = vst.msk [vmem:[#allocation2 + $0x1c8] sm:$0xff] %vm286, 0.0
        %345 = vst.msk [vmem:[#allocation2 + $0x1d0] sm:$0xff] %vm286, 0.0
        %346 = vst.msk [vmem:[#allocation2 + $0x1d8] sm:$0xff] %vm286, 0.0
        %347 = vst.msk [vmem:[#allocation2 + $0x1e0] sm:$0xff] %vm286, 0.0
        %348 = vst.msk [vmem:[#allocation2 + $0x1e8] sm:$0xff] %vm286, 0.0
        %349 = vst.msk [vmem:[#allocation2 + $0x1f0] sm:$0xff] %vm286, 0.0
        %350 = vst.msk [vmem:[#allocation2 + $0x1f8] sm:$0xff] %vm286, 0.0
        %351 = vst.msk [vmem:[#allocation2 + $0x200] sm:$0xff] %vm286, 0.0
        %352 = vst.msk [vmem:[#allocation2 + $0x208] sm:$0xff] %vm286, 0.0
        %353 = vst.msk [vmem:[#allocation2 + $0x210] sm:$0xff] %vm286, 0.0
        %354 = vst.msk [vmem:[#allocation2 + $0x218] sm:$0xff] %vm286, 0.0
        %355 = vst.msk [vmem:[#allocation2 + $0x220] sm:$0xff] %vm286, 0.0
        %356 = vst.msk [vmem:[#allocation2 + $0x228] sm:$0xff] %vm286, 0.0
        %357 = vst.msk [vmem:[#allocation2 + $0x230] sm:$0xff] %vm286, 0.0
        %358 = vst.msk [vmem:[#allocation2 + $0x238] sm:$0xff] %vm286, 0.0
        %359 = vst.msk [vmem:[#allocation2 + $0x240] sm:$0xff] %vm286, 0.0
        %360 = vst.msk [vmem:[#allocation2 + $0x248] sm:$0xff] %vm286, 0.0
        %361 = vst.msk [vmem:[#allocation2 + $0x250] sm:$0xff] %vm286, 0.0
        %362 = vst.msk [vmem:[#allocation2 + $0x258] sm:$0xff] %vm286, 0.0
        %363 = vst.msk [vmem:[#allocation2 + $0x260] sm:$0xff] %vm286, 0.0
        %364 = vst.msk [vmem:[#allocation2 + $0x268] sm:$0xff] %vm286, 0.0
        %365 = vst.msk [vmem:[#allocation2 + $0x270] sm:$0xff] %vm286, 0.0
        %366 = vst.msk [vmem:[#allocation2 + $0x278] sm:$0xff] %vm286, 0.0
        %367 = vst.msk [vmem:[#allocation2 + $0x280] sm:$0xff] %vm286, 0.0
        %368 = vst.msk [vmem:[#allocation2 + $0x288] sm:$0xff] %vm286, 0.0
        %369 = vst.msk [vmem:[#allocation2 + $0x290] sm:$0xff] %vm286, 0.0
        %370 = vst.msk [vmem:[#allocation2 + $0x298] sm:$0xff] %vm286, 0.0
        %371 = vst.msk [vmem:[#allocation2 + $0x2a0] sm:$0xff] %vm286, 0.0
        %372 = vst.msk [vmem:[#allocation2 + $0x2a8] sm:$0xff] %vm286, 0.0
        %373 = vst.msk [vmem:[#allocation2 + $0x2b0] sm:$0xff] %vm286, 0.0
        %374 = vst.msk [vmem:[#allocation2 + $0x2b8] sm:$0xff] %vm286, 0.0
        %375 = vst.msk [vmem:[#allocation2 + $0x2c0] sm:$0xff] %vm286, 0.0
        %376 = vst.msk [vmem:[#allocation2 + $0x2c8] sm:$0xff] %vm286, 0.0
        %377 = vst.msk [vmem:[#allocation2 + $0x2d0] sm:$0xff] %vm286, 0.0
        %378 = vst.msk [vmem:[#allocation2 + $0x2d8] sm:$0xff] %vm286, 0.0
        %379 = vst.msk [vmem:[#allocation2 + $0x2e0] sm:$0xff] %vm286, 0.0
        %380 = vst.msk [vmem:[#allocation2 + $0x2e8] sm:$0xff] %vm286, 0.0
        %381 = vst.msk [vmem:[#allocation2 + $0x2f0] sm:$0xff] %vm286, 0.0
        %382 = vst.msk [vmem:[#allocation2 + $0x2f8] sm:$0xff] %vm286, 0.0
        %383 = vst.msk [vmem:[#allocation2 + $0x300] sm:$0xff] %vm286, 0.0
        %384 = vst.msk [vmem:[#allocation2 + $0x308] sm:$0xff] %vm286, 0.0
        %385 = vst.msk [vmem:[#allocation2 + $0x310] sm:$0xff] %vm286, 0.0
        %386 = vst.msk [vmem:[#allocation2 + $0x318] sm:$0xff] %vm286, 0.0
        %387 = vst.msk [vmem:[#allocation2 + $0x320] sm:$0xff] %vm286, 0.0
        %388 = vst.msk [vmem:[#allocation2 + $0x328] sm:$0xff] %vm286, 0.0
        %389 = vst.msk [vmem:[#allocation2 + $0x330] sm:$0xff] %vm286, 0.0
        %390 = vst.msk [vmem:[#allocation2 + $0x338] sm:$0xff] %vm286, 0.0
        %391 = vst.msk [vmem:[#allocation2 + $0x340] sm:$0xff] %vm286, 0.0
        %392 = vst.msk [vmem:[#allocation2 + $0x348] sm:$0xff] %vm286, 0.0
        %393 = vst.msk [vmem:[#allocation2 + $0x350] sm:$0xff] %vm286, 0.0
        %394 = vst.msk [vmem:[#allocation2 + $0x358] sm:$0xff] %vm286, 0.0
        %395 = vst.msk [vmem:[#allocation2 + $0x360] sm:$0xff] %vm286, 0.0
        %396 = vst.msk [vmem:[#allocation2 + $0x368] sm:$0xff] %vm286, 0.0
        %397 = vst.msk [vmem:[#allocation2 + $0x370] sm:$0xff] %vm286, 0.0
        %398 = vst.msk [vmem:[#allocation2 + $0x378] sm:$0xff] %vm286, 0.0
        %399 = vst.msk [vmem:[#allocation2 + $0x380] sm:$0xff] %vm286, 0.0
        %400 = vst.msk [vmem:[#allocation2 + $0x388] sm:$0xff] %vm286, 0.0
        %401 = vst.msk [vmem:[#allocation2 + $0x390] sm:$0xff] %vm286, 0.0
        %402 = vst.msk [vmem:[#allocation2 + $0x398] sm:$0xff] %vm286, 0.0
        %403 = vst.msk [vmem:[#allocation2 + $0x3a0] sm:$0xff] %vm286, 0.0
        %404 = vst.msk [vmem:[#allocation2 + $0x3a8] sm:$0xff] %vm286, 0.0
        %405 = vst.msk [vmem:[#allocation2 + $0x3b0] sm:$0xff] %vm286, 0.0
        %406 = vst.msk [vmem:[#allocation2 + $0x3b8] sm:$0xff] %vm286, 0.0
        %407 = vst.msk [vmem:[#allocation2 + $0x3c0] sm:$0xff] %vm286, 0.0
        %408 = vst.msk [vmem:[#allocation2 + $0x3c8] sm:$0xff] %vm286, 0.0
        %409 = vst.msk [vmem:[#allocation2 + $0x3d0] sm:$0xff] %vm286, 0.0
        %410 = vst.msk [vmem:[#allocation2 + $0x3d8] sm:$0xff] %vm286, 0.0
        %411 = vst.msk [vmem:[#allocation2 + $0x3e0] sm:$0xff] %vm286, 0.0
        %412 = vst.msk [vmem:[#allocation2 + $0x3e8] sm:$0xff] %vm286, 0.0
        %413 = vst.msk [vmem:[#allocation2 + $0x3f0] sm:$0xff] %vm286, 0.0
        %414 = vst.msk [vmem:[#allocation2 + $0x3f8] sm:$0xff] %vm286, 0.0
        %415 = vst.msk [vmem:[#allocation2 + $0x400] sm:$0xff] %vm286, 0.0
        %416 = vst.msk [vmem:[#allocation2 + $0x408] sm:$0xff] %vm286, 0.0
        %417 = vst.msk [vmem:[#allocation2 + $0x410] sm:$0xff] %vm286, 0.0
        %418 = vst.msk [vmem:[#allocation2 + $0x418] sm:$0xff] %vm286, 0.0
        %419 = vst.msk [vmem:[#allocation2 + $0x420] sm:$0xff] %vm286, 0.0
        %420 = vst.msk [vmem:[#allocation2 + $0x428] sm:$0xff] %vm286, 0.0
        %421 = vst.msk [vmem:[#allocation2 + $0x430] sm:$0xff] %vm286, 0.0
        %422 = vst.msk [vmem:[#allocation2 + $0x438] sm:$0xff] %vm286, 0.0
        %423 = vst.msk [vmem:[#allocation2 + $0x440] sm:$0xff] %vm286, 0.0
        %424 = vst.msk [vmem:[#allocation2 + $0x448] sm:$0xff] %vm286, 0.0
        %425 = vst.msk [vmem:[#allocation2 + $0x450] sm:$0xff] %vm286, 0.0
        %426 = vst.msk [vmem:[#allocation2 + $0x458] sm:$0xff] %vm286, 0.0
        %427 = vst.msk [vmem:[#allocation2 + $0x460] sm:$0xff] %vm286, 0.0
        %428 = vst.msk [vmem:[#allocation2 + $0x468] sm:$0xff] %vm286, 0.0
        %429 = vst.msk [vmem:[#allocation2 + $0x470] sm:$0xff] %vm286, 0.0
        %430 = vst.msk [vmem:[#allocation2 + $0x478] sm:$0xff] %vm286, 0.0
        %431 = vst.msk [vmem:[#allocation2 + $0x480] sm:$0xff] %vm286, 0.0
        %432 = vst.msk [vmem:[#allocation2 + $0x488] sm:$0xff] %vm286, 0.0
        %433 = vst.msk [vmem:[#allocation2 + $0x490] sm:$0xff] %vm286, 0.0
        %434 = vst.msk [vmem:[#allocation2 + $0x498] sm:$0xff] %vm286, 0.0
        %435 = vst.msk [vmem:[#allocation2 + $0x4a0] sm:$0xff] %vm286, 0.0
        %436 = vst.msk [vmem:[#allocation2 + $0x4a8] sm:$0xff] %vm286, 0.0
        %437 = vst.msk [vmem:[#allocation2 + $0x4b0] sm:$0xff] %vm286, 0.0
        %438 = vst.msk [vmem:[#allocation2 + $0x4b8] sm:$0xff] %vm286, 0.0
        %439 = vst.msk [vmem:[#allocation2 + $0x4c0] sm:$0xff] %vm286, 0.0
        %440 = vst.msk [vmem:[#allocation2 + $0x4c8] sm:$0xff] %vm286, 0.0
        %441 = vst.msk [vmem:[#allocation2 + $0x4d0] sm:$0xff] %vm286, 0.0
        %442 = vst.msk [vmem:[#allocation2 + $0x4d8] sm:$0xff] %vm286, 0.0
        %443 = vst.msk [vmem:[#allocation2 + $0x4e0] sm:$0xff] %vm286, 0.0
        %444 = vst.msk [vmem:[#allocation2 + $0x4e8] sm:$0xff] %vm286, 0.0
        %445 = vst.msk [vmem:[#allocation2 + $0x4f0] sm:$0xff] %vm286, 0.0
        %446 = vst.msk [vmem:[#allocation2 + $0x4f8] sm:$0xff] %vm286, 0.0
        %447 = vst.msk [vmem:[#allocation2 + $0x500] sm:$0xff] %vm286, 0.0
        %448 = vst.msk [vmem:[#allocation2 + $0x508] sm:$0xff] %vm286, 0.0
        %449 = vst.msk [vmem:[#allocation2 + $0x510] sm:$0xff] %vm286, 0.0
        %450 = vst.msk [vmem:[#allocation2 + $0x518] sm:$0xff] %vm286, 0.0
        %451 = vst.msk [vmem:[#allocation2 + $0x520] sm:$0xff] %vm286, 0.0
        %452 = vst.msk [vmem:[#allocation2 + $0x528] sm:$0xff] %vm286, 0.0
        %453 = vst.msk [vmem:[#allocation2 + $0x530] sm:$0xff] %vm286, 0.0
        %454 = vst.msk [vmem:[#allocation2 + $0x538] sm:$0xff] %vm286, 0.0
        %455 = vst.msk [vmem:[#allocation2 + $0x540] sm:$0xff] %vm286, 0.0
        %456 = vst.msk [vmem:[#allocation2 + $0x548] sm:$0xff] %vm286, 0.0
        %457 = vst.msk [vmem:[#allocation2 + $0x550] sm:$0xff] %vm286, 0.0
        %458 = vst.msk [vmem:[#allocation2 + $0x558] sm:$0xff] %vm286, 0.0
        %459 = vst.msk [vmem:[#allocation2 + $0x560] sm:$0xff] %vm286, 0.0
        %460 = vst.msk [vmem:[#allocation2 + $0x568] sm:$0xff] %vm286, 0.0
        %461 = vst.msk [vmem:[#allocation2 + $0x570] sm:$0xff] %vm286, 0.0
        %462 = vst.msk [vmem:[#allocation2 + $0x578] sm:$0xff] %vm286, 0.0
        %463 = vst.msk [vmem:[#allocation2 + $0x580] sm:$0xff] %vm286, 0.0
        %464 = vst.msk [vmem:[#allocation2 + $0x588] sm:$0xff] %vm286, 0.0
        %465 = vst.msk [vmem:[#allocation2 + $0x590] sm:$0xff] %vm286, 0.0
        %466 = vst.msk [vmem:[#allocation2 + $0x598] sm:$0xff] %vm286, 0.0
        %467 = vst.msk [vmem:[#allocation2 + $0x5a0] sm:$0xff] %vm286, 0.0
        %468 = vst.msk [vmem:[#allocation2 + $0x5a8] sm:$0xff] %vm286, 0.0
        %469 = vst.msk [vmem:[#allocation2 + $0x5b0] sm:$0xff] %vm286, 0.0
        %470 = vst.msk [vmem:[#allocation2 + $0x5b8] sm:$0xff] %vm286, 0.0
        %471 = vst.msk [vmem:[#allocation2 + $0x5c0] sm:$0xff] %vm286, 0.0
        %472 = vst.msk [vmem:[#allocation2 + $0x5c8] sm:$0xff] %vm286, 0.0
        %473 = vst.msk [vmem:[#allocation2 + $0x5d0] sm:$0xff] %vm286, 0.0
        %474 = vst.msk [vmem:[#allocation2 + $0x5d8] sm:$0xff] %vm286, 0.0
        %475 = vst.msk [vmem:[#allocation2 + $0x5e0] sm:$0xff] %vm286, 0.0
        %476 = vst.msk [vmem:[#allocation2 + $0x5e8] sm:$0xff] %vm286, 0.0
        %477 = vst.msk [vmem:[#allocation2 + $0x5f0] sm:$0xff] %vm286, 0.0
        %478 = vst.msk [vmem:[#allocation2 + $0x5f8] sm:$0xff] %vm286, 0.0
        %479 = vst.msk [vmem:[#allocation2 + $0x600] sm:$0xff] %vm286, 0.0
        %480 = vst.msk [vmem:[#allocation2 + $0x608] sm:$0xff] %vm286, 0.0
        %481 = vst.msk [vmem:[#allocation2 + $0x610] sm:$0xff] %vm286, 0.0
        %482 = vst.msk [vmem:[#allocation2 + $0x618] sm:$0xff] %vm286, 0.0
        %483 = vst.msk [vmem:[#allocation2 + $0x620] sm:$0xff] %vm286, 0.0
        %484 = vst.msk [vmem:[#allocation2 + $0x628] sm:$0xff] %vm286, 0.0
        %485 = vst.msk [vmem:[#allocation2 + $0x630] sm:$0xff] %vm286, 0.0
        %486 = vst.msk [vmem:[#allocation2 + $0x638] sm:$0xff] %vm286, 0.0
        %487 = vst.msk [vmem:[#allocation2 + $0x640] sm:$0xff] %vm286, 0.0
        %488 = vst.msk [vmem:[#allocation2 + $0x648] sm:$0xff] %vm286, 0.0
        %489 = vst.msk [vmem:[#allocation2 + $0x650] sm:$0xff] %vm286, 0.0
        %490 = vst.msk [vmem:[#allocation2 + $0x658] sm:$0xff] %vm286, 0.0
        %491 = vst.msk [vmem:[#allocation2 + $0x660] sm:$0xff] %vm286, 0.0
        %492 = vst.msk [vmem:[#allocation2 + $0x668] sm:$0xff] %vm286, 0.0
        %493 = vst.msk [vmem:[#allocation2 + $0x670] sm:$0xff] %vm286, 0.0
        %494 = vst.msk [vmem:[#allocation2 + $0x678] sm:$0xff] %vm286, 0.0
        %495 = vst.msk [vmem:[#allocation2 + $0x680] sm:$0xff] %vm286, 0.0
        %496 = vst.msk [vmem:[#allocation2 + $0x688] sm:$0xff] %vm286, 0.0
        %497 = vst.msk [vmem:[#allocation2 + $0x690] sm:$0xff] %vm286, 0.0
        %498 = vst.msk [vmem:[#allocation2 + $0x698] sm:$0xff] %vm286, 0.0
        %499 = vst.msk [vmem:[#allocation2 + $0x6a0] sm:$0xff] %vm286, 0.0
        %500 = vst.msk [vmem:[#allocation2 + $0x6a8] sm:$0xff] %vm286, 0.0
        %501 = vst.msk [vmem:[#allocation2 + $0x6b0] sm:$0xff] %vm286, 0.0
        %502 = vst.msk [vmem:[#allocation2 + $0x6b8] sm:$0xff] %vm286, 0.0
        %503 = vst.msk [vmem:[#allocation2 + $0x6c0] sm:$0xff] %vm286, 0.0
        %504 = vst.msk [vmem:[#allocation2 + $0x6c8] sm:$0xff] %vm286, 0.0
        %505 = vst.msk [vmem:[#allocation2 + $0x6d0] sm:$0xff] %vm286, 0.0
        %506 = vst.msk [vmem:[#allocation2 + $0x6d8] sm:$0xff] %vm286, 0.0
        %507 = vst.msk [vmem:[#allocation2 + $0x6e0] sm:$0xff] %vm286, 0.0
        %508 = vst.msk [vmem:[#allocation2 + $0x6e8] sm:$0xff] %vm286, 0.0
        %509 = vst.msk [vmem:[#allocation2 + $0x6f0] sm:$0xff] %vm286, 0.0
        %510 = vst.msk [vmem:[#allocation2 + $0x6f8] sm:$0xff] %vm286, 0.0
        %511 = vst.msk [vmem:[#allocation2 + $0x700] sm:$0xff] %vm286, 0.0
        %512 = vst.msk [vmem:[#allocation2 + $0x708] sm:$0xff] %vm286, 0.0
        %513 = vst.msk [vmem:[#allocation2 + $0x710] sm:$0xff] %vm286, 0.0
        %514 = vst.msk [vmem:[#allocation2 + $0x718] sm:$0xff] %vm286, 0.0
        %515 = vst.msk [vmem:[#allocation2 + $0x720] sm:$0xff] %vm286, 0.0
        %516 = vst.msk [vmem:[#allocation2 + $0x728] sm:$0xff] %vm286, 0.0
        %517 = vst.msk [vmem:[#allocation2 + $0x730] sm:$0xff] %vm286, 0.0
        %518 = vst.msk [vmem:[#allocation2 + $0x738] sm:$0xff] %vm286, 0.0
        %519 = vst.msk [vmem:[#allocation2 + $0x740] sm:$0xff] %vm286, 0.0
        %520 = vst.msk [vmem:[#allocation2 + $0x748] sm:$0xff] %vm286, 0.0
        %521 = vst.msk [vmem:[#allocation2 + $0x750] sm:$0xff] %vm286, 0.0
        %522 = vst.msk [vmem:[#allocation2 + $0x758] sm:$0xff] %vm286, 0.0
        %523 = vst.msk [vmem:[#allocation2 + $0x760] sm:$0xff] %vm286, 0.0
        %524 = vst.msk [vmem:[#allocation2 + $0x768] sm:$0xff] %vm286, 0.0
        %525 = vst.msk [vmem:[#allocation2 + $0x770] sm:$0xff] %vm286, 0.0
        %526 = vst.msk [vmem:[#allocation2 + $0x778] sm:$0xff] %vm286, 0.0
        %527 = vst.msk [vmem:[#allocation2 + $0x780] sm:$0xff] %vm286, 0.0
        %528 = vst.msk [vmem:[#allocation2 + $0x788] sm:$0xff] %vm286, 0.0
        %529 = vst.msk [vmem:[#allocation2 + $0x790] sm:$0xff] %vm286, 0.0
        %530 = vst.msk [vmem:[#allocation2 + $0x798] sm:$0xff] %vm286, 0.0
        %531 = vst.msk [vmem:[#allocation2 + $0x7a0] sm:$0xff] %vm286, 0.0
        %532 = vst.msk [vmem:[#allocation2 + $0x7a8] sm:$0xff] %vm286, 0.0
        %533 = vst.msk [vmem:[#allocation2 + $0x7b0] sm:$0xff] %vm286, 0.0
        %534 = vst.msk [vmem:[#allocation2 + $0x7b8] sm:$0xff] %vm286, 0.0
        %535 = vst.msk [vmem:[#allocation2 + $0x7c0] sm:$0xff] %vm286, 0.0
        %536 = vst.msk [vmem:[#allocation2 + $0x7c8] sm:$0xff] %vm286, 0.0
        %537 = vst.msk [vmem:[#allocation2 + $0x7d0] sm:$0xff] %vm286, 0.0
        %538 = vst.msk [vmem:[#allocation2 + $0x7d8] sm:$0xff] %vm286, 0.0
        %539 = vst.msk [vmem:[#allocation2 + $0x7e0] sm:$0xff] %vm286, 0.0
        %540 = vst.msk [vmem:[#allocation2 + $0x7e8] sm:$0xff] %vm286, 0.0
        %541 = vst.msk [vmem:[#allocation2 + $0x7f0] sm:$0xff] %vm286, 0.0
        %542 = vst.msk [vmem:[#allocation2 + $0x7f8] sm:$0xff] %vm286, 0.0
      $region36: #{tpu_custom_call.1} parent=31 // pred_fallthru
        _
      %v543 = vld [vmem:[#allocation2] sm:$0xff]
      %v544 = vld [vmem:[#allocation2 + $0x8] sm:$0xff]
      %v545 = vld [vmem:[#allocation2 + $0x10] sm:$0xff]
      %v546 = vld [vmem:[#allocation2 + $0x18] sm:$0xff]
      %v547 = vld [vmem:[#allocation2 + $0x20] sm:$0xff]
      %v548 = vld [vmem:[#allocation2 + $0x28] sm:$0xff]
      %v549 = vld [vmem:[#allocation2 + $0x30] sm:$0xff]
      %v550 = vld [vmem:[#allocation2 + $0x38] sm:$0xff]
      %v551 = vld [vmem:[#allocation2 + $0x40] sm:$0xff]
      %v552 = vld [vmem:[#allocation2 + $0x48] sm:$0xff]
      %v553 = vld [vmem:[#allocation2 + $0x50] sm:$0xff]
      %v554 = vld [vmem:[#allocation2 + $0x58] sm:$0xff]
      %v555 = vld [vmem:[#allocation2 + $0x60] sm:$0xff]
      %v556 = vld [vmem:[#allocation2 + $0x68] sm:$0xff]
      %v557 = vld [vmem:[#allocation2 + $0x70] sm:$0xff]
      %v558 = vld [vmem:[#allocation2 + $0x78] sm:$0xff]
      %v559 = vld [vmem:[#allocation2 + $0x80] sm:$0xff]
      %v560 = vld [vmem:[#allocation2 + $0x88] sm:$0xff]
      %v561 = vld [vmem:[#allocation2 + $0x90] sm:$0xff]
      %v562 = vld [vmem:[#allocation2 + $0x98] sm:$0xff]
      %v563 = vld [vmem:[#allocation2 + $0xa0] sm:$0xff]
      %v564 = vld [vmem:[#allocation2 + $0xa8] sm:$0xff]
      %v565 = vld [vmem:[#allocation2 + $0xb0] sm:$0xff]
      %v566 = vld [vmem:[#allocation2 + $0xb8] sm:$0xff]
      %v567 = vld [vmem:[#allocation2 + $0xc0] sm:$0xff]
      %v568 = vld [vmem:[#allocation2 + $0xc8] sm:$0xff]
      %v569 = vld [vmem:[#allocation2 + $0xd0] sm:$0xff]
      %v570 = vld [vmem:[#allocation2 + $0xd8] sm:$0xff]
      %v571 = vld [vmem:[#allocation2 + $0xe0] sm:$0xff]
      %v572 = vld [vmem:[#allocation2 + $0xe8] sm:$0xff]
      %v573 = vld [vmem:[#allocation2 + $0xf0] sm:$0xff]
      %v574 = vld [vmem:[#allocation2 + $0xf8] sm:$0xff]
      %v575 = vld [vmem:[#allocation2 + $0x100] sm:$0xff]
      %v576 = vld [vmem:[#allocation2 + $0x108] sm:$0xff]
      %v577 = vld [vmem:[#allocation2 + $0x110] sm:$0xff]
      %v578 = vld [vmem:[#allocation2 + $0x118] sm:$0xff]
      %v579 = vld [vmem:[#allocation2 + $0x120] sm:$0xff]
      %v580 = vld [vmem:[#allocation2 + $0x128] sm:$0xff]
      %v581 = vld [vmem:[#allocation2 + $0x130] sm:$0xff]
      %v582 = vld [vmem:[#allocation2 + $0x138] sm:$0xff]
      %v583 = vld [vmem:[#allocation2 + $0x140] sm:$0xff]
      %v584 = vld [vmem:[#allocation2 + $0x148] sm:$0xff]
      %v585 = vld [vmem:[#allocation2 + $0x150] sm:$0xff]
      %v586 = vld [vmem:[#allocation2 + $0x158] sm:$0xff]
      %v587 = vld [vmem:[#allocation2 + $0x160] sm:$0xff]
      %v588 = vld [vmem:[#allocation2 + $0x168] sm:$0xff]
      %v589 = vld [vmem:[#allocation2 + $0x170] sm:$0xff]
      %v590 = vld [vmem:[#allocation2 + $0x178] sm:$0xff]
      %v591 = vld [vmem:[#allocation2 + $0x180] sm:$0xff]
      %v592 = vld [vmem:[#allocation2 + $0x188] sm:$0xff]
      %v593 = vld [vmem:[#allocation2 + $0x190] sm:$0xff]
      %v594 = vld [vmem:[#allocation2 + $0x198] sm:$0xff]
      %v595 = vld [vmem:[#allocation2 + $0x1a0] sm:$0xff]
      %v596 = vld [vmem:[#allocation2 + $0x1a8] sm:$0xff]
      %v597 = vld [vmem:[#allocation2 + $0x1b0] sm:$0xff]
      %v598 = vld [vmem:[#allocation2 + $0x1b8] sm:$0xff]
      %v599 = vld [vmem:[#allocation2 + $0x1c0] sm:$0xff]
      %v600 = vld [vmem:[#allocation2 + $0x1c8] sm:$0xff]
      %v601 = vld [vmem:[#allocation2 + $0x1d0] sm:$0xff]
      %v602 = vld [vmem:[#allocation2 + $0x1d8] sm:$0xff]
      %v603 = vld [vmem:[#allocation2 + $0x1e0] sm:$0xff]
      %v604 = vld [vmem:[#allocation2 + $0x1e8] sm:$0xff]
      %v605 = vld [vmem:[#allocation2 + $0x1f0] sm:$0xff]
      %v606 = vld [vmem:[#allocation2 + $0x1f8] sm:$0xff]
      %v607 = vld [vmem:[#allocation2 + $0x200] sm:$0xff]
      %v608 = vld [vmem:[#allocation2 + $0x208] sm:$0xff]
      %v609 = vld [vmem:[#allocation2 + $0x210] sm:$0xff]
      %v610 = vld [vmem:[#allocation2 + $0x218] sm:$0xff]
      %v611 = vld [vmem:[#allocation2 + $0x220] sm:$0xff]
      %v612 = vld [vmem:[#allocation2 + $0x228] sm:$0xff]
      %v613 = vld [vmem:[#allocation2 + $0x230] sm:$0xff]
      %v614 = vld [vmem:[#allocation2 + $0x238] sm:$0xff]
      %v615 = vld [vmem:[#allocation2 + $0x240] sm:$0xff]
      %v616 = vld [vmem:[#allocation2 + $0x248] sm:$0xff]
      %v617 = vld [vmem:[#allocation2 + $0x250] sm:$0xff]
      %v618 = vld [vmem:[#allocation2 + $0x258] sm:$0xff]
      %v619 = vld [vmem:[#allocation2 + $0x260] sm:$0xff]
      %v620 = vld [vmem:[#allocation2 + $0x268] sm:$0xff]
      %v621 = vld [vmem:[#allocation2 + $0x270] sm:$0xff]
      %v622 = vld [vmem:[#allocation2 + $0x278] sm:$0xff]
      %v623 = vld [vmem:[#allocation2 + $0x280] sm:$0xff]
      %v624 = vld [vmem:[#allocation2 + $0x288] sm:$0xff]
      %v625 = vld [vmem:[#allocation2 + $0x290] sm:$0xff]
      %v626 = vld [vmem:[#allocation2 + $0x298] sm:$0xff]
      %v627 = vld [vmem:[#allocation2 + $0x2a0] sm:$0xff]
      %v628 = vld [vmem:[#allocation2 + $0x2a8] sm:$0xff]
      %v629 = vld [vmem:[#allocation2 + $0x2b0] sm:$0xff]
      %v630 = vld [vmem:[#allocation2 + $0x2b8] sm:$0xff]
      %v631 = vld [vmem:[#allocation2 + $0x2c0] sm:$0xff]
      %v632 = vld [vmem:[#allocation2 + $0x2c8] sm:$0xff]
      %v633 = vld [vmem:[#allocation2 + $0x2d0] sm:$0xff]
      %v634 = vld [vmem:[#allocation2 + $0x2d8] sm:$0xff]
      %v635 = vld [vmem:[#allocation2 + $0x2e0] sm:$0xff]
      %v636 = vld [vmem:[#allocation2 + $0x2e8] sm:$0xff]
      %v637 = vld [vmem:[#allocation2 + $0x2f0] sm:$0xff]
      %v638 = vld [vmem:[#allocation2 + $0x2f8] sm:$0xff]
      %v639 = vld [vmem:[#allocation2 + $0x300] sm:$0xff]
      %v640 = vld [vmem:[#allocation2 + $0x308] sm:$0xff]
      %v641 = vld [vmem:[#allocation2 + $0x310] sm:$0xff]
      %v642 = vld [vmem:[#allocation2 + $0x318] sm:$0xff]
      %v643 = vld [vmem:[#allocation2 + $0x320] sm:$0xff]
      %v644 = vld [vmem:[#allocation2 + $0x328] sm:$0xff]
      %v645 = vld [vmem:[#allocation2 + $0x330] sm:$0xff]
      %v646 = vld [vmem:[#allocation2 + $0x338] sm:$0xff]
      %v647 = vld [vmem:[#allocation2 + $0x340] sm:$0xff]
      %v648 = vld [vmem:[#allocation2 + $0x348] sm:$0xff]
      %v649 = vld [vmem:[#allocation2 + $0x350] sm:$0xff]
      %v650 = vld [vmem:[#allocation2 + $0x358] sm:$0xff]
      %v651 = vld [vmem:[#allocation2 + $0x360] sm:$0xff]
      %v652 = vld [vmem:[#allocation2 + $0x368] sm:$0xff]
      %v653 = vld [vmem:[#allocation2 + $0x370] sm:$0xff]
      %v654 = vld [vmem:[#allocation2 + $0x378] sm:$0xff]
      %v655 = vld [vmem:[#allocation2 + $0x380] sm:$0xff]
      %v656 = vld [vmem:[#allocation2 + $0x388] sm:$0xff]
      %v657 = vld [vmem:[#allocation2 + $0x390] sm:$0xff]
      %v658 = vld [vmem:[#allocation2 + $0x398] sm:$0xff]
      %v659 = vld [vmem:[#allocation2 + $0x3a0] sm:$0xff]
      %v660 = vld [vmem:[#allocation2 + $0x3a8] sm:$0xff]
      %v661 = vld [vmem:[#allocation2 + $0x3b0] sm:$0xff]
      %v662 = vld [vmem:[#allocation2 + $0x3b8] sm:$0xff]
      %v663 = vld [vmem:[#allocation2 + $0x3c0] sm:$0xff]
      %v664 = vld [vmem:[#allocation2 + $0x3c8] sm:$0xff]
      %v665 = vld [vmem:[#allocation2 + $0x3d0] sm:$0xff]
      %v666 = vld [vmem:[#allocation2 + $0x3d8] sm:$0xff]
      %v667 = vld [vmem:[#allocation2 + $0x3e0] sm:$0xff]
      %v668 = vld [vmem:[#allocation2 + $0x3e8] sm:$0xff]
      %v669 = vld [vmem:[#allocation2 + $0x3f0] sm:$0xff]
      %v670 = vld [vmem:[#allocation2 + $0x3f8] sm:$0xff]
      %v671 = vld [vmem:[#allocation2 + $0x400] sm:$0xff]
      %v672 = vld [vmem:[#allocation2 + $0x408] sm:$0xff]
      %v673 = vld [vmem:[#allocation2 + $0x410] sm:$0xff]
      %v674 = vld [vmem:[#allocation2 + $0x418] sm:$0xff]
      %v675 = vld [vmem:[#allocation2 + $0x420] sm:$0xff]
      %v676 = vld [vmem:[#allocation2 + $0x428] sm:$0xff]
      %v677 = vld [vmem:[#allocation2 + $0x430] sm:$0xff]
      %v678 = vld [vmem:[#allocation2 + $0x438] sm:$0xff]
      %v679 = vld [vmem:[#allocation2 + $0x440] sm:$0xff]
      %v680 = vld [vmem:[#allocation2 + $0x448] sm:$0xff]
      %v681 = vld [vmem:[#allocation2 + $0x450] sm:$0xff]
      %v682 = vld [vmem:[#allocation2 + $0x458] sm:$0xff]
      %v683 = vld [vmem:[#allocation2 + $0x460] sm:$0xff]
      %v684 = vld [vmem:[#allocation2 + $0x468] sm:$0xff]
      %v685 = vld [vmem:[#allocation2 + $0x470] sm:$0xff]
      %v686 = vld [vmem:[#allocation2 + $0x478] sm:$0xff]
      %v687 = vld [vmem:[#allocation2 + $0x480] sm:$0xff]
      %v688 = vld [vmem:[#allocation2 + $0x488] sm:$0xff]
      %v689 = vld [vmem:[#allocation2 + $0x490] sm:$0xff]
      %v690 = vld [vmem:[#allocation2 + $0x498] sm:$0xff]
      %v691 = vld [vmem:[#allocation2 + $0x4a0] sm:$0xff]
      %v692 = vld [vmem:[#allocation2 + $0x4a8] sm:$0xff]
      %v693 = vld [vmem:[#allocation2 + $0x4b0] sm:$0xff]
      %v694 = vld [vmem:[#allocation2 + $0x4b8] sm:$0xff]
      %v695 = vld [vmem:[#allocation2 + $0x4c0] sm:$0xff]
      %v696 = vld [vmem:[#allocation2 + $0x4c8] sm:$0xff]
      %v697 = vld [vmem:[#allocation2 + $0x4d0] sm:$0xff]
      %v698 = vld [vmem:[#allocation2 + $0x4d8] sm:$0xff]
      %v699 = vld [vmem:[#allocation2 + $0x4e0] sm:$0xff]
      %v700 = vld [vmem:[#allocation2 + $0x4e8] sm:$0xff]
      %v701 = vld [vmem:[#allocation2 + $0x4f0] sm:$0xff]
      %v702 = vld [vmem:[#allocation2 + $0x4f8] sm:$0xff]
      %v703 = vld [vmem:[#allocation2 + $0x500] sm:$0xff]
      %v704 = vld [vmem:[#allocation2 + $0x508] sm:$0xff]
      %v705 = vld [vmem:[#allocation2 + $0x510] sm:$0xff]
      %v706 = vld [vmem:[#allocation2 + $0x518] sm:$0xff]
      %v707 = vld [vmem:[#allocation2 + $0x520] sm:$0xff]
      %v708 = vld [vmem:[#allocation2 + $0x528] sm:$0xff]
      %v709 = vld [vmem:[#allocation2 + $0x530] sm:$0xff]
      %v710 = vld [vmem:[#allocation2 + $0x538] sm:$0xff]
      %v711 = vld [vmem:[#allocation2 + $0x540] sm:$0xff]
      %v712 = vld [vmem:[#allocation2 + $0x548] sm:$0xff]
      %v713 = vld [vmem:[#allocation2 + $0x550] sm:$0xff]
      %v714 = vld [vmem:[#allocation2 + $0x558] sm:$0xff]
      %v715 = vld [vmem:[#allocation2 + $0x560] sm:$0xff]
      %v716 = vld [vmem:[#allocation2 + $0x568] sm:$0xff]
      %v717 = vld [vmem:[#allocation2 + $0x570] sm:$0xff]
      %v718 = vld [vmem:[#allocation2 + $0x578] sm:$0xff]
      %v719 = vld [vmem:[#allocation2 + $0x580] sm:$0xff]
      %v720 = vld [vmem:[#allocation2 + $0x588] sm:$0xff]
      %v721 = vld [vmem:[#allocation2 + $0x590] sm:$0xff]
      %v722 = vld [vmem:[#allocation2 + $0x598] sm:$0xff]
      %v723 = vld [vmem:[#allocation2 + $0x5a0] sm:$0xff]
      %v724 = vld [vmem:[#allocation2 + $0x5a8] sm:$0xff]
      %v725 = vld [vmem:[#allocation2 + $0x5b0] sm:$0xff]
      %v726 = vld [vmem:[#allocation2 + $0x5b8] sm:$0xff]
      %v727 = vld [vmem:[#allocation2 + $0x5c0] sm:$0xff]
      %v728 = vld [vmem:[#allocation2 + $0x5c8] sm:$0xff]
      %v729 = vld [vmem:[#allocation2 + $0x5d0] sm:$0xff]
      %v730 = vld [vmem:[#allocation2 + $0x5d8] sm:$0xff]
      %v731 = vld [vmem:[#allocation2 + $0x5e0] sm:$0xff]
      %v732 = vld [vmem:[#allocation2 + $0x5e8] sm:$0xff]
      %v733 = vld [vmem:[#allocation2 + $0x5f0] sm:$0xff]
      %v734 = vld [vmem:[#allocation2 + $0x5f8] sm:$0xff]
      %v735 = vld [vmem:[#allocation2 + $0x600] sm:$0xff]
      %v736 = vld [vmem:[#allocation2 + $0x608] sm:$0xff]
      %v737 = vld [vmem:[#allocation2 + $0x610] sm:$0xff]
      %v738 = vld [vmem:[#allocation2 + $0x618] sm:$0xff]
      %v739 = vld [vmem:[#allocation2 + $0x620] sm:$0xff]
      %v740 = vld [vmem:[#allocation2 + $0x628] sm:$0xff]
      %v741 = vld [vmem:[#allocation2 + $0x630] sm:$0xff]
      %v742 = vld [vmem:[#allocation2 + $0x638] sm:$0xff]
      %v743 = vld [vmem:[#allocation2 + $0x640] sm:$0xff]
      %v744 = vld [vmem:[#allocation2 + $0x648] sm:$0xff]
      %v745 = vld [vmem:[#allocation2 + $0x650] sm:$0xff]
      %v746 = vld [vmem:[#allocation2 + $0x658] sm:$0xff]
      %v747 = vld [vmem:[#allocation2 + $0x660] sm:$0xff]
      %v748 = vld [vmem:[#allocation2 + $0x668] sm:$0xff]
      %v749 = vld [vmem:[#allocation2 + $0x670] sm:$0xff]
      %v750 = vld [vmem:[#allocation2 + $0x678] sm:$0xff]
      %v751 = vld [vmem:[#allocation2 + $0x680] sm:$0xff]
      %v752 = vld [vmem:[#allocation2 + $0x688] sm:$0xff]
      %v753 = vld [vmem:[#allocation2 + $0x690] sm:$0xff]
      %v754 = vld [vmem:[#allocation2 + $0x698] sm:$0xff]
      %v755 = vld [vmem:[#allocation2 + $0x6a0] sm:$0xff]
      %v756 = vld [vmem:[#allocation2 + $0x6a8] sm:$0xff]
      %v757 = vld [vmem:[#allocation2 + $0x6b0] sm:$0xff]
      %v758 = vld [vmem:[#allocation2 + $0x6b8] sm:$0xff]
      %v759 = vld [vmem:[#allocation2 + $0x6c0] sm:$0xff]
      %v760 = vld [vmem:[#allocation2 + $0x6c8] sm:$0xff]
      %v761 = vld [vmem:[#allocation2 + $0x6d0] sm:$0xff]
      %v762 = vld [vmem:[#allocation2 + $0x6d8] sm:$0xff]
      %v763 = vld [vmem:[#allocation2 + $0x6e0] sm:$0xff]
      %v764 = vld [vmem:[#allocation2 + $0x6e8] sm:$0xff]
      %v765 = vld [vmem:[#allocation2 + $0x6f0] sm:$0xff]
      %v766 = vld [vmem:[#allocation2 + $0x6f8] sm:$0xff]
      %v767 = vld [vmem:[#allocation2 + $0x700] sm:$0xff]
      %v768 = vld [vmem:[#allocation2 + $0x708] sm:$0xff]
      %v769 = vld [vmem:[#allocation2 + $0x710] sm:$0xff]
      %v770 = vld [vmem:[#allocation2 + $0x718] sm:$0xff]
      %v771 = vld [vmem:[#allocation2 + $0x720] sm:$0xff]
      %v772 = vld [vmem:[#allocation2 + $0x728] sm:$0xff]
      %v773 = vld [vmem:[#allocation2 + $0x730] sm:$0xff]
      %v774 = vld [vmem:[#allocation2 + $0x738] sm:$0xff]
      %v775 = vld [vmem:[#allocation2 + $0x740] sm:$0xff]
      %v776 = vld [vmem:[#allocation2 + $0x748] sm:$0xff]
      %v777 = vld [vmem:[#allocation2 + $0x750] sm:$0xff]
      %v778 = vld [vmem:[#allocation2 + $0x758] sm:$0xff]
      %v779 = vld [vmem:[#allocation2 + $0x760] sm:$0xff]
      %v780 = vld [vmem:[#allocation2 + $0x768] sm:$0xff]
      %v781 = vld [vmem:[#allocation2 + $0x770] sm:$0xff]
      %v782 = vld [vmem:[#allocation2 + $0x778] sm:$0xff]
      %v783 = vld [vmem:[#allocation2 + $0x780] sm:$0xff]
      %v784 = vld [vmem:[#allocation2 + $0x788] sm:$0xff]
      %v785 = vld [vmem:[#allocation2 + $0x790] sm:$0xff]
      %v786 = vld [vmem:[#allocation2 + $0x798] sm:$0xff]
      %v787 = vld [vmem:[#allocation2 + $0x7a0] sm:$0xff]
      %v788 = vld [vmem:[#allocation2 + $0x7a8] sm:$0xff]
      %v789 = vld [vmem:[#allocation2 + $0x7b0] sm:$0xff]
      %v790 = vld [vmem:[#allocation2 + $0x7b8] sm:$0xff]
      %v791 = vld [vmem:[#allocation2 + $0x7c0] sm:$0xff]
      %v792 = vld [vmem:[#allocation2 + $0x7c8] sm:$0xff]
      %v793 = vld [vmem:[#allocation2 + $0x7d0] sm:$0xff]
      %v794 = vld [vmem:[#allocation2 + $0x7d8] sm:$0xff]
      %v795 = vld [vmem:[#allocation2 + $0x7e0] sm:$0xff]
      %v796 = vld [vmem:[#allocation2 + $0x7e8] sm:$0xff]
      %v797 = vld [vmem:[#allocation2 + $0x7f0] sm:$0xff]
      %v798 = vld [vmem:[#allocation2 + $0x7f8] sm:$0xff]
      %v799 = vld [vmem:[%s253] sm:$0xf]
      %v800 = vld [vmem:[%s253 + $0x4] sm:$0xf]
      %v801 = vld [vmem:[%s253 + $0x8] sm:$0xf]
      %v802 = vld [vmem:[%s253 + $0xc] sm:$0xf]
      %v803 = vld [vmem:[%s253 + $0x10] sm:$0xf]
      %v804 = vld [vmem:[%s253 + $0x14] sm:$0xf]
      %v805 = vld [vmem:[%s253 + $0x18] sm:$0xf]
      %v806 = vld [vmem:[%s253 + $0x1c] sm:$0xf]
      %v807 = vld [vmem:[%s253 + $0x20] sm:$0xf]
      %v808 = vld [vmem:[%s253 + $0x24] sm:$0xf]
      %v809 = vld [vmem:[%s253 + $0x28] sm:$0xf]
      %v810 = vld [vmem:[%s253 + $0x2c] sm:$0xf]
      %v811 = vld [vmem:[%s253 + $0x30] sm:$0xf]
      %v812 = vld [vmem:[%s253 + $0x34] sm:$0xf]
      %v813 = vld [vmem:[%s253 + $0x38] sm:$0xf]
      %v814 = vld [vmem:[%s253 + $0x3c] sm:$0xf]
      %v815 = vld [vmem:[%s253 + $0x40] sm:$0xf]
      %v816 = vld [vmem:[%s253 + $0x44] sm:$0xf]
      %v817 = vld [vmem:[%s253 + $0x48] sm:$0xf]
      %v818 = vld [vmem:[%s253 + $0x4c] sm:$0xf]
      %v819 = vld [vmem:[%s253 + $0x50] sm:$0xf]
      %v820 = vld [vmem:[%s253 + $0x54] sm:$0xf]
      %v821 = vld [vmem:[%s253 + $0x58] sm:$0xf]
      %v822 = vld [vmem:[%s253 + $0x5c] sm:$0xf]
      %v823 = vld [vmem:[%s253 + $0x60] sm:$0xf]
      %v824 = vld [vmem:[%s253 + $0x64] sm:$0xf]
      %v825 = vld [vmem:[%s253 + $0x68] sm:$0xf]
      %v826 = vld [vmem:[%s253 + $0x6c] sm:$0xf]
      %v827 = vld [vmem:[%s253 + $0x70] sm:$0xf]
      %v828 = vld [vmem:[%s253 + $0x74] sm:$0xf]
      %v829 = vld [vmem:[%s253 + $0x78] sm:$0xf]
      %v830 = vld [vmem:[%s253 + $0x7c] sm:$0xf]
      %v831 = vld [vmem:[%s253 + $0x80] sm:$0xf]
      %v832 = vld [vmem:[%s253 + $0x84] sm:$0xf]
      %v833 = vld [vmem:[%s253 + $0x88] sm:$0xf]
      %v834 = vld [vmem:[%s253 + $0x8c] sm:$0xf]
      %v835 = vld [vmem:[%s253 + $0x90] sm:$0xf]
      %v836 = vld [vmem:[%s253 + $0x94] sm:$0xf]
      %v837 = vld [vmem:[%s253 + $0x98] sm:$0xf]
      %v838 = vld [vmem:[%s253 + $0x9c] sm:$0xf]
      %v839 = vld [vmem:[%s253 + $0xa0] sm:$0xf]
      %v840 = vld [vmem:[%s253 + $0xa4] sm:$0xf]
      %v841 = vld [vmem:[%s253 + $0xa8] sm:$0xf]
      %v842 = vld [vmem:[%s253 + $0xac] sm:$0xf]
      %v843 = vld [vmem:[%s253 + $0xb0] sm:$0xf]
      %v844 = vld [vmem:[%s253 + $0xb4] sm:$0xf]
      %v845 = vld [vmem:[%s253 + $0xb8] sm:$0xf]
      %v846 = vld [vmem:[%s253 + $0xbc] sm:$0xf]
      %v847 = vld [vmem:[%s253 + $0xc0] sm:$0xf]
      %v848 = vld [vmem:[%s253 + $0xc4] sm:$0xf]
      %v849 = vld [vmem:[%s253 + $0xc8] sm:$0xf]
      %v850 = vld [vmem:[%s253 + $0xcc] sm:$0xf]
      %v851 = vld [vmem:[%s253 + $0xd0] sm:$0xf]
      %v852 = vld [vmem:[%s253 + $0xd4] sm:$0xf]
      %v853 = vld [vmem:[%s253 + $0xd8] sm:$0xf]
      %v854 = vld [vmem:[%s253 + $0xdc] sm:$0xf]
      %v855 = vld [vmem:[%s253 + $0xe0] sm:$0xf]
      %v856 = vld [vmem:[%s253 + $0xe4] sm:$0xf]
      %v857 = vld [vmem:[%s253 + $0xe8] sm:$0xf]
      %v858 = vld [vmem:[%s253 + $0xec] sm:$0xf]
      %v859 = vld [vmem:[%s253 + $0xf0] sm:$0xf]
      %v860 = vld [vmem:[%s253 + $0xf4] sm:$0xf]
      %v861 = vld [vmem:[%s253 + $0xf8] sm:$0xf]
      %v862 = vld [vmem:[%s253 + $0xfc] sm:$0xf]
      %v863 = vld [vmem:[%s253 + $0x100] sm:$0xf]
      %v864 = vld [vmem:[%s253 + $0x104] sm:$0xf]
      %v865 = vld [vmem:[%s253 + $0x108] sm:$0xf]
      %v866 = vld [vmem:[%s253 + $0x10c] sm:$0xf]
      %v867 = vld [vmem:[%s253 + $0x110] sm:$0xf]
      %v868 = vld [vmem:[%s253 + $0x114] sm:$0xf]
      %v869 = vld [vmem:[%s253 + $0x118] sm:$0xf]
      %v870 = vld [vmem:[%s253 + $0x11c] sm:$0xf]
      %v871 = vld [vmem:[%s253 + $0x120] sm:$0xf]
      %v872 = vld [vmem:[%s253 + $0x124] sm:$0xf]
      %v873 = vld [vmem:[%s253 + $0x128] sm:$0xf]
      %v874 = vld [vmem:[%s253 + $0x12c] sm:$0xf]
      %v875 = vld [vmem:[%s253 + $0x130] sm:$0xf]
      %v876 = vld [vmem:[%s253 + $0x134] sm:$0xf]
      %v877 = vld [vmem:[%s253 + $0x138] sm:$0xf]
      %v878 = vld [vmem:[%s253 + $0x13c] sm:$0xf]
      %v879 = vld [vmem:[%s253 + $0x140] sm:$0xf]
      %v880 = vld [vmem:[%s253 + $0x144] sm:$0xf]
      %v881 = vld [vmem:[%s253 + $0x148] sm:$0xf]
      %v882 = vld [vmem:[%s253 + $0x14c] sm:$0xf]
      %v883 = vld [vmem:[%s253 + $0x150] sm:$0xf]
      %v884 = vld [vmem:[%s253 + $0x154] sm:$0xf]
      %v885 = vld [vmem:[%s253 + $0x158] sm:$0xf]
      %v886 = vld [vmem:[%s253 + $0x15c] sm:$0xf]
      %v887 = vld [vmem:[%s253 + $0x160] sm:$0xf]
      %v888 = vld [vmem:[%s253 + $0x164] sm:$0xf]
      %v889 = vld [vmem:[%s253 + $0x168] sm:$0xf]
      %v890 = vld [vmem:[%s253 + $0x16c] sm:$0xf]
      %v891 = vld [vmem:[%s253 + $0x170] sm:$0xf]
      %v892 = vld [vmem:[%s253 + $0x174] sm:$0xf]
      %v893 = vld [vmem:[%s253 + $0x178] sm:$0xf]
      %v894 = vld [vmem:[%s253 + $0x17c] sm:$0xf]
      %v895 = vld [vmem:[%s253 + $0x180] sm:$0xf]
      %v896 = vld [vmem:[%s253 + $0x184] sm:$0xf]
      %v897 = vld [vmem:[%s253 + $0x188] sm:$0xf]
      %v898 = vld [vmem:[%s253 + $0x18c] sm:$0xf]
      %v899 = vld [vmem:[%s253 + $0x190] sm:$0xf]
      %v900 = vld [vmem:[%s253 + $0x194] sm:$0xf]
      %v901 = vld [vmem:[%s253 + $0x198] sm:$0xf]
      %v902 = vld [vmem:[%s253 + $0x19c] sm:$0xf]
      %v903 = vld [vmem:[%s253 + $0x1a0] sm:$0xf]
      %v904 = vld [vmem:[%s253 + $0x1a4] sm:$0xf]
      %v905 = vld [vmem:[%s253 + $0x1a8] sm:$0xf]
      %v906 = vld [vmem:[%s253 + $0x1ac] sm:$0xf]
      %v907 = vld [vmem:[%s253 + $0x1b0] sm:$0xf]
      %v908 = vld [vmem:[%s253 + $0x1b4] sm:$0xf]
      %v909 = vld [vmem:[%s253 + $0x1b8] sm:$0xf]
      %v910 = vld [vmem:[%s253 + $0x1bc] sm:$0xf]
      %v911 = vld [vmem:[%s253 + $0x1c0] sm:$0xf]
      %v912 = vld [vmem:[%s253 + $0x1c4] sm:$0xf]
      %v913 = vld [vmem:[%s253 + $0x1c8] sm:$0xf]
      %v914 = vld [vmem:[%s253 + $0x1cc] sm:$0xf]
      %v915 = vld [vmem:[%s253 + $0x1d0] sm:$0xf]
      %v916 = vld [vmem:[%s253 + $0x1d4] sm:$0xf]
      %v917 = vld [vmem:[%s253 + $0x1d8] sm:$0xf]
      %v918 = vld [vmem:[%s253 + $0x1dc] sm:$0xf]
      %v919 = vld [vmem:[%s253 + $0x1e0] sm:$0xf]
      %v920 = vld [vmem:[%s253 + $0x1e4] sm:$0xf]
      %v921 = vld [vmem:[%s253 + $0x1e8] sm:$0xf]
      %v922 = vld [vmem:[%s253 + $0x1ec] sm:$0xf]
      %v923 = vld [vmem:[%s253 + $0x1f0] sm:$0xf]
      %v924 = vld [vmem:[%s253 + $0x1f4] sm:$0xf]
      %v925 = vld [vmem:[%s253 + $0x1f8] sm:$0xf]
      %v926 = vld [vmem:[%s253 + $0x1fc] sm:$0xf]
      %v927 = vld [vmem:[%s253 + $0x200] sm:$0xf]
      %v928 = vld [vmem:[%s253 + $0x204] sm:$0xf]
      %v929 = vld [vmem:[%s253 + $0x208] sm:$0xf]
      %v930 = vld [vmem:[%s253 + $0x20c] sm:$0xf]
      %v931 = vld [vmem:[%s253 + $0x210] sm:$0xf]
      %v932 = vld [vmem:[%s253 + $0x214] sm:$0xf]
      %v933 = vld [vmem:[%s253 + $0x218] sm:$0xf]
      %v934 = vld [vmem:[%s253 + $0x21c] sm:$0xf]
      %v935 = vld [vmem:[%s253 + $0x220] sm:$0xf]
      %v936 = vld [vmem:[%s253 + $0x224] sm:$0xf]
      %v937 = vld [vmem:[%s253 + $0x228] sm:$0xf]
      %v938 = vld [vmem:[%s253 + $0x22c] sm:$0xf]
      %v939 = vld [vmem:[%s253 + $0x230] sm:$0xf]
      %v940 = vld [vmem:[%s253 + $0x234] sm:$0xf]
      %v941 = vld [vmem:[%s253 + $0x238] sm:$0xf]
      %v942 = vld [vmem:[%s253 + $0x23c] sm:$0xf]
      %v943 = vld [vmem:[%s253 + $0x240] sm:$0xf]
      %v944 = vld [vmem:[%s253 + $0x244] sm:$0xf]
      %v945 = vld [vmem:[%s253 + $0x248] sm:$0xf]
      %v946 = vld [vmem:[%s253 + $0x24c] sm:$0xf]
      %v947 = vld [vmem:[%s253 + $0x250] sm:$0xf]
      %v948 = vld [vmem:[%s253 + $0x254] sm:$0xf]
      %v949 = vld [vmem:[%s253 + $0x258] sm:$0xf]
      %v950 = vld [vmem:[%s253 + $0x25c] sm:$0xf]
      %v951 = vld [vmem:[%s253 + $0x260] sm:$0xf]
      %v952 = vld [vmem:[%s253 + $0x264] sm:$0xf]
      %v953 = vld [vmem:[%s253 + $0x268] sm:$0xf]
      %v954 = vld [vmem:[%s253 + $0x26c] sm:$0xf]
      %v955 = vld [vmem:[%s253 + $0x270] sm:$0xf]
      %v956 = vld [vmem:[%s253 + $0x274] sm:$0xf]
      %v957 = vld [vmem:[%s253 + $0x278] sm:$0xf]
      %v958 = vld [vmem:[%s253 + $0x27c] sm:$0xf]
      %v959 = vld [vmem:[%s253 + $0x280] sm:$0xf]
      %v960 = vld [vmem:[%s253 + $0x284] sm:$0xf]
      %v961 = vld [vmem:[%s253 + $0x288] sm:$0xf]
      %v962 = vld [vmem:[%s253 + $0x28c] sm:$0xf]
      %v963 = vld [vmem:[%s253 + $0x290] sm:$0xf]
      %v964 = vld [vmem:[%s253 + $0x294] sm:$0xf]
      %v965 = vld [vmem:[%s253 + $0x298] sm:$0xf]
      %v966 = vld [vmem:[%s253 + $0x29c] sm:$0xf]
      %v967 = vld [vmem:[%s253 + $0x2a0] sm:$0xf]
      %v968 = vld [vmem:[%s253 + $0x2a4] sm:$0xf]
      %v969 = vld [vmem:[%s253 + $0x2a8] sm:$0xf]
      %v970 = vld [vmem:[%s253 + $0x2ac] sm:$0xf]
      %v971 = vld [vmem:[%s253 + $0x2b0] sm:$0xf]
      %v972 = vld [vmem:[%s253 + $0x2b4] sm:$0xf]
      %v973 = vld [vmem:[%s253 + $0x2b8] sm:$0xf]
      %v974 = vld [vmem:[%s253 + $0x2bc] sm:$0xf]
      %v975 = vld [vmem:[%s253 + $0x2c0] sm:$0xf]
      %v976 = vld [vmem:[%s253 + $0x2c4] sm:$0xf]
      %v977 = vld [vmem:[%s253 + $0x2c8] sm:$0xf]
      %v978 = vld [vmem:[%s253 + $0x2cc] sm:$0xf]
      %v979 = vld [vmem:[%s253 + $0x2d0] sm:$0xf]
      %v980 = vld [vmem:[%s253 + $0x2d4] sm:$0xf]
      %v981 = vld [vmem:[%s253 + $0x2d8] sm:$0xf]
      %v982 = vld [vmem:[%s253 + $0x2dc] sm:$0xf]
      %v983 = vld [vmem:[%s253 + $0x2e0] sm:$0xf]
      %v984 = vld [vmem:[%s253 + $0x2e4] sm:$0xf]
      %v985 = vld [vmem:[%s253 + $0x2e8] sm:$0xf]
      %v986 = vld [vmem:[%s253 + $0x2ec] sm:$0xf]
      %v987 = vld [vmem:[%s253 + $0x2f0] sm:$0xf]
      %v988 = vld [vmem:[%s253 + $0x2f4] sm:$0xf]
      %v989 = vld [vmem:[%s253 + $0x2f8] sm:$0xf]
      %v990 = vld [vmem:[%s253 + $0x2fc] sm:$0xf]
      %v991 = vld [vmem:[%s253 + $0x300] sm:$0xf]
      %v992 = vld [vmem:[%s253 + $0x304] sm:$0xf]
      %v993 = vld [vmem:[%s253 + $0x308] sm:$0xf]
      %v994 = vld [vmem:[%s253 + $0x30c] sm:$0xf]
      %v995 = vld [vmem:[%s253 + $0x310] sm:$0xf]
      %v996 = vld [vmem:[%s253 + $0x314] sm:$0xf]
      %v997 = vld [vmem:[%s253 + $0x318] sm:$0xf]
      %v998 = vld [vmem:[%s253 + $0x31c] sm:$0xf]
      %v999 = vld [vmem:[%s253 + $0x320] sm:$0xf]
      %v1000 = vld [vmem:[%s253 + $0x324] sm:$0xf]
      %v1001 = vld [vmem:[%s253 + $0x328] sm:$0xf]
      %v1002 = vld [vmem:[%s253 + $0x32c] sm:$0xf]
      %v1003 = vld [vmem:[%s253 + $0x330] sm:$0xf]
      %v1004 = vld [vmem:[%s253 + $0x334] sm:$0xf]
      %v1005 = vld [vmem:[%s253 + $0x338] sm:$0xf]
      %v1006 = vld [vmem:[%s253 + $0x33c] sm:$0xf]
      %v1007 = vld [vmem:[%s253 + $0x340] sm:$0xf]
      %v1008 = vld [vmem:[%s253 + $0x344] sm:$0xf]
      %v1009 = vld [vmem:[%s253 + $0x348] sm:$0xf]
      %v1010 = vld [vmem:[%s253 + $0x34c] sm:$0xf]
      %v1011 = vld [vmem:[%s253 + $0x350] sm:$0xf]
      %v1012 = vld [vmem:[%s253 + $0x354] sm:$0xf]
      %v1013 = vld [vmem:[%s253 + $0x358] sm:$0xf]
      %v1014 = vld [vmem:[%s253 + $0x35c] sm:$0xf]
      %v1015 = vld [vmem:[%s253 + $0x360] sm:$0xf]
      %v1016 = vld [vmem:[%s253 + $0x364] sm:$0xf]
      %v1017 = vld [vmem:[%s253 + $0x368] sm:$0xf]
      %v1018 = vld [vmem:[%s253 + $0x36c] sm:$0xf]
      %v1019 = vld [vmem:[%s253 + $0x370] sm:$0xf]
      %v1020 = vld [vmem:[%s253 + $0x374] sm:$0xf]
      %v1021 = vld [vmem:[%s253 + $0x378] sm:$0xf]
      %v1022 = vld [vmem:[%s253 + $0x37c] sm:$0xf]
      %v1023 = vld [vmem:[%s253 + $0x380] sm:$0xf]
      %v1024 = vld [vmem:[%s253 + $0x384] sm:$0xf]
      %v1025 = vld [vmem:[%s253 + $0x388] sm:$0xf]
      %v1026 = vld [vmem:[%s253 + $0x38c] sm:$0xf]
      %v1027 = vld [vmem:[%s253 + $0x390] sm:$0xf]
      %v1028 = vld [vmem:[%s253 + $0x394] sm:$0xf]
      %v1029 = vld [vmem:[%s253 + $0x398] sm:$0xf]
      %v1030 = vld [vmem:[%s253 + $0x39c] sm:$0xf]
      %v1031 = vld [vmem:[%s253 + $0x3a0] sm:$0xf]
      %v1032 = vld [vmem:[%s253 + $0x3a4] sm:$0xf]
      %v1033 = vld [vmem:[%s253 + $0x3a8] sm:$0xf]
      %v1034 = vld [vmem:[%s253 + $0x3ac] sm:$0xf]
      %v1035 = vld [vmem:[%s253 + $0x3b0] sm:$0xf]
      %v1036 = vld [vmem:[%s253 + $0x3b4] sm:$0xf]
      %v1037 = vld [vmem:[%s253 + $0x3b8] sm:$0xf]
      %v1038 = vld [vmem:[%s253 + $0x3bc] sm:$0xf]
      %v1039 = vld [vmem:[%s253 + $0x3c0] sm:$0xf]
      %v1040 = vld [vmem:[%s253 + $0x3c4] sm:$0xf]
      %v1041 = vld [vmem:[%s253 + $0x3c8] sm:$0xf]
      %v1042 = vld [vmem:[%s253 + $0x3cc] sm:$0xf]
      %v1043 = vld [vmem:[%s253 + $0x3d0] sm:$0xf]
      %v1044 = vld [vmem:[%s253 + $0x3d4] sm:$0xf]
      %v1045 = vld [vmem:[%s253 + $0x3d8] sm:$0xf]
      %v1046 = vld [vmem:[%s253 + $0x3dc] sm:$0xf]
      %v1047 = vld [vmem:[%s253 + $0x3e0] sm:$0xf]
      %v1048 = vld [vmem:[%s253 + $0x3e4] sm:$0xf]
      %v1049 = vld [vmem:[%s253 + $0x3e8] sm:$0xf]
      %v1050 = vld [vmem:[%s253 + $0x3ec] sm:$0xf]
      %v1051 = vld [vmem:[%s253 + $0x3f0] sm:$0xf]
      %v1052 = vld [vmem:[%s253 + $0x3f4] sm:$0xf]
      %v1053 = vld [vmem:[%s253 + $0x3f8] sm:$0xf]
      %v1054 = vld [vmem:[%s253 + $0x3fc] sm:$0xf]
      %v1055 = vld [vmem:[%s265] sm:$0xf]
      %v1056 = vld [vmem:[%s265 + $0x4] sm:$0xf]
      %v1057 = vld [vmem:[%s265 + $0x8] sm:$0xf]
      %v1058 = vld [vmem:[%s265 + $0xc] sm:$0x3]
      %v1315 = vunpack.c.l.b16 %v799
      %v1316 = vunpack.c.l.b16 %v800
      %v1317 = vunpack.c.l.b16 %v801
      %v1318 = vunpack.c.l.b16 %v802
      %v1319 = vunpack.c.l.b16 %v803
      %v1320 = vunpack.c.l.b16 %v804
      %v1321 = vunpack.c.l.b16 %v805
      %v1322 = vunpack.c.l.b16 %v806
      %v1323 = vunpack.c.l.b16 %v807
      %v1324 = vunpack.c.l.b16 %v808
      %v1325 = vunpack.c.l.b16 %v809
      %v1326 = vunpack.c.l.b16 %v810
      %v1327 = vunpack.c.l.b16 %v811
      %v1328 = vunpack.c.l.b16 %v812
      %v1329 = vunpack.c.l.b16 %v813
      %v1330 = vunpack.c.l.b16 %v814
      %v1331 = vunpack.c.l.b16 %v815
      %v1332 = vunpack.c.l.b16 %v816
      %v1333 = vunpack.c.l.b16 %v817
      %v1334 = vunpack.c.l.b16 %v818
      %v1335 = vunpack.c.l.b16 %v819
      %v1336 = vunpack.c.l.b16 %v820
      %v1337 = vunpack.c.l.b16 %v821
      %v1338 = vunpack.c.l.b16 %v822
      %v1339 = vunpack.c.l.b16 %v823
      %v1340 = vunpack.c.l.b16 %v824
      %v1341 = vunpack.c.l.b16 %v825
      %v1342 = vunpack.c.l.b16 %v826
      %v1343 = vunpack.c.l.b16 %v827
      %v1344 = vunpack.c.l.b16 %v828
      %v1345 = vunpack.c.l.b16 %v829
      %v1346 = vunpack.c.l.b16 %v830
      %v1347 = vunpack.c.l.b16 %v831
      %v1348 = vunpack.c.l.b16 %v832
      %v1349 = vunpack.c.l.b16 %v833
      %v1350 = vunpack.c.l.b16 %v834
      %v1351 = vunpack.c.l.b16 %v835
      %v1352 = vunpack.c.l.b16 %v836
      %v1353 = vunpack.c.l.b16 %v837
      %v1354 = vunpack.c.l.b16 %v838
      %v1355 = vunpack.c.l.b16 %v839
      %v1356 = vunpack.c.l.b16 %v840
      %v1357 = vunpack.c.l.b16 %v841
      %v1358 = vunpack.c.l.b16 %v842
      %v1359 = vunpack.c.l.b16 %v843
      %v1360 = vunpack.c.l.b16 %v844
      %v1361 = vunpack.c.l.b16 %v845
      %v1362 = vunpack.c.l.b16 %v846
      %v1363 = vunpack.c.l.b16 %v847
      %v1364 = vunpack.c.l.b16 %v848
      %v1365 = vunpack.c.l.b16 %v849
      %v1366 = vunpack.c.l.b16 %v850
      %v1367 = vunpack.c.l.b16 %v851
      %v1368 = vunpack.c.l.b16 %v852
      %v1369 = vunpack.c.l.b16 %v853
      %v1370 = vunpack.c.l.b16 %v854
      %v1371 = vunpack.c.l.b16 %v855
      %v1372 = vunpack.c.l.b16 %v856
      %v1373 = vunpack.c.l.b16 %v857
      %v1374 = vunpack.c.l.b16 %v858
      %v1375 = vunpack.c.l.b16 %v859
      %v1376 = vunpack.c.l.b16 %v860
      %v1377 = vunpack.c.l.b16 %v861
      %v1378 = vunpack.c.l.b16 %v862
      %v1379 = vunpack.c.l.b16 %v863
      %v1380 = vunpack.c.l.b16 %v864
      %v1381 = vunpack.c.l.b16 %v865
      %v1382 = vunpack.c.l.b16 %v866
      %v1383 = vunpack.c.l.b16 %v867
      %v1384 = vunpack.c.l.b16 %v868
      %v1385 = vunpack.c.l.b16 %v869
      %v1386 = vunpack.c.l.b16 %v870
      %v1387 = vunpack.c.l.b16 %v871
      %v1388 = vunpack.c.l.b16 %v872
      %v1389 = vunpack.c.l.b16 %v873
      %v1390 = vunpack.c.l.b16 %v874
      %v1391 = vunpack.c.l.b16 %v875
      %v1392 = vunpack.c.l.b16 %v876
      %v1393 = vunpack.c.l.b16 %v877
      %v1394 = vunpack.c.l.b16 %v878
      %v1395 = vunpack.c.l.b16 %v879
      %v1396 = vunpack.c.l.b16 %v880
      %v1397 = vunpack.c.l.b16 %v881
      %v1398 = vunpack.c.l.b16 %v882
      %v1399 = vunpack.c.l.b16 %v883
      %v1400 = vunpack.c.l.b16 %v884
      %v1401 = vunpack.c.l.b16 %v885
      %v1402 = vunpack.c.l.b16 %v886
      %v1403 = vunpack.c.l.b16 %v887
      %v1404 = vunpack.c.l.b16 %v888
      %v1405 = vunpack.c.l.b16 %v889
      %v1406 = vunpack.c.l.b16 %v890
      %v1407 = vunpack.c.l.b16 %v891
      %v1408 = vunpack.c.l.b16 %v892
      %v1409 = vunpack.c.l.b16 %v893
      %v1410 = vunpack.c.l.b16 %v894
      %v1411 = vunpack.c.l.b16 %v895
      %v1412 = vunpack.c.l.b16 %v896
      %v1413 = vunpack.c.l.b16 %v897
      %v1414 = vunpack.c.l.b16 %v898
      %v1415 = vunpack.c.l.b16 %v899
      %v1416 = vunpack.c.l.b16 %v900
      %v1417 = vunpack.c.l.b16 %v901
      %v1418 = vunpack.c.l.b16 %v902
      %v1419 = vunpack.c.l.b16 %v903
      %v1420 = vunpack.c.l.b16 %v904
      %v1421 = vunpack.c.l.b16 %v905
      %v1422 = vunpack.c.l.b16 %v906
      %v1423 = vunpack.c.l.b16 %v907
      %v1424 = vunpack.c.l.b16 %v908
      %v1425 = vunpack.c.l.b16 %v909
      %v1426 = vunpack.c.l.b16 %v910
      %v1427 = vunpack.c.l.b16 %v911
      %v1428 = vunpack.c.l.b16 %v912
      %v1429 = vunpack.c.l.b16 %v913
      %v1430 = vunpack.c.l.b16 %v914
      %v1431 = vunpack.c.l.b16 %v915
      %v1432 = vunpack.c.l.b16 %v916
      %v1433 = vunpack.c.l.b16 %v917
      %v1434 = vunpack.c.l.b16 %v918
      %v1435 = vunpack.c.l.b16 %v919
      %v1436 = vunpack.c.l.b16 %v920
      %v1437 = vunpack.c.l.b16 %v921
      %v1438 = vunpack.c.l.b16 %v922
      %v1439 = vunpack.c.l.b16 %v923
      %v1440 = vunpack.c.l.b16 %v924
      %v1441 = vunpack.c.l.b16 %v925
      %v1442 = vunpack.c.l.b16 %v926
      %v1443 = vunpack.c.l.b16 %v927
      %v1444 = vunpack.c.l.b16 %v928
      %v1445 = vunpack.c.l.b16 %v929
      %v1446 = vunpack.c.l.b16 %v930
      %v1447 = vunpack.c.l.b16 %v931
      %v1448 = vunpack.c.l.b16 %v932
      %v1449 = vunpack.c.l.b16 %v933
      %v1450 = vunpack.c.l.b16 %v934
      %v1451 = vunpack.c.l.b16 %v935
      %v1452 = vunpack.c.l.b16 %v936
      %v1453 = vunpack.c.l.b16 %v937
      %v1454 = vunpack.c.l.b16 %v938
      %v1455 = vunpack.c.l.b16 %v939
      %v1456 = vunpack.c.l.b16 %v940
      %v1457 = vunpack.c.l.b16 %v941
      %v1458 = vunpack.c.l.b16 %v942
      %v1459 = vunpack.c.l.b16 %v943
      %v1460 = vunpack.c.l.b16 %v944
      %v1461 = vunpack.c.l.b16 %v945
      %v1462 = vunpack.c.l.b16 %v946
      %v1463 = vunpack.c.l.b16 %v947
      %v1464 = vunpack.c.l.b16 %v948
      %v1465 = vunpack.c.l.b16 %v949
      %v1466 = vunpack.c.l.b16 %v950
      %v1467 = vunpack.c.l.b16 %v951
      %v1468 = vunpack.c.l.b16 %v952
      %v1469 = vunpack.c.l.b16 %v953
      %v1470 = vunpack.c.l.b16 %v954
      %v1471 = vunpack.c.l.b16 %v955
      %v1472 = vunpack.c.l.b16 %v956
      %v1473 = vunpack.c.l.b16 %v957
      %v1474 = vunpack.c.l.b16 %v958
      %v1475 = vunpack.c.l.b16 %v959
      %v1476 = vunpack.c.l.b16 %v960
      %v1477 = vunpack.c.l.b16 %v961
      %v1478 = vunpack.c.l.b16 %v962
      %v1479 = vunpack.c.l.b16 %v963
      %v1480 = vunpack.c.l.b16 %v964
      %v1481 = vunpack.c.l.b16 %v965
      %v1482 = vunpack.c.l.b16 %v966
      %v1483 = vunpack.c.l.b16 %v967
      %v1484 = vunpack.c.l.b16 %v968
      %v1485 = vunpack.c.l.b16 %v969
      %v1486 = vunpack.c.l.b16 %v970
      %v1487 = vunpack.c.l.b16 %v971
      %v1488 = vunpack.c.l.b16 %v972
      %v1489 = vunpack.c.l.b16 %v973
      %v1490 = vunpack.c.l.b16 %v974
      %v1491 = vunpack.c.l.b16 %v975
      %v1492 = vunpack.c.l.b16 %v976
      %v1493 = vunpack.c.l.b16 %v977
      %v1494 = vunpack.c.l.b16 %v978
      %v1495 = vunpack.c.l.b16 %v979
      %v1496 = vunpack.c.l.b16 %v980
      %v1497 = vunpack.c.l.b16 %v981
      %v1498 = vunpack.c.l.b16 %v982
      %v1499 = vunpack.c.l.b16 %v983
      %v1500 = vunpack.c.l.b16 %v984
      %v1501 = vunpack.c.l.b16 %v985
      %v1502 = vunpack.c.l.b16 %v986
      %v1503 = vunpack.c.l.b16 %v987
      %v1504 = vunpack.c.l.b16 %v988
      %v1505 = vunpack.c.l.b16 %v989
      %v1506 = vunpack.c.l.b16 %v990
      %v1507 = vunpack.c.l.b16 %v991
      %v1508 = vunpack.c.l.b16 %v992
      %v1509 = vunpack.c.l.b16 %v993
      %v1510 = vunpack.c.l.b16 %v994
      %v1511 = vunpack.c.l.b16 %v995
      %v1512 = vunpack.c.l.b16 %v996
      %v1513 = vunpack.c.l.b16 %v997
      %v1514 = vunpack.c.l.b16 %v998
      %v1515 = vunpack.c.l.b16 %v999
      %v1516 = vunpack.c.l.b16 %v1000
      %v1517 = vunpack.c.l.b16 %v1001
      %v1518 = vunpack.c.l.b16 %v1002
      %v1519 = vunpack.c.l.b16 %v1003
      %v1520 = vunpack.c.l.b16 %v1004
      %v1521 = vunpack.c.l.b16 %v1005
      %v1522 = vunpack.c.l.b16 %v1006
      %v1523 = vunpack.c.l.b16 %v1007
      %v1524 = vunpack.c.l.b16 %v1008
      %v1525 = vunpack.c.l.b16 %v1009
      %v1526 = vunpack.c.l.b16 %v1010
      %v1527 = vunpack.c.l.b16 %v1011
      %v1528 = vunpack.c.l.b16 %v1012
      %v1529 = vunpack.c.l.b16 %v1013
      %v1530 = vunpack.c.l.b16 %v1014
      %v1531 = vunpack.c.l.b16 %v1015
      %v1532 = vunpack.c.l.b16 %v1016
      %v1533 = vunpack.c.l.b16 %v1017
      %v1534 = vunpack.c.l.b16 %v1018
      %v1535 = vunpack.c.l.b16 %v1019
      %v1536 = vunpack.c.l.b16 %v1020
      %v1537 = vunpack.c.l.b16 %v1021
      %v1538 = vunpack.c.l.b16 %v1022
      %v1539 = vunpack.c.l.b16 %v1023
      %v1540 = vunpack.c.l.b16 %v1024
      %v1541 = vunpack.c.l.b16 %v1025
      %v1542 = vunpack.c.l.b16 %v1026
      %v1543 = vunpack.c.l.b16 %v1027
      %v1544 = vunpack.c.l.b16 %v1028
      %v1545 = vunpack.c.l.b16 %v1029
      %v1546 = vunpack.c.l.b16 %v1030
      %v1547 = vunpack.c.l.b16 %v1031
      %v1548 = vunpack.c.l.b16 %v1032
      %v1549 = vunpack.c.l.b16 %v1033
      %v1550 = vunpack.c.l.b16 %v1034
      %v1551 = vunpack.c.l.b16 %v1035
      %v1552 = vunpack.c.l.b16 %v1036
      %v1553 = vunpack.c.l.b16 %v1037
      %v1554 = vunpack.c.l.b16 %v1038
      %v1555 = vunpack.c.l.b16 %v1039
      %v1556 = vunpack.c.l.b16 %v1040
      %v1557 = vunpack.c.l.b16 %v1041
      %v1558 = vunpack.c.l.b16 %v1042
      %v1559 = vunpack.c.l.b16 %v1043
      %v1560 = vunpack.c.l.b16 %v1044
      %v1561 = vunpack.c.l.b16 %v1045
      %v1562 = vunpack.c.l.b16 %v1046
      %v1563 = vunpack.c.l.b16 %v1047
      %v1564 = vunpack.c.l.b16 %v1048
      %v1565 = vunpack.c.l.b16 %v1049
      %v1566 = vunpack.c.l.b16 %v1050
      %v1567 = vunpack.c.l.b16 %v1051
      %v1568 = vunpack.c.l.b16 %v1052
      %v1569 = vunpack.c.l.b16 %v1053
      %v1570 = vunpack.c.l.b16 %v1054
      %v1571 = vpack.c.b16 %v1316, %v1315
      %v1572 = vpack.c.b16 %v1318, %v1317
      %v1573 = vpack.c.b16 %v1320, %v1319
      %v1574 = vpack.c.b16 %v1322, %v1321
      %v1575 = vpack.c.b16 %v1324, %v1323
      %v1576 = vpack.c.b16 %v1326, %v1325
      %v1577 = vpack.c.b16 %v1328, %v1327
      %v1578 = vpack.c.b16 %v1330, %v1329
      %v1579 = vpack.c.b16 %v1332, %v1331
      %v1580 = vpack.c.b16 %v1334, %v1333
      %v1581 = vpack.c.b16 %v1336, %v1335
      %v1582 = vpack.c.b16 %v1338, %v1337
      %v1583 = vpack.c.b16 %v1340, %v1339
      %v1584 = vpack.c.b16 %v1342, %v1341
      %v1585 = vpack.c.b16 %v1344, %v1343
      %v1586 = vpack.c.b16 %v1346, %v1345
      %v1587 = vpack.c.b16 %v1348, %v1347
      %v1588 = vpack.c.b16 %v1350, %v1349
      %v1589 = vpack.c.b16 %v1352, %v1351
      %v1590 = vpack.c.b16 %v1354, %v1353
      %v1591 = vpack.c.b16 %v1356, %v1355
      %v1592 = vpack.c.b16 %v1358, %v1357
      %v1593 = vpack.c.b16 %v1360, %v1359
      %v1594 = vpack.c.b16 %v1362, %v1361
      %v1595 = vpack.c.b16 %v1364, %v1363
      %v1596 = vpack.c.b16 %v1366, %v1365
      %v1597 = vpack.c.b16 %v1368, %v1367
      %v1598 = vpack.c.b16 %v1370, %v1369
      %v1599 = vpack.c.b16 %v1372, %v1371
      %v1600 = vpack.c.b16 %v1374, %v1373
      %v1601 = vpack.c.b16 %v1376, %v1375
      %v1602 = vpack.c.b16 %v1378, %v1377
      %v1603 = vpack.c.b16 %v1380, %v1379
      %v1604 = vpack.c.b16 %v1382, %v1381
      %v1605 = vpack.c.b16 %v1384, %v1383
      %v1606 = vpack.c.b16 %v1386, %v1385
      %v1607 = vpack.c.b16 %v1388, %v1387
      %v1608 = vpack.c.b16 %v1390, %v1389
      %v1609 = vpack.c.b16 %v1392, %v1391
      %v1610 = vpack.c.b16 %v1394, %v1393
      %v1611 = vpack.c.b16 %v1396, %v1395
      %v1612 = vpack.c.b16 %v1398, %v1397
      %v1613 = vpack.c.b16 %v1400, %v1399
      %v1614 = vpack.c.b16 %v1402, %v1401
      %v1615 = vpack.c.b16 %v1404, %v1403
      %v1616 = vpack.c.b16 %v1406, %v1405
      %v1617 = vpack.c.b16 %v1408, %v1407
      %v1618 = vpack.c.b16 %v1410, %v1409
      %v1619 = vpack.c.b16 %v1412, %v1411
      %v1620 = vpack.c.b16 %v1414, %v1413
      %v1621 = vpack.c.b16 %v1416, %v1415
      %v1622 = vpack.c.b16 %v1418, %v1417
      %v1623 = vpack.c.b16 %v1420, %v1419
      %v1624 = vpack.c.b16 %v1422, %v1421
      %v1625 = vpack.c.b16 %v1424, %v1423
      %v1626 = vpack.c.b16 %v1426, %v1425
      %v1627 = vpack.c.b16 %v1428, %v1427
      %v1628 = vpack.c.b16 %v1430, %v1429
      %v1629 = vpack.c.b16 %v1432, %v1431
      %v1630 = vpack.c.b16 %v1434, %v1433
      %v1631 = vpack.c.b16 %v1436, %v1435
      %v1632 = vpack.c.b16 %v1438, %v1437
      %v1633 = vpack.c.b16 %v1440, %v1439
      %v1634 = vpack.c.b16 %v1442, %v1441
      %v1635 = vpack.c.b16 %v1444, %v1443
      %v1636 = vpack.c.b16 %v1446, %v1445
      %v1637 = vpack.c.b16 %v1448, %v1447
      %v1638 = vpack.c.b16 %v1450, %v1449
      %v1639 = vpack.c.b16 %v1452, %v1451
      %v1640 = vpack.c.b16 %v1454, %v1453
      %v1641 = vpack.c.b16 %v1456, %v1455
      %v1642 = vpack.c.b16 %v1458, %v1457
      %v1643 = vpack.c.b16 %v1460, %v1459
      %v1644 = vpack.c.b16 %v1462, %v1461
      %v1645 = vpack.c.b16 %v1464, %v1463
      %v1646 = vpack.c.b16 %v1466, %v1465
      %v1647 = vpack.c.b16 %v1468, %v1467
      %v1648 = vpack.c.b16 %v1470, %v1469
      %v1649 = vpack.c.b16 %v1472, %v1471
      %v1650 = vpack.c.b16 %v1474, %v1473
      %v1651 = vpack.c.b16 %v1476, %v1475
      %v1652 = vpack.c.b16 %v1478, %v1477
      %v1653 = vpack.c.b16 %v1480, %v1479
      %v1654 = vpack.c.b16 %v1482, %v1481
      %v1655 = vpack.c.b16 %v1484, %v1483
      %v1656 = vpack.c.b16 %v1486, %v1485
      %v1657 = vpack.c.b16 %v1488, %v1487
      %v1658 = vpack.c.b16 %v1490, %v1489
      %v1659 = vpack.c.b16 %v1492, %v1491
      %v1660 = vpack.c.b16 %v1494, %v1493
      %v1661 = vpack.c.b16 %v1496, %v1495
      %v1662 = vpack.c.b16 %v1498, %v1497
      %v1663 = vpack.c.b16 %v1500, %v1499
      %v1664 = vpack.c.b16 %v1502, %v1501
      %v1665 = vpack.c.b16 %v1504, %v1503
      %v1666 = vpack.c.b16 %v1506, %v1505
      %v1667 = vpack.c.b16 %v1508, %v1507
      %v1668 = vpack.c.b16 %v1510, %v1509
      %v1669 = vpack.c.b16 %v1512, %v1511
      %v1670 = vpack.c.b16 %v1514, %v1513
      %v1671 = vpack.c.b16 %v1516, %v1515
      %v1672 = vpack.c.b16 %v1518, %v1517
      %v1673 = vpack.c.b16 %v1520, %v1519
      %v1674 = vpack.c.b16 %v1522, %v1521
      %v1675 = vpack.c.b16 %v1524, %v1523
      %v1676 = vpack.c.b16 %v1526, %v1525
      %v1677 = vpack.c.b16 %v1528, %v1527
      %v1678 = vpack.c.b16 %v1530, %v1529
      %v1679 = vpack.c.b16 %v1532, %v1531
      %v1680 = vpack.c.b16 %v1534, %v1533
      %v1681 = vpack.c.b16 %v1536, %v1535
      %v1682 = vpack.c.b16 %v1538, %v1537
      %v1683 = vpack.c.b16 %v1540, %v1539
      %v1684 = vpack.c.b16 %v1542, %v1541
      %v1685 = vpack.c.b16 %v1544, %v1543
      %v1686 = vpack.c.b16 %v1546, %v1545
      %v1687 = vpack.c.b16 %v1548, %v1547
      %v1688 = vpack.c.b16 %v1550, %v1549
      %v1689 = vpack.c.b16 %v1552, %v1551
      %v1690 = vpack.c.b16 %v1554, %v1553
      %v1691 = vpack.c.b16 %v1556, %v1555
      %v1692 = vpack.c.b16 %v1558, %v1557
      %v1693 = vpack.c.b16 %v1560, %v1559
      %v1694 = vpack.c.b16 %v1562, %v1561
      %v1695 = vpack.c.b16 %v1564, %v1563
      %v1696 = vpack.c.b16 %v1566, %v1565
      %v1697 = vpack.c.b16 %v1568, %v1567
      %v1698 = vpack.c.b16 %v1570, %v1569
      %v1703 = vunpack.c.l.b16 %v1055
      %v1704 = vunpack.c.l.b16 %v1056
      %v1705 = vunpack.c.l.b16 %v1057
      %v1706 = vunpack.c.l.b16 %v1058
      %v1707 = vpack.c.b16 %v1704, %v1703
      %v1708 = vpack.c.b16 %v1706, %v1705
      %vm1710 = vcmask 220160
      %v1712 = vsel %vm1710, %v1571, 0
      %v1715 = vsel %vm1710, %v1572, 0
      %v1718 = vsel %vm1710, %v1573, 0
      %v1721 = vsel %vm1710, %v1574, 0
      %v1724 = vsel %vm1710, %v1575, 0
      %v1727 = vsel %vm1710, %v1576, 0
      %v1730 = vsel %vm1710, %v1577, 0
      %v1733 = vsel %vm1710, %v1578, 0
      %v1736 = vsel %vm1710, %v1579, 0
      %v1739 = vsel %vm1710, %v1580, 0
      %v1742 = vsel %vm1710, %v1581, 0
      %v1745 = vsel %vm1710, %v1582, 0
      %v1748 = vsel %vm1710, %v1583, 0
      %v1751 = vsel %vm1710, %v1584, 0
      %v1754 = vsel %vm1710, %v1585, 0
      %v1757 = vsel %vm1710, %v1586, 0
      %v1760 = vsel %vm1710, %v1587, 0
      %v1763 = vsel %vm1710, %v1588, 0
      %v1766 = vsel %vm1710, %v1589, 0
      %v1769 = vsel %vm1710, %v1590, 0
      %v1772 = vsel %vm1710, %v1591, 0
      %v1775 = vsel %vm1710, %v1592, 0
      %v1778 = vsel %vm1710, %v1593, 0
      %v1781 = vsel %vm1710, %v1594, 0
      %v1784 = vsel %vm1710, %v1595, 0
      %v1787 = vsel %vm1710, %v1596, 0
      %v1790 = vsel %vm1710, %v1597, 0
      %v1793 = vsel %vm1710, %v1598, 0
      %v1796 = vsel %vm1710, %v1599, 0
      %v1799 = vsel %vm1710, %v1600, 0
      %v1802 = vsel %vm1710, %v1601, 0
      %v1805 = vsel %vm1710, %v1602, 0
      %v1808 = vsel %vm1710, %v1603, 0
      %v1811 = vsel %vm1710, %v1604, 0
      %v1814 = vsel %vm1710, %v1605, 0
      %v1817 = vsel %vm1710, %v1606, 0
      %v1820 = vsel %vm1710, %v1607, 0
      %v1823 = vsel %vm1710, %v1608, 0
      %v1826 = vsel %vm1710, %v1609, 0
      %v1829 = vsel %vm1710, %v1610, 0
      %v1832 = vsel %vm1710, %v1611, 0
      %v1835 = vsel %vm1710, %v1612, 0
      %v1838 = vsel %vm1710, %v1613, 0
      %v1841 = vsel %vm1710, %v1614, 0
      %v1844 = vsel %vm1710, %v1615, 0
      %v1847 = vsel %vm1710, %v1616, 0
      %v1850 = vsel %vm1710, %v1617, 0
      %v1853 = vsel %vm1710, %v1618, 0
      %v1856 = vsel %vm1710, %v1619, 0
      %v1859 = vsel %vm1710, %v1620, 0
      %v1862 = vsel %vm1710, %v1621, 0
      %v1865 = vsel %vm1710, %v1622, 0
      %v1868 = vsel %vm1710, %v1623, 0
      %v1871 = vsel %vm1710, %v1624, 0
      %v1874 = vsel %vm1710, %v1625, 0
      %v1877 = vsel %vm1710, %v1626, 0
      %v1880 = vsel %vm1710, %v1627, 0
      %v1883 = vsel %vm1710, %v1628, 0
      %v1886 = vsel %vm1710, %v1629, 0
      %v1889 = vsel %vm1710, %v1630, 0
      %v1892 = vsel %vm1710, %v1631, 0
      %v1895 = vsel %vm1710, %v1632, 0
      %v1898 = vsel %vm1710, %v1633, 0
      %v1901 = vsel %vm1710, %v1634, 0
      %v1904 = vsel %vm1710, %v1635, 0
      %v1907 = vsel %vm1710, %v1636, 0
      %v1910 = vsel %vm1710, %v1637, 0
      %v1913 = vsel %vm1710, %v1638, 0
      %v1916 = vsel %vm1710, %v1639, 0
      %v1919 = vsel %vm1710, %v1640, 0
      %v1922 = vsel %vm1710, %v1641, 0
      %v1925 = vsel %vm1710, %v1642, 0
      %v1928 = vsel %vm1710, %v1643, 0
      %v1931 = vsel %vm1710, %v1644, 0
      %v1934 = vsel %vm1710, %v1645, 0
      %v1937 = vsel %vm1710, %v1646, 0
      %v1940 = vsel %vm1710, %v1647, 0
      %v1943 = vsel %vm1710, %v1648, 0
      %v1946 = vsel %vm1710, %v1649, 0
      %v1949 = vsel %vm1710, %v1650, 0
      %v1952 = vsel %vm1710, %v1651, 0
      %v1955 = vsel %vm1710, %v1652, 0
      %v1958 = vsel %vm1710, %v1653, 0
      %v1961 = vsel %vm1710, %v1654, 0
      %v1964 = vsel %vm1710, %v1655, 0
      %v1967 = vsel %vm1710, %v1656, 0
      %v1970 = vsel %vm1710, %v1657, 0
      %v1973 = vsel %vm1710, %v1658, 0
      %v1976 = vsel %vm1710, %v1659, 0
      %v1979 = vsel %vm1710, %v1660, 0
      %v1982 = vsel %vm1710, %v1661, 0
      %v1985 = vsel %vm1710, %v1662, 0
      %v1988 = vsel %vm1710, %v1663, 0
      %v1991 = vsel %vm1710, %v1664, 0
      %v1994 = vsel %vm1710, %v1665, 0
      %v1997 = vsel %vm1710, %v1666, 0
      %v2000 = vsel %vm1710, %v1667, 0
      %v2003 = vsel %vm1710, %v1668, 0
      %v2006 = vsel %vm1710, %v1669, 0
      %v2009 = vsel %vm1710, %v1670, 0
      %v2012 = vsel %vm1710, %v1671, 0
      %v2015 = vsel %vm1710, %v1672, 0
      %v2018 = vsel %vm1710, %v1673, 0
      %v2021 = vsel %vm1710, %v1674, 0
      %v2024 = vsel %vm1710, %v1675, 0
      %v2027 = vsel %vm1710, %v1676, 0
      %v2030 = vsel %vm1710, %v1677, 0
      %v2033 = vsel %vm1710, %v1678, 0
      %v2036 = vsel %vm1710, %v1679, 0
      %v2039 = vsel %vm1710, %v1680, 0
      %v2042 = vsel %vm1710, %v1681, 0
      %v2045 = vsel %vm1710, %v1682, 0
      %v2048 = vsel %vm1710, %v1683, 0
      %v2051 = vsel %vm1710, %v1684, 0
      %v2054 = vsel %vm1710, %v1685, 0
      %v2057 = vsel %vm1710, %v1686, 0
      %v2060 = vsel %vm1710, %v1687, 0
      %v2063 = vsel %vm1710, %v1688, 0
      %v2066 = vsel %vm1710, %v1689, 0
      %v2069 = vsel %vm1710, %v1690, 0
      %v2072 = vsel %vm1710, %v1691, 0
      %v2075 = vsel %vm1710, %v1692, 0
      %v2078 = vsel %vm1710, %v1693, 0
      %v2081 = vsel %vm1710, %v1694, 0
      %v2084 = vsel %vm1710, %v1695, 0
      %v2087 = vsel %vm1710, %v1696, 0
      %v2090 = vsel %vm1710, %v1697, 0
      %v2093 = vsel %vm1710, %v1698, 0
      %vm2095 = vcmask 1044480
      %vm2096 = vcmask 1045504
      %v2097 = vsel %vm2095, 4294967295, 65535
      %v2098 = vsel %vm2096, %v2097, 0
      %v2100 = vand.u32 %v1708, %v2098
      %2102 = vmatprep.subr.bf16.mxu0 0
      %2103 = vmatpush1.bf16.msra.mxu0 0
      %2104 = vmatprep.subr.bf16.mxu0 0
      %2105 = vmatpush1.bf16.msra.mxu0 0
      %2106 = vmatprep.subr.bf16.mxu0 0
      %2107 = vmatpush1.bf16.msra.mxu0 0
      %2108 = vmatprep.subr.bf16.mxu0 0
      %2109 = vmatpush1.bf16.msra.mxu0 0
      %2110 = vmatprep.subr.bf16.mxu0 0
      %2111 = vmatpush1.bf16.msra.mxu0 0
      %2112 = vmatprep.subr.bf16.mxu0 0
      %2113 = vmatpush1.bf16.msra.mxu0 0
      %2114 = vmatprep.subr.bf16.mxu0 0
      %2115 = vmatpush1.bf16.msra.mxu0 %v2100
      %2116 = vmatprep.subr.bf16.mxu0 0
      %2117 = vmatpush1.bf16.msra.mxu0 %v1707
      %2118 = vmatprep.subr.bf16.mxu0 0
      %2119 = vmatpush2.bf16.msra.mxu0 0
      %2120 = vmatprep.subr.bf16.mxu0 0
      %2121 = vmatpush2.bf16.msra.mxu0 0
      %2122 = vmatprep.subr.bf16.mxu0 0
      %2123 = vmatpush2.bf16.msra.mxu0 0
      %2124 = vmatprep.subr.bf16.mxu0 0
      %2125 = vmatpush2.bf16.msra.mxu0 0
      %2126 = vmatprep.subr.bf16.mxu0 0
      %2127 = vmatpush2.bf16.msra.mxu0 0
      %2128 = vmatprep.subr.bf16.mxu0 0
      %2129 = vmatpush2.bf16.msra.mxu0 0
      %2130 = vmatprep.subr.bf16.mxu0 0
      %2131 = vmatpush2.bf16.msra.mxu0 0
      %2132 = vmatprep.subr.bf16.mxu0 0
      %2133 = vmatpush2.bf16.msra.mxu0 0
      %2134 = vmatprep.mubr.bf16.mxu0 0
      %2135 = vmatmul.mubr.bf16.gmra.mxu0 %v1712
      %v2136 = vpop.f32.mrf.mxu0
      %v2137 = vadd.f32 0.0, %v2136
      %v2138 = vpop.f32.mrf.mxu0
      %v2139 = vpop.f32.mrf.mxu0
      %v2140 = vadd.f32 0.0, %v2139
      %v2141 = vpop.f32.mrf.mxu0
      %2142 = vmatprep.mubr.bf16.mxu0 0
      %2143 = vmatmul.mubr.bf16.gmra.mxu0 %v1715
      %v2144 = vpop.f32.mrf.mxu0
      %v2145 = vadd.f32 0.0, %v2144
      %v2146 = vpop.f32.mrf.mxu0
      %v2147 = vpop.f32.mrf.mxu0
      %v2148 = vadd.f32 0.0, %v2147
      %v2149 = vpop.f32.mrf.mxu0
      %2150 = vmatprep.mubr.bf16.mxu0 0
      %2151 = vmatmul.mubr.bf16.gmra.mxu0 %v1718
      %v2152 = vpop.f32.mrf.mxu0
      %v2153 = vadd.f32 0.0, %v2152
      %v2154 = vpop.f32.mrf.mxu0
      %v2155 = vpop.f32.mrf.mxu0
      %v2156 = vadd.f32 0.0, %v2155
      %v2157 = vpop.f32.mrf.mxu0
      %2158 = vmatprep.mubr.bf16.mxu0 0
      %2159 = vmatmul.mubr.bf16.gmra.mxu0 %v1721
      %v2160 = vpop.f32.mrf.mxu0
      %v2161 = vadd.f32 0.0, %v2160
      %v2162 = vpop.f32.mrf.mxu0
      %v2163 = vpop.f32.mrf.mxu0
      %v2164 = vadd.f32 0.0, %v2163
      %v2165 = vpop.f32.mrf.mxu0
      %2166 = vmatprep.mubr.bf16.mxu0 0
      %2167 = vmatmul.mubr.bf16.gmra.mxu0 %v1724
      %v2168 = vpop.f32.mrf.mxu0
      %v2169 = vadd.f32 0.0, %v2168
      %v2170 = vpop.f32.mrf.mxu0
      %v2171 = vpop.f32.mrf.mxu0
      %v2172 = vadd.f32 0.0, %v2171
      %v2173 = vpop.f32.mrf.mxu0
      %2174 = vmatprep.mubr.bf16.mxu0 0
      %2175 = vmatmul.mubr.bf16.gmra.mxu0 %v1727
      %v2176 = vpop.f32.mrf.mxu0
      %v2177 = vadd.f32 0.0, %v2176
      %v2178 = vpop.f32.mrf.mxu0
      %v2179 = vpop.f32.mrf.mxu0
      %v2180 = vadd.f32 0.0, %v2179
      %v2181 = vpop.f32.mrf.mxu0
      %2182 = vmatprep.mubr.bf16.mxu0 0
      %2183 = vmatmul.mubr.bf16.gmra.mxu0 %v1730
      %v2184 = vpop.f32.mrf.mxu0
      %v2185 = vadd.f32 0.0, %v2184
      %v2186 = vpop.f32.mrf.mxu0
      %v2187 = vpop.f32.mrf.mxu0
      %v2188 = vadd.f32 0.0, %v2187
      %v2189 = vpop.f32.mrf.mxu0
      %2190 = vmatprep.mubr.bf16.mxu0 0
      %2191 = vmatmul.mubr.bf16.gmra.mxu0 %v1733
      %v2192 = vpop.f32.mrf.mxu0
      %v2193 = vadd.f32 0.0, %v2192
      %v2194 = vpop.f32.mrf.mxu0
      %v2195 = vpop.f32.mrf.mxu0
      %v2196 = vadd.f32 0.0, %v2195
      %v2197 = vpop.f32.mrf.mxu0
      %2198 = vmatprep.mubr.bf16.mxu0 0
      %2199 = vmatmul.mubr.bf16.gmra.mxu0 %v1736
      %v2200 = vpop.f32.mrf.mxu0
      %v2201 = vadd.f32 0.0, %v2200
      %v2202 = vpop.f32.mrf.mxu0
      %v2203 = vpop.f32.mrf.mxu0
      %v2204 = vadd.f32 0.0, %v2203
      %v2205 = vpop.f32.mrf.mxu0
      %2206 = vmatprep.mubr.bf16.mxu0 0
      %2207 = vmatmul.mubr.bf16.gmra.mxu0 %v1739
      %v2208 = vpop.f32.mrf.mxu0
      %v2209 = vadd.f32 0.0, %v2208
      %v2210 = vpop.f32.mrf.mxu0
      %v2211 = vpop.f32.mrf.mxu0
      %v2212 = vadd.f32 0.0, %v2211
      %v2213 = vpop.f32.mrf.mxu0
      %2214 = vmatprep.mubr.bf16.mxu0 0
      %2215 = vmatmul.mubr.bf16.gmra.mxu0 %v1742
      %v2216 = vpop.f32.mrf.mxu0
      %v2217 = vadd.f32 0.0, %v2216
      %v2218 = vpop.f32.mrf.mxu0
      %v2219 = vpop.f32.mrf.mxu0
      %v2220 = vadd.f32 0.0, %v2219
      %v2221 = vpop.f32.mrf.mxu0
      %2222 = vmatprep.mubr.bf16.mxu0 0
      %2223 = vmatmul.mubr.bf16.gmra.mxu0 %v1745
      %v2224 = vpop.f32.mrf.mxu0
      %v2225 = vadd.f32 0.0, %v2224
      %v2226 = vpop.f32.mrf.mxu0
      %v2227 = vpop.f32.mrf.mxu0
      %v2228 = vadd.f32 0.0, %v2227
      %v2229 = vpop.f32.mrf.mxu0
      %2230 = vmatprep.mubr.bf16.mxu0 0
      %2231 = vmatmul.mubr.bf16.gmra.mxu0 %v1748
      %v2232 = vpop.f32.mrf.mxu0
      %v2233 = vadd.f32 0.0, %v2232
      %v2234 = vpop.f32.mrf.mxu0
      %v2235 = vpop.f32.mrf.mxu0
      %v2236 = vadd.f32 0.0, %v2235
      %v2237 = vpop.f32.mrf.mxu0
      %2238 = vmatprep.mubr.bf16.mxu0 0
      %2239 = vmatmul.mubr.bf16.gmra.mxu0 %v1751
      %v2240 = vpop.f32.mrf.mxu0
      %v2241 = vadd.f32 0.0, %v2240
      %v2242 = vpop.f32.mrf.mxu0
      %v2243 = vpop.f32.mrf.mxu0
      %v2244 = vadd.f32 0.0, %v2243
      %v2245 = vpop.f32.mrf.mxu0
      %2246 = vmatprep.mubr.bf16.mxu0 0
      %2247 = vmatmul.mubr.bf16.gmra.mxu0 %v1754
      %v2248 = vpop.f32.mrf.mxu0
      %v2249 = vadd.f32 0.0, %v2248
      %v2250 = vpop.f32.mrf.mxu0
      %v2251 = vpop.f32.mrf.mxu0
      %v2252 = vadd.f32 0.0, %v2251
      %v2253 = vpop.f32.mrf.mxu0
      %2254 = vmatprep.mubr.bf16.mxu0 0
      %2255 = vmatmul.mubr.bf16.gmra.mxu0 %v1757
      %v2256 = vpop.f32.mrf.mxu0
      %v2257 = vadd.f32 0.0, %v2256
      %v2258 = vpop.f32.mrf.mxu0
      %v2259 = vpop.f32.mrf.mxu0
      %v2260 = vadd.f32 0.0, %v2259
      %v2261 = vpop.f32.mrf.mxu0
      %2262 = vmatprep.mubr.bf16.mxu0 0
      %2263 = vmatmul.mubr.bf16.gmra.mxu0 %v1760
      %v2264 = vpop.f32.mrf.mxu0
      %v2265 = vadd.f32 0.0, %v2264
      %v2266 = vpop.f32.mrf.mxu0
      %v2267 = vpop.f32.mrf.mxu0
      %v2268 = vadd.f32 0.0, %v2267
      %v2269 = vpop.f32.mrf.mxu0
      %2270 = vmatprep.mubr.bf16.mxu0 0
      %2271 = vmatmul.mubr.bf16.gmra.mxu0 %v1763
      %v2272 = vpop.f32.mrf.mxu0
      %v2273 = vadd.f32 0.0, %v2272
      %v2274 = vpop.f32.mrf.mxu0
      %v2275 = vpop.f32.mrf.mxu0
      %v2276 = vadd.f32 0.0, %v2275
      %v2277 = vpop.f32.mrf.mxu0
      %2278 = vmatprep.mubr.bf16.mxu0 0
      %2279 = vmatmul.mubr.bf16.gmra.mxu0 %v1766
      %v2280 = vpop.f32.mrf.mxu0
      %v2281 = vadd.f32 0.0, %v2280
      %v2282 = vpop.f32.mrf.mxu0
      %v2283 = vpop.f32.mrf.mxu0
      %v2284 = vadd.f32 0.0, %v2283
      %v2285 = vpop.f32.mrf.mxu0
      %2286 = vmatprep.mubr.bf16.mxu0 0
      %2287 = vmatmul.mubr.bf16.gmra.mxu0 %v1769
      %v2288 = vpop.f32.mrf.mxu0
      %v2289 = vadd.f32 0.0, %v2288
      %v2290 = vpop.f32.mrf.mxu0
      %v2291 = vpop.f32.mrf.mxu0
      %v2292 = vadd.f32 0.0, %v2291
      %v2293 = vpop.f32.mrf.mxu0
      %2294 = vmatprep.mubr.bf16.mxu0 0
      %2295 = vmatmul.mubr.bf16.gmra.mxu0 %v1772
      %v2296 = vpop.f32.mrf.mxu0
      %v2297 = vadd.f32 0.0, %v2296
      %v2298 = vpop.f32.mrf.mxu0
      %v2299 = vpop.f32.mrf.mxu0
      %v2300 = vadd.f32 0.0, %v2299
      %v2301 = vpop.f32.mrf.mxu0
      %2302 = vmatprep.mubr.bf16.mxu0 0
      %2303 = vmatmul.mubr.bf16.gmra.mxu0 %v1775
      %v2304 = vpop.f32.mrf.mxu0
      %v2305 = vadd.f32 0.0, %v2304
      %v2306 = vpop.f32.mrf.mxu0
      %v2307 = vpop.f32.mrf.mxu0
      %v2308 = vadd.f32 0.0, %v2307
      %v2309 = vpop.f32.mrf.mxu0
      %2310 = vmatprep.mubr.bf16.mxu0 0
      %2311 = vmatmul.mubr.bf16.gmra.mxu0 %v1778
      %v2312 = vpop.f32.mrf.mxu0
      %v2313 = vadd.f32 0.0, %v2312
      %v2314 = vpop.f32.mrf.mxu0
      %v2315 = vpop.f32.mrf.mxu0
      %v2316 = vadd.f32 0.0, %v2315
      %v2317 = vpop.f32.mrf.mxu0
      %2318 = vmatprep.mubr.bf16.mxu0 0
      %2319 = vmatmul.mubr.bf16.gmra.mxu0 %v1781
      %v2320 = vpop.f32.mrf.mxu0
      %v2321 = vadd.f32 0.0, %v2320
      %v2322 = vpop.f32.mrf.mxu0
      %v2323 = vpop.f32.mrf.mxu0
      %v2324 = vadd.f32 0.0, %v2323
      %v2325 = vpop.f32.mrf.mxu0
      %2326 = vmatprep.mubr.bf16.mxu0 0
      %2327 = vmatmul.mubr.bf16.gmra.mxu0 %v1784
      %v2328 = vpop.f32.mrf.mxu0
      %v2329 = vadd.f32 0.0, %v2328
      %v2330 = vpop.f32.mrf.mxu0
      %v2331 = vpop.f32.mrf.mxu0
      %v2332 = vadd.f32 0.0, %v2331
      %v2333 = vpop.f32.mrf.mxu0
      %2334 = vmatprep.mubr.bf16.mxu0 0
      %2335 = vmatmul.mubr.bf16.gmra.mxu0 %v1787
      %v2336 = vpop.f32.mrf.mxu0
      %v2337 = vadd.f32 0.0, %v2336
      %v2338 = vpop.f32.mrf.mxu0
      %v2339 = vpop.f32.mrf.mxu0
      %v2340 = vadd.f32 0.0, %v2339
      %v2341 = vpop.f32.mrf.mxu0
      %2342 = vmatprep.mubr.bf16.mxu0 0
      %2343 = vmatmul.mubr.bf16.gmra.mxu0 %v1790
      %v2344 = vpop.f32.mrf.mxu0
      %v2345 = vadd.f32 0.0, %v2344
      %v2346 = vpop.f32.mrf.mxu0
      %v2347 = vpop.f32.mrf.mxu0
      %v2348 = vadd.f32 0.0, %v2347
      %v2349 = vpop.f32.mrf.mxu0
      %2350 = vmatprep.mubr.bf16.mxu0 0
      %2351 = vmatmul.mubr.bf16.gmra.mxu0 %v1793
      %v2352 = vpop.f32.mrf.mxu0
      %v2353 = vadd.f32 0.0, %v2352
      %v2354 = vpop.f32.mrf.mxu0
      %v2355 = vpop.f32.mrf.mxu0
      %v2356 = vadd.f32 0.0, %v2355
      %v2357 = vpop.f32.mrf.mxu0
      %2358 = vmatprep.mubr.bf16.mxu0 0
      %2359 = vmatmul.mubr.bf16.gmra.mxu0 %v1796
      %v2360 = vpop.f32.mrf.mxu0
      %v2361 = vadd.f32 0.0, %v2360
      %v2362 = vpop.f32.mrf.mxu0
      %v2363 = vpop.f32.mrf.mxu0
      %v2364 = vadd.f32 0.0, %v2363
      %v2365 = vpop.f32.mrf.mxu0
      %2366 = vmatprep.mubr.bf16.mxu0 0
      %2367 = vmatmul.mubr.bf16.gmra.mxu0 %v1799
      %v2368 = vpop.f32.mrf.mxu0
      %v2369 = vadd.f32 0.0, %v2368
      %v2370 = vpop.f32.mrf.mxu0
      %v2371 = vpop.f32.mrf.mxu0
      %v2372 = vadd.f32 0.0, %v2371
      %v2373 = vpop.f32.mrf.mxu0
      %2374 = vmatprep.mubr.bf16.mxu0 0
      %2375 = vmatmul.mubr.bf16.gmra.mxu0 %v1802
      %v2376 = vpop.f32.mrf.mxu0
      %v2377 = vadd.f32 0.0, %v2376
      %v2378 = vpop.f32.mrf.mxu0
      %v2379 = vpop.f32.mrf.mxu0
      %v2380 = vadd.f32 0.0, %v2379
      %v2381 = vpop.f32.mrf.mxu0
      %2382 = vmatprep.mubr.bf16.mxu0 0
      %2383 = vmatmul.mubr.bf16.gmra.mxu0 %v1805
      %v2384 = vpop.f32.mrf.mxu0
      %v2385 = vadd.f32 0.0, %v2384
      %v2386 = vpop.f32.mrf.mxu0
      %v2387 = vpop.f32.mrf.mxu0
      %v2388 = vadd.f32 0.0, %v2387
      %v2389 = vpop.f32.mrf.mxu0
      %2390 = vmatprep.mubr.bf16.mxu0 0
      %2391 = vmatmul.mubr.bf16.gmra.mxu0 %v1808
      %v2392 = vpop.f32.mrf.mxu0
      %v2393 = vadd.f32 0.0, %v2392
      %v2394 = vpop.f32.mrf.mxu0
      %v2395 = vpop.f32.mrf.mxu0
      %v2396 = vadd.f32 0.0, %v2395
      %v2397 = vpop.f32.mrf.mxu0
      %2398 = vmatprep.mubr.bf16.mxu0 0
      %2399 = vmatmul.mubr.bf16.gmra.mxu0 %v1811
      %v2400 = vpop.f32.mrf.mxu0
      %v2401 = vadd.f32 0.0, %v2400
      %v2402 = vpop.f32.mrf.mxu0
      %v2403 = vpop.f32.mrf.mxu0
      %v2404 = vadd.f32 0.0, %v2403
      %v2405 = vpop.f32.mrf.mxu0
      %2406 = vmatprep.mubr.bf16.mxu0 0
      %2407 = vmatmul.mubr.bf16.gmra.mxu0 %v1814
      %v2408 = vpop.f32.mrf.mxu0
      %v2409 = vadd.f32 0.0, %v2408
      %v2410 = vpop.f32.mrf.mxu0
      %v2411 = vpop.f32.mrf.mxu0
      %v2412 = vadd.f32 0.0, %v2411
      %v2413 = vpop.f32.mrf.mxu0
      %2414 = vmatprep.mubr.bf16.mxu0 0
      %2415 = vmatmul.mubr.bf16.gmra.mxu0 %v1817
      %v2416 = vpop.f32.mrf.mxu0
      %v2417 = vadd.f32 0.0, %v2416
      %v2418 = vpop.f32.mrf.mxu0
      %v2419 = vpop.f32.mrf.mxu0
      %v2420 = vadd.f32 0.0, %v2419
      %v2421 = vpop.f32.mrf.mxu0
      %2422 = vmatprep.mubr.bf16.mxu0 0
      %2423 = vmatmul.mubr.bf16.gmra.mxu0 %v1820
      %v2424 = vpop.f32.mrf.mxu0
      %v2425 = vadd.f32 0.0, %v2424
      %v2426 = vpop.f32.mrf.mxu0
      %v2427 = vpop.f32.mrf.mxu0
      %v2428 = vadd.f32 0.0, %v2427
      %v2429 = vpop.f32.mrf.mxu0
      %2430 = vmatprep.mubr.bf16.mxu0 0
      %2431 = vmatmul.mubr.bf16.gmra.mxu0 %v1823
      %v2432 = vpop.f32.mrf.mxu0
      %v2433 = vadd.f32 0.0, %v2432
      %v2434 = vpop.f32.mrf.mxu0
      %v2435 = vpop.f32.mrf.mxu0
      %v2436 = vadd.f32 0.0, %v2435
      %v2437 = vpop.f32.mrf.mxu0
      %2438 = vmatprep.mubr.bf16.mxu0 0
      %2439 = vmatmul.mubr.bf16.gmra.mxu0 %v1826
      %v2440 = vpop.f32.mrf.mxu0
      %v2441 = vadd.f32 0.0, %v2440
      %v2442 = vpop.f32.mrf.mxu0
      %v2443 = vpop.f32.mrf.mxu0
      %v2444 = vadd.f32 0.0, %v2443
      %v2445 = vpop.f32.mrf.mxu0
      %2446 = vmatprep.mubr.bf16.mxu0 0
      %2447 = vmatmul.mubr.bf16.gmra.mxu0 %v1829
      %v2448 = vpop.f32.mrf.mxu0
      %v2449 = vadd.f32 0.0, %v2448
      %v2450 = vpop.f32.mrf.mxu0
      %v2451 = vpop.f32.mrf.mxu0
      %v2452 = vadd.f32 0.0, %v2451
      %v2453 = vpop.f32.mrf.mxu0
      %2454 = vmatprep.mubr.bf16.mxu0 0
      %2455 = vmatmul.mubr.bf16.gmra.mxu0 %v1832
      %v2456 = vpop.f32.mrf.mxu0
      %v2457 = vadd.f32 0.0, %v2456
      %v2458 = vpop.f32.mrf.mxu0
      %v2459 = vpop.f32.mrf.mxu0
      %v2460 = vadd.f32 0.0, %v2459
      %v2461 = vpop.f32.mrf.mxu0
      %2462 = vmatprep.mubr.bf16.mxu0 0
      %2463 = vmatmul.mubr.bf16.gmra.mxu0 %v1835
      %v2464 = vpop.f32.mrf.mxu0
      %v2465 = vadd.f32 0.0, %v2464
      %v2466 = vpop.f32.mrf.mxu0
      %v2467 = vpop.f32.mrf.mxu0
      %v2468 = vadd.f32 0.0, %v2467
      %v2469 = vpop.f32.mrf.mxu0
      %2470 = vmatprep.mubr.bf16.mxu0 0
      %2471 = vmatmul.mubr.bf16.gmra.mxu0 %v1838
      %v2472 = vpop.f32.mrf.mxu0
      %v2473 = vadd.f32 0.0, %v2472
      %v2474 = vpop.f32.mrf.mxu0
      %v2475 = vpop.f32.mrf.mxu0
      %v2476 = vadd.f32 0.0, %v2475
      %v2477 = vpop.f32.mrf.mxu0
      %2478 = vmatprep.mubr.bf16.mxu0 0
      %2479 = vmatmul.mubr.bf16.gmra.mxu0 %v1841
      %v2480 = vpop.f32.mrf.mxu0
      %v2481 = vadd.f32 0.0, %v2480
      %v2482 = vpop.f32.mrf.mxu0
      %v2483 = vpop.f32.mrf.mxu0
      %v2484 = vadd.f32 0.0, %v2483
      %v2485 = vpop.f32.mrf.mxu0
      %2486 = vmatprep.mubr.bf16.mxu0 0
      %2487 = vmatmul.mubr.bf16.gmra.mxu0 %v1844
      %v2488 = vpop.f32.mrf.mxu0
      %v2489 = vadd.f32 0.0, %v2488
      %v2490 = vpop.f32.mrf.mxu0
      %v2491 = vpop.f32.mrf.mxu0
      %v2492 = vadd.f32 0.0, %v2491
      %v2493 = vpop.f32.mrf.mxu0
      %2494 = vmatprep.mubr.bf16.mxu0 0
      %2495 = vmatmul.mubr.bf16.gmra.mxu0 %v1847
      %v2496 = vpop.f32.mrf.mxu0
      %v2497 = vadd.f32 0.0, %v2496
      %v2498 = vpop.f32.mrf.mxu0
      %v2499 = vpop.f32.mrf.mxu0
      %v2500 = vadd.f32 0.0, %v2499
      %v2501 = vpop.f32.mrf.mxu0
      %2502 = vmatprep.mubr.bf16.mxu0 0
      %2503 = vmatmul.mubr.bf16.gmra.mxu0 %v1850
      %v2504 = vpop.f32.mrf.mxu0
      %v2505 = vadd.f32 0.0, %v2504
      %v2506 = vpop.f32.mrf.mxu0
      %v2507 = vpop.f32.mrf.mxu0
      %v2508 = vadd.f32 0.0, %v2507
      %v2509 = vpop.f32.mrf.mxu0
      %2510 = vmatprep.mubr.bf16.mxu0 0
      %2511 = vmatmul.mubr.bf16.gmra.mxu0 %v1853
      %v2512 = vpop.f32.mrf.mxu0
      %v2513 = vadd.f32 0.0, %v2512
      %v2514 = vpop.f32.mrf.mxu0
      %v2515 = vpop.f32.mrf.mxu0
      %v2516 = vadd.f32 0.0, %v2515
      %v2517 = vpop.f32.mrf.mxu0
      %2518 = vmatprep.mubr.bf16.mxu0 0
      %2519 = vmatmul.mubr.bf16.gmra.mxu0 %v1856
      %v2520 = vpop.f32.mrf.mxu0
      %v2521 = vadd.f32 0.0, %v2520
      %v2522 = vpop.f32.mrf.mxu0
      %v2523 = vpop.f32.mrf.mxu0
      %v2524 = vadd.f32 0.0, %v2523
      %v2525 = vpop.f32.mrf.mxu0
      %2526 = vmatprep.mubr.bf16.mxu0 0
      %2527 = vmatmul.mubr.bf16.gmra.mxu0 %v1859
      %v2528 = vpop.f32.mrf.mxu0
      %v2529 = vadd.f32 0.0, %v2528
      %v2530 = vpop.f32.mrf.mxu0
      %v2531 = vpop.f32.mrf.mxu0
      %v2532 = vadd.f32 0.0, %v2531
      %v2533 = vpop.f32.mrf.mxu0
      %2534 = vmatprep.mubr.bf16.mxu0 0
      %2535 = vmatmul.mubr.bf16.gmra.mxu0 %v1862
      %v2536 = vpop.f32.mrf.mxu0
      %v2537 = vadd.f32 0.0, %v2536
      %v2538 = vpop.f32.mrf.mxu0
      %v2539 = vpop.f32.mrf.mxu0
      %v2540 = vadd.f32 0.0, %v2539
      %v2541 = vpop.f32.mrf.mxu0
      %2542 = vmatprep.mubr.bf16.mxu0 0
      %2543 = vmatmul.mubr.bf16.gmra.mxu0 %v1865
      %v2544 = vpop.f32.mrf.mxu0
      %v2545 = vadd.f32 0.0, %v2544
      %v2546 = vpop.f32.mrf.mxu0
      %v2547 = vpop.f32.mrf.mxu0
      %v2548 = vadd.f32 0.0, %v2547
      %v2549 = vpop.f32.mrf.mxu0
      %2550 = vmatprep.mubr.bf16.mxu0 0
      %2551 = vmatmul.mubr.bf16.gmra.mxu0 %v1868
      %v2552 = vpop.f32.mrf.mxu0
      %v2553 = vadd.f32 0.0, %v2552
      %v2554 = vpop.f32.mrf.mxu0
      %v2555 = vpop.f32.mrf.mxu0
      %v2556 = vadd.f32 0.0, %v2555
      %v2557 = vpop.f32.mrf.mxu0
      %2558 = vmatprep.mubr.bf16.mxu0 0
      %2559 = vmatmul.mubr.bf16.gmra.mxu0 %v1871
      %v2560 = vpop.f32.mrf.mxu0
      %v2561 = vadd.f32 0.0, %v2560
      %v2562 = vpop.f32.mrf.mxu0
      %v2563 = vpop.f32.mrf.mxu0
      %v2564 = vadd.f32 0.0, %v2563
      %v2565 = vpop.f32.mrf.mxu0
      %2566 = vmatprep.mubr.bf16.mxu0 0
      %2567 = vmatmul.mubr.bf16.gmra.mxu0 %v1874
      %v2568 = vpop.f32.mrf.mxu0
      %v2569 = vadd.f32 0.0, %v2568
      %v2570 = vpop.f32.mrf.mxu0
      %v2571 = vpop.f32.mrf.mxu0
      %v2572 = vadd.f32 0.0, %v2571
      %v2573 = vpop.f32.mrf.mxu0
      %2574 = vmatprep.mubr.bf16.mxu0 0
      %2575 = vmatmul.mubr.bf16.gmra.mxu0 %v1877
      %v2576 = vpop.f32.mrf.mxu0
      %v2577 = vadd.f32 0.0, %v2576
      %v2578 = vpop.f32.mrf.mxu0
      %v2579 = vpop.f32.mrf.mxu0
      %v2580 = vadd.f32 0.0, %v2579
      %v2581 = vpop.f32.mrf.mxu0
      %2582 = vmatprep.mubr.bf16.mxu0 0
      %2583 = vmatmul.mubr.bf16.gmra.mxu0 %v1880
      %v2584 = vpop.f32.mrf.mxu0
      %v2585 = vadd.f32 0.0, %v2584
      %v2586 = vpop.f32.mrf.mxu0
      %v2587 = vpop.f32.mrf.mxu0
      %v2588 = vadd.f32 0.0, %v2587
      %v2589 = vpop.f32.mrf.mxu0
      %2590 = vmatprep.mubr.bf16.mxu0 0
      %2591 = vmatmul.mubr.bf16.gmra.mxu0 %v1883
      %v2592 = vpop.f32.mrf.mxu0
      %v2593 = vadd.f32 0.0, %v2592
      %v2594 = vpop.f32.mrf.mxu0
      %v2595 = vpop.f32.mrf.mxu0
      %v2596 = vadd.f32 0.0, %v2595
      %v2597 = vpop.f32.mrf.mxu0
      %2598 = vmatprep.mubr.bf16.mxu0 0
      %2599 = vmatmul.mubr.bf16.gmra.mxu0 %v1886
      %v2600 = vpop.f32.mrf.mxu0
      %v2601 = vadd.f32 0.0, %v2600
      %v2602 = vpop.f32.mrf.mxu0
      %v2603 = vpop.f32.mrf.mxu0
      %v2604 = vadd.f32 0.0, %v2603
      %v2605 = vpop.f32.mrf.mxu0
      %2606 = vmatprep.mubr.bf16.mxu0 0
      %2607 = vmatmul.mubr.bf16.gmra.mxu0 %v1889
      %v2608 = vpop.f32.mrf.mxu0
      %v2609 = vadd.f32 0.0, %v2608
      %v2610 = vpop.f32.mrf.mxu0
      %v2611 = vpop.f32.mrf.mxu0
      %v2612 = vadd.f32 0.0, %v2611
      %v2613 = vpop.f32.mrf.mxu0
      %2614 = vmatprep.mubr.bf16.mxu0 0
      %2615 = vmatmul.mubr.bf16.gmra.mxu0 %v1892
      %v2616 = vpop.f32.mrf.mxu0
      %v2617 = vadd.f32 0.0, %v2616
      %v2618 = vpop.f32.mrf.mxu0
      %v2619 = vpop.f32.mrf.mxu0
      %v2620 = vadd.f32 0.0, %v2619
      %v2621 = vpop.f32.mrf.mxu0
      %2622 = vmatprep.mubr.bf16.mxu0 0
      %2623 = vmatmul.mubr.bf16.gmra.mxu0 %v1895
      %v2624 = vpop.f32.mrf.mxu0
      %v2625 = vadd.f32 0.0, %v2624
      %v2626 = vpop.f32.mrf.mxu0
      %v2627 = vpop.f32.mrf.mxu0
      %v2628 = vadd.f32 0.0, %v2627
      %v2629 = vpop.f32.mrf.mxu0
      %2630 = vmatprep.mubr.bf16.mxu0 0
      %2631 = vmatmul.mubr.bf16.gmra.mxu0 %v1898
      %v2632 = vpop.f32.mrf.mxu0
      %v2633 = vadd.f32 0.0, %v2632
      %v2634 = vpop.f32.mrf.mxu0
      %v2635 = vpop.f32.mrf.mxu0
      %v2636 = vadd.f32 0.0, %v2635
      %v2637 = vpop.f32.mrf.mxu0
      %2638 = vmatprep.mubr.bf16.mxu0 0
      %2639 = vmatmul.mubr.bf16.gmra.mxu0 %v1901
      %v2640 = vpop.f32.mrf.mxu0
      %v2641 = vadd.f32 0.0, %v2640
      %v2642 = vpop.f32.mrf.mxu0
      %v2643 = vpop.f32.mrf.mxu0
      %v2644 = vadd.f32 0.0, %v2643
      %v2645 = vpop.f32.mrf.mxu0
      %2646 = vmatprep.mubr.bf16.mxu0 0
      %2647 = vmatmul.mubr.bf16.gmra.mxu0 %v1904
      %v2648 = vpop.f32.mrf.mxu0
      %v2649 = vadd.f32 0.0, %v2648
      %v2650 = vpop.f32.mrf.mxu0
      %v2651 = vpop.f32.mrf.mxu0
      %v2652 = vadd.f32 0.0, %v2651
      %v2653 = vpop.f32.mrf.mxu0
      %2654 = vmatprep.mubr.bf16.mxu0 0
      %2655 = vmatmul.mubr.bf16.gmra.mxu0 %v1907
      %v2656 = vpop.f32.mrf.mxu0
      %v2657 = vadd.f32 0.0, %v2656
      %v2658 = vpop.f32.mrf.mxu0
      %v2659 = vpop.f32.mrf.mxu0
      %v2660 = vadd.f32 0.0, %v2659
      %v2661 = vpop.f32.mrf.mxu0
      %2662 = vmatprep.mubr.bf16.mxu0 0
      %2663 = vmatmul.mubr.bf16.gmra.mxu0 %v1910
      %v2664 = vpop.f32.mrf.mxu0
      %v2665 = vadd.f32 0.0, %v2664
      %v2666 = vpop.f32.mrf.mxu0
      %v2667 = vpop.f32.mrf.mxu0
      %v2668 = vadd.f32 0.0, %v2667
      %v2669 = vpop.f32.mrf.mxu0
      %2670 = vmatprep.mubr.bf16.mxu0 0
      %2671 = vmatmul.mubr.bf16.gmra.mxu0 %v1913
      %v2672 = vpop.f32.mrf.mxu0
      %v2673 = vadd.f32 0.0, %v2672
      %v2674 = vpop.f32.mrf.mxu0
      %v2675 = vpop.f32.mrf.mxu0
      %v2676 = vadd.f32 0.0, %v2675
      %v2677 = vpop.f32.mrf.mxu0
      %2678 = vmatprep.mubr.bf16.mxu0 0
      %2679 = vmatmul.mubr.bf16.gmra.mxu0 %v1916
      %v2680 = vpop.f32.mrf.mxu0
      %v2681 = vadd.f32 0.0, %v2680
      %v2682 = vpop.f32.mrf.mxu0
      %v2683 = vpop.f32.mrf.mxu0
      %v2684 = vadd.f32 0.0, %v2683
      %v2685 = vpop.f32.mrf.mxu0
      %2686 = vmatprep.mubr.bf16.mxu0 0
      %2687 = vmatmul.mubr.bf16.gmra.mxu0 %v1919
      %v2688 = vpop.f32.mrf.mxu0
      %v2689 = vadd.f32 0.0, %v2688
      %v2690 = vpop.f32.mrf.mxu0
      %v2691 = vpop.f32.mrf.mxu0
      %v2692 = vadd.f32 0.0, %v2691
      %v2693 = vpop.f32.mrf.mxu0
      %2694 = vmatprep.mubr.bf16.mxu0 0
      %2695 = vmatmul.mubr.bf16.gmra.mxu0 %v1922
      %v2696 = vpop.f32.mrf.mxu0
      %v2697 = vadd.f32 0.0, %v2696
      %v2698 = vpop.f32.mrf.mxu0
      %v2699 = vpop.f32.mrf.mxu0
      %v2700 = vadd.f32 0.0, %v2699
      %v2701 = vpop.f32.mrf.mxu0
      %2702 = vmatprep.mubr.bf16.mxu0 0
      %2703 = vmatmul.mubr.bf16.gmra.mxu0 %v1925
      %v2704 = vpop.f32.mrf.mxu0
      %v2705 = vadd.f32 0.0, %v2704
      %v2706 = vpop.f32.mrf.mxu0
      %v2707 = vpop.f32.mrf.mxu0
      %v2708 = vadd.f32 0.0, %v2707
      %v2709 = vpop.f32.mrf.mxu0
      %2710 = vmatprep.mubr.bf16.mxu0 0
      %2711 = vmatmul.mubr.bf16.gmra.mxu0 %v1928
      %v2712 = vpop.f32.mrf.mxu0
      %v2713 = vadd.f32 0.0, %v2712
      %v2714 = vpop.f32.mrf.mxu0
      %v2715 = vpop.f32.mrf.mxu0
      %v2716 = vadd.f32 0.0, %v2715
      %v2717 = vpop.f32.mrf.mxu0
      %2718 = vmatprep.mubr.bf16.mxu0 0
      %2719 = vmatmul.mubr.bf16.gmra.mxu0 %v1931
      %v2720 = vpop.f32.mrf.mxu0
      %v2721 = vadd.f32 0.0, %v2720
      %v2722 = vpop.f32.mrf.mxu0
      %v2723 = vpop.f32.mrf.mxu0
      %v2724 = vadd.f32 0.0, %v2723
      %v2725 = vpop.f32.mrf.mxu0
      %2726 = vmatprep.mubr.bf16.mxu0 0
      %2727 = vmatmul.mubr.bf16.gmra.mxu0 %v1934
      %v2728 = vpop.f32.mrf.mxu0
      %v2729 = vadd.f32 0.0, %v2728
      %v2730 = vpop.f32.mrf.mxu0
      %v2731 = vpop.f32.mrf.mxu0
      %v2732 = vadd.f32 0.0, %v2731
      %v2733 = vpop.f32.mrf.mxu0
      %2734 = vmatprep.mubr.bf16.mxu0 0
      %2735 = vmatmul.mubr.bf16.gmra.mxu0 %v1937
      %v2736 = vpop.f32.mrf.mxu0
      %v2737 = vadd.f32 0.0, %v2736
      %v2738 = vpop.f32.mrf.mxu0
      %v2739 = vpop.f32.mrf.mxu0
      %v2740 = vadd.f32 0.0, %v2739
      %v2741 = vpop.f32.mrf.mxu0
      %2742 = vmatprep.mubr.bf16.mxu0 0
      %2743 = vmatmul.mubr.bf16.gmra.mxu0 %v1940
      %v2744 = vpop.f32.mrf.mxu0
      %v2745 = vadd.f32 0.0, %v2744
      %v2746 = vpop.f32.mrf.mxu0
      %v2747 = vpop.f32.mrf.mxu0
      %v2748 = vadd.f32 0.0, %v2747
      %v2749 = vpop.f32.mrf.mxu0
      %2750 = vmatprep.mubr.bf16.mxu0 0
      %2751 = vmatmul.mubr.bf16.gmra.mxu0 %v1943
      %v2752 = vpop.f32.mrf.mxu0
      %v2753 = vadd.f32 0.0, %v2752
      %v2754 = vpop.f32.mrf.mxu0
      %v2755 = vpop.f32.mrf.mxu0
      %v2756 = vadd.f32 0.0, %v2755
      %v2757 = vpop.f32.mrf.mxu0
      %2758 = vmatprep.mubr.bf16.mxu0 0
      %2759 = vmatmul.mubr.bf16.gmra.mxu0 %v1946
      %v2760 = vpop.f32.mrf.mxu0
      %v2761 = vadd.f32 0.0, %v2760
      %v2762 = vpop.f32.mrf.mxu0
      %v2763 = vpop.f32.mrf.mxu0
      %v2764 = vadd.f32 0.0, %v2763
      %v2765 = vpop.f32.mrf.mxu0
      %2766 = vmatprep.mubr.bf16.mxu0 0
      %2767 = vmatmul.mubr.bf16.gmra.mxu0 %v1949
      %v2768 = vpop.f32.mrf.mxu0
      %v2769 = vadd.f32 0.0, %v2768
      %v2770 = vpop.f32.mrf.mxu0
      %v2771 = vpop.f32.mrf.mxu0
      %v2772 = vadd.f32 0.0, %v2771
      %v2773 = vpop.f32.mrf.mxu0
      %2774 = vmatprep.mubr.bf16.mxu0 0
      %2775 = vmatmul.mubr.bf16.gmra.mxu0 %v1952
      %v2776 = vpop.f32.mrf.mxu0
      %v2777 = vadd.f32 0.0, %v2776
      %v2778 = vpop.f32.mrf.mxu0
      %v2779 = vpop.f32.mrf.mxu0
      %v2780 = vadd.f32 0.0, %v2779
      %v2781 = vpop.f32.mrf.mxu0
      %2782 = vmatprep.mubr.bf16.mxu0 0
      %2783 = vmatmul.mubr.bf16.gmra.mxu0 %v1955
      %v2784 = vpop.f32.mrf.mxu0
      %v2785 = vadd.f32 0.0, %v2784
      %v2786 = vpop.f32.mrf.mxu0
      %v2787 = vpop.f32.mrf.mxu0
      %v2788 = vadd.f32 0.0, %v2787
      %v2789 = vpop.f32.mrf.mxu0
      %2790 = vmatprep.mubr.bf16.mxu0 0
      %2791 = vmatmul.mubr.bf16.gmra.mxu0 %v1958
      %v2792 = vpop.f32.mrf.mxu0
      %v2793 = vadd.f32 0.0, %v2792
      %v2794 = vpop.f32.mrf.mxu0
      %v2795 = vpop.f32.mrf.mxu0
      %v2796 = vadd.f32 0.0, %v2795
      %v2797 = vpop.f32.mrf.mxu0
      %2798 = vmatprep.mubr.bf16.mxu0 0
      %2799 = vmatmul.mubr.bf16.gmra.mxu0 %v1961
      %v2800 = vpop.f32.mrf.mxu0
      %v2801 = vadd.f32 0.0, %v2800
      %v2802 = vpop.f32.mrf.mxu0
      %v2803 = vpop.f32.mrf.mxu0
      %v2804 = vadd.f32 0.0, %v2803
      %v2805 = vpop.f32.mrf.mxu0
      %2806 = vmatprep.mubr.bf16.mxu0 0
      %2807 = vmatmul.mubr.bf16.gmra.mxu0 %v1964
      %v2808 = vpop.f32.mrf.mxu0
      %v2809 = vadd.f32 0.0, %v2808
      %v2810 = vpop.f32.mrf.mxu0
      %v2811 = vpop.f32.mrf.mxu0
      %v2812 = vadd.f32 0.0, %v2811
      %v2813 = vpop.f32.mrf.mxu0
      %2814 = vmatprep.mubr.bf16.mxu0 0
      %2815 = vmatmul.mubr.bf16.gmra.mxu0 %v1967
      %v2816 = vpop.f32.mrf.mxu0
      %v2817 = vadd.f32 0.0, %v2816
      %v2818 = vpop.f32.mrf.mxu0
      %v2819 = vpop.f32.mrf.mxu0
      %v2820 = vadd.f32 0.0, %v2819
      %v2821 = vpop.f32.mrf.mxu0
      %2822 = vmatprep.mubr.bf16.mxu0 0
      %2823 = vmatmul.mubr.bf16.gmra.mxu0 %v1970
      %v2824 = vpop.f32.mrf.mxu0
      %v2825 = vadd.f32 0.0, %v2824
      %v2826 = vpop.f32.mrf.mxu0
      %v2827 = vpop.f32.mrf.mxu0
      %v2828 = vadd.f32 0.0, %v2827
      %v2829 = vpop.f32.mrf.mxu0
      %2830 = vmatprep.mubr.bf16.mxu0 0
      %2831 = vmatmul.mubr.bf16.gmra.mxu0 %v1973
      %v2832 = vpop.f32.mrf.mxu0
      %v2833 = vadd.f32 0.0, %v2832
      %v2834 = vpop.f32.mrf.mxu0
      %v2835 = vpop.f32.mrf.mxu0
      %v2836 = vadd.f32 0.0, %v2835
      %v2837 = vpop.f32.mrf.mxu0
      %2838 = vmatprep.mubr.bf16.mxu0 0
      %2839 = vmatmul.mubr.bf16.gmra.mxu0 %v1976
      %v2840 = vpop.f32.mrf.mxu0
      %v2841 = vadd.f32 0.0, %v2840
      %v2842 = vpop.f32.mrf.mxu0
      %v2843 = vpop.f32.mrf.mxu0
      %v2844 = vadd.f32 0.0, %v2843
      %v2845 = vpop.f32.mrf.mxu0
      %2846 = vmatprep.mubr.bf16.mxu0 0
      %2847 = vmatmul.mubr.bf16.gmra.mxu0 %v1979
      %v2848 = vpop.f32.mrf.mxu0
      %v2849 = vadd.f32 0.0, %v2848
      %v2850 = vpop.f32.mrf.mxu0
      %v2851 = vpop.f32.mrf.mxu0
      %v2852 = vadd.f32 0.0, %v2851
      %v2853 = vpop.f32.mrf.mxu0
      %2854 = vmatprep.mubr.bf16.mxu0 0
      %2855 = vmatmul.mubr.bf16.gmra.mxu0 %v1982
      %v2856 = vpop.f32.mrf.mxu0
      %v2857 = vadd.f32 0.0, %v2856
      %v2858 = vpop.f32.mrf.mxu0
      %v2859 = vpop.f32.mrf.mxu0
      %v2860 = vadd.f32 0.0, %v2859
      %v2861 = vpop.f32.mrf.mxu0
      %2862 = vmatprep.mubr.bf16.mxu0 0
      %2863 = vmatmul.mubr.bf16.gmra.mxu0 %v1985
      %v2864 = vpop.f32.mrf.mxu0
      %v2865 = vadd.f32 0.0, %v2864
      %v2866 = vpop.f32.mrf.mxu0
      %v2867 = vpop.f32.mrf.mxu0
      %v2868 = vadd.f32 0.0, %v2867
      %v2869 = vpop.f32.mrf.mxu0
      %2870 = vmatprep.mubr.bf16.mxu0 0
      %2871 = vmatmul.mubr.bf16.gmra.mxu0 %v1988
      %v2872 = vpop.f32.mrf.mxu0
      %v2873 = vadd.f32 0.0, %v2872
      %v2874 = vpop.f32.mrf.mxu0
      %v2875 = vpop.f32.mrf.mxu0
      %v2876 = vadd.f32 0.0, %v2875
      %v2877 = vpop.f32.mrf.mxu0
      %2878 = vmatprep.mubr.bf16.mxu0 0
      %2879 = vmatmul.mubr.bf16.gmra.mxu0 %v1991
      %v2880 = vpop.f32.mrf.mxu0
      %v2881 = vadd.f32 0.0, %v2880
      %v2882 = vpop.f32.mrf.mxu0
      %v2883 = vpop.f32.mrf.mxu0
      %v2884 = vadd.f32 0.0, %v2883
      %v2885 = vpop.f32.mrf.mxu0
      %2886 = vmatprep.mubr.bf16.mxu0 0
      %2887 = vmatmul.mubr.bf16.gmra.mxu0 %v1994
      %v2888 = vpop.f32.mrf.mxu0
      %v2889 = vadd.f32 0.0, %v2888
      %v2890 = vpop.f32.mrf.mxu0
      %v2891 = vpop.f32.mrf.mxu0
      %v2892 = vadd.f32 0.0, %v2891
      %v2893 = vpop.f32.mrf.mxu0
      %2894 = vmatprep.mubr.bf16.mxu0 0
      %2895 = vmatmul.mubr.bf16.gmra.mxu0 %v1997
      %v2896 = vpop.f32.mrf.mxu0
      %v2897 = vadd.f32 0.0, %v2896
      %v2898 = vpop.f32.mrf.mxu0
      %v2899 = vpop.f32.mrf.mxu0
      %v2900 = vadd.f32 0.0, %v2899
      %v2901 = vpop.f32.mrf.mxu0
      %2902 = vmatprep.mubr.bf16.mxu0 0
      %2903 = vmatmul.mubr.bf16.gmra.mxu0 %v2000
      %v2904 = vpop.f32.mrf.mxu0
      %v2905 = vadd.f32 0.0, %v2904
      %v2906 = vpop.f32.mrf.mxu0
      %v2907 = vpop.f32.mrf.mxu0
      %v2908 = vadd.f32 0.0, %v2907
      %v2909 = vpop.f32.mrf.mxu0
      %2910 = vmatprep.mubr.bf16.mxu0 0
      %2911 = vmatmul.mubr.bf16.gmra.mxu0 %v2003
      %v2912 = vpop.f32.mrf.mxu0
      %v2913 = vadd.f32 0.0, %v2912
      %v2914 = vpop.f32.mrf.mxu0
      %v2915 = vpop.f32.mrf.mxu0
      %v2916 = vadd.f32 0.0, %v2915
      %v2917 = vpop.f32.mrf.mxu0
      %2918 = vmatprep.mubr.bf16.mxu0 0
      %2919 = vmatmul.mubr.bf16.gmra.mxu0 %v2006
      %v2920 = vpop.f32.mrf.mxu0
      %v2921 = vadd.f32 0.0, %v2920
      %v2922 = vpop.f32.mrf.mxu0
      %v2923 = vpop.f32.mrf.mxu0
      %v2924 = vadd.f32 0.0, %v2923
      %v2925 = vpop.f32.mrf.mxu0
      %2926 = vmatprep.mubr.bf16.mxu0 0
      %2927 = vmatmul.mubr.bf16.gmra.mxu0 %v2009
      %v2928 = vpop.f32.mrf.mxu0
      %v2929 = vadd.f32 0.0, %v2928
      %v2930 = vpop.f32.mrf.mxu0
      %v2931 = vpop.f32.mrf.mxu0
      %v2932 = vadd.f32 0.0, %v2931
      %v2933 = vpop.f32.mrf.mxu0
      %2934 = vmatprep.mubr.bf16.mxu0 0
      %2935 = vmatmul.mubr.bf16.gmra.mxu0 %v2012
      %v2936 = vpop.f32.mrf.mxu0
      %v2937 = vadd.f32 0.0, %v2936
      %v2938 = vpop.f32.mrf.mxu0
      %v2939 = vpop.f32.mrf.mxu0
      %v2940 = vadd.f32 0.0, %v2939
      %v2941 = vpop.f32.mrf.mxu0
      %2942 = vmatprep.mubr.bf16.mxu0 0
      %2943 = vmatmul.mubr.bf16.gmra.mxu0 %v2015
      %v2944 = vpop.f32.mrf.mxu0
      %v2945 = vadd.f32 0.0, %v2944
      %v2946 = vpop.f32.mrf.mxu0
      %v2947 = vpop.f32.mrf.mxu0
      %v2948 = vadd.f32 0.0, %v2947
      %v2949 = vpop.f32.mrf.mxu0
      %2950 = vmatprep.mubr.bf16.mxu0 0
      %2951 = vmatmul.mubr.bf16.gmra.mxu0 %v2018
      %v2952 = vpop.f32.mrf.mxu0
      %v2953 = vadd.f32 0.0, %v2952
      %v2954 = vpop.f32.mrf.mxu0
      %v2955 = vpop.f32.mrf.mxu0
      %v2956 = vadd.f32 0.0, %v2955
      %v2957 = vpop.f32.mrf.mxu0
      %2958 = vmatprep.mubr.bf16.mxu0 0
      %2959 = vmatmul.mubr.bf16.gmra.mxu0 %v2021
      %v2960 = vpop.f32.mrf.mxu0
      %v2961 = vadd.f32 0.0, %v2960
      %v2962 = vpop.f32.mrf.mxu0
      %v2963 = vpop.f32.mrf.mxu0
      %v2964 = vadd.f32 0.0, %v2963
      %v2965 = vpop.f32.mrf.mxu0
      %2966 = vmatprep.mubr.bf16.mxu0 0
      %2967 = vmatmul.mubr.bf16.gmra.mxu0 %v2024
      %v2968 = vpop.f32.mrf.mxu0
      %v2969 = vadd.f32 0.0, %v2968
      %v2970 = vpop.f32.mrf.mxu0
      %v2971 = vpop.f32.mrf.mxu0
      %v2972 = vadd.f32 0.0, %v2971
      %v2973 = vpop.f32.mrf.mxu0
      %2974 = vmatprep.mubr.bf16.mxu0 0
      %2975 = vmatmul.mubr.bf16.gmra.mxu0 %v2027
      %v2976 = vpop.f32.mrf.mxu0
      %v2977 = vadd.f32 0.0, %v2976
      %v2978 = vpop.f32.mrf.mxu0
      %v2979 = vpop.f32.mrf.mxu0
      %v2980 = vadd.f32 0.0, %v2979
      %v2981 = vpop.f32.mrf.mxu0
      %2982 = vmatprep.mubr.bf16.mxu0 0
      %2983 = vmatmul.mubr.bf16.gmra.mxu0 %v2030
      %v2984 = vpop.f32.mrf.mxu0
      %v2985 = vadd.f32 0.0, %v2984
      %v2986 = vpop.f32.mrf.mxu0
      %v2987 = vpop.f32.mrf.mxu0
      %v2988 = vadd.f32 0.0, %v2987
      %v2989 = vpop.f32.mrf.mxu0
      %2990 = vmatprep.mubr.bf16.mxu0 0
      %2991 = vmatmul.mubr.bf16.gmra.mxu0 %v2033
      %v2992 = vpop.f32.mrf.mxu0
      %v2993 = vadd.f32 0.0, %v2992
      %v2994 = vpop.f32.mrf.mxu0
      %v2995 = vpop.f32.mrf.mxu0
      %v2996 = vadd.f32 0.0, %v2995
      %v2997 = vpop.f32.mrf.mxu0
      %2998 = vmatprep.mubr.bf16.mxu0 0
      %2999 = vmatmul.mubr.bf16.gmra.mxu0 %v2036
      %v3000 = vpop.f32.mrf.mxu0
      %v3001 = vadd.f32 0.0, %v3000
      %v3002 = vpop.f32.mrf.mxu0
      %v3003 = vpop.f32.mrf.mxu0
      %v3004 = vadd.f32 0.0, %v3003
      %v3005 = vpop.f32.mrf.mxu0
      %3006 = vmatprep.mubr.bf16.mxu0 0
      %3007 = vmatmul.mubr.bf16.gmra.mxu0 %v2039
      %v3008 = vpop.f32.mrf.mxu0
      %v3009 = vadd.f32 0.0, %v3008
      %v3010 = vpop.f32.mrf.mxu0
      %v3011 = vpop.f32.mrf.mxu0
      %v3012 = vadd.f32 0.0, %v3011
      %v3013 = vpop.f32.mrf.mxu0
      %3014 = vmatprep.mubr.bf16.mxu0 0
      %3015 = vmatmul.mubr.bf16.gmra.mxu0 %v2042
      %v3016 = vpop.f32.mrf.mxu0
      %v3017 = vadd.f32 0.0, %v3016
      %v3018 = vpop.f32.mrf.mxu0
      %v3019 = vpop.f32.mrf.mxu0
      %v3020 = vadd.f32 0.0, %v3019
      %v3021 = vpop.f32.mrf.mxu0
      %3022 = vmatprep.mubr.bf16.mxu0 0
      %3023 = vmatmul.mubr.bf16.gmra.mxu0 %v2045
      %v3024 = vpop.f32.mrf.mxu0
      %v3025 = vadd.f32 0.0, %v3024
      %v3026 = vpop.f32.mrf.mxu0
      %v3027 = vpop.f32.mrf.mxu0
      %v3028 = vadd.f32 0.0, %v3027
      %v3029 = vpop.f32.mrf.mxu0
      %3030 = vmatprep.mubr.bf16.mxu0 0
      %3031 = vmatmul.mubr.bf16.gmra.mxu0 %v2048
      %v3032 = vpop.f32.mrf.mxu0
      %v3033 = vadd.f32 0.0, %v3032
      %v3034 = vpop.f32.mrf.mxu0
      %v3035 = vpop.f32.mrf.mxu0
      %v3036 = vadd.f32 0.0, %v3035
      %v3037 = vpop.f32.mrf.mxu0
      %3038 = vmatprep.mubr.bf16.mxu0 0
      %3039 = vmatmul.mubr.bf16.gmra.mxu0 %v2051
      %v3040 = vpop.f32.mrf.mxu0
      %v3041 = vadd.f32 0.0, %v3040
      %v3042 = vpop.f32.mrf.mxu0
      %v3043 = vpop.f32.mrf.mxu0
      %v3044 = vadd.f32 0.0, %v3043
      %v3045 = vpop.f32.mrf.mxu0
      %3046 = vmatprep.mubr.bf16.mxu0 0
      %3047 = vmatmul.mubr.bf16.gmra.mxu0 %v2054
      %v3048 = vpop.f32.mrf.mxu0
      %v3049 = vadd.f32 0.0, %v3048
      %v3050 = vpop.f32.mrf.mxu0
      %v3051 = vpop.f32.mrf.mxu0
      %v3052 = vadd.f32 0.0, %v3051
      %v3053 = vpop.f32.mrf.mxu0
      %3054 = vmatprep.mubr.bf16.mxu0 0
      %3055 = vmatmul.mubr.bf16.gmra.mxu0 %v2057
      %v3056 = vpop.f32.mrf.mxu0
      %v3057 = vadd.f32 0.0, %v3056
      %v3058 = vpop.f32.mrf.mxu0
      %v3059 = vpop.f32.mrf.mxu0
      %v3060 = vadd.f32 0.0, %v3059
      %v3061 = vpop.f32.mrf.mxu0
      %3062 = vmatprep.mubr.bf16.mxu0 0
      %3063 = vmatmul.mubr.bf16.gmra.mxu0 %v2060
      %v3064 = vpop.f32.mrf.mxu0
      %v3065 = vadd.f32 0.0, %v3064
      %v3066 = vpop.f32.mrf.mxu0
      %v3067 = vpop.f32.mrf.mxu0
      %v3068 = vadd.f32 0.0, %v3067
      %v3069 = vpop.f32.mrf.mxu0
      %3070 = vmatprep.mubr.bf16.mxu0 0
      %3071 = vmatmul.mubr.bf16.gmra.mxu0 %v2063
      %v3072 = vpop.f32.mrf.mxu0
      %v3073 = vadd.f32 0.0, %v3072
      %v3074 = vpop.f32.mrf.mxu0
      %v3075 = vpop.f32.mrf.mxu0
      %v3076 = vadd.f32 0.0, %v3075
      %v3077 = vpop.f32.mrf.mxu0
      %3078 = vmatprep.mubr.bf16.mxu0 0
      %3079 = vmatmul.mubr.bf16.gmra.mxu0 %v2066
      %v3080 = vpop.f32.mrf.mxu0
      %v3081 = vadd.f32 0.0, %v3080
      %v3082 = vpop.f32.mrf.mxu0
      %v3083 = vpop.f32.mrf.mxu0
      %v3084 = vadd.f32 0.0, %v3083
      %v3085 = vpop.f32.mrf.mxu0
      %3086 = vmatprep.mubr.bf16.mxu0 0
      %3087 = vmatmul.mubr.bf16.gmra.mxu0 %v2069
      %v3088 = vpop.f32.mrf.mxu0
      %v3089 = vadd.f32 0.0, %v3088
      %v3090 = vpop.f32.mrf.mxu0
      %v3091 = vpop.f32.mrf.mxu0
      %v3092 = vadd.f32 0.0, %v3091
      %v3093 = vpop.f32.mrf.mxu0
      %3094 = vmatprep.mubr.bf16.mxu0 0
      %3095 = vmatmul.mubr.bf16.gmra.mxu0 %v2072
      %v3096 = vpop.f32.mrf.mxu0
      %v3097 = vadd.f32 0.0, %v3096
      %v3098 = vpop.f32.mrf.mxu0
      %v3099 = vpop.f32.mrf.mxu0
      %v3100 = vadd.f32 0.0, %v3099
      %v3101 = vpop.f32.mrf.mxu0
      %3102 = vmatprep.mubr.bf16.mxu0 0
      %3103 = vmatmul.mubr.bf16.gmra.mxu0 %v2075
      %v3104 = vpop.f32.mrf.mxu0
      %v3105 = vadd.f32 0.0, %v3104
      %v3106 = vpop.f32.mrf.mxu0
      %v3107 = vpop.f32.mrf.mxu0
      %v3108 = vadd.f32 0.0, %v3107
      %v3109 = vpop.f32.mrf.mxu0
      %3110 = vmatprep.mubr.bf16.mxu0 0
      %3111 = vmatmul.mubr.bf16.gmra.mxu0 %v2078
      %v3112 = vpop.f32.mrf.mxu0
      %v3113 = vadd.f32 0.0, %v3112
      %v3114 = vpop.f32.mrf.mxu0
      %v3115 = vpop.f32.mrf.mxu0
      %v3116 = vadd.f32 0.0, %v3115
      %v3117 = vpop.f32.mrf.mxu0
      %3118 = vmatprep.mubr.bf16.mxu0 0
      %3119 = vmatmul.mubr.bf16.gmra.mxu0 %v2081
      %v3120 = vpop.f32.mrf.mxu0
      %v3121 = vadd.f32 0.0, %v3120
      %v3122 = vpop.f32.mrf.mxu0
      %v3123 = vpop.f32.mrf.mxu0
      %v3124 = vadd.f32 0.0, %v3123
      %v3125 = vpop.f32.mrf.mxu0
      %3126 = vmatprep.mubr.bf16.mxu0 0
      %3127 = vmatmul.mubr.bf16.gmra.mxu0 %v2084
      %v3128 = vpop.f32.mrf.mxu0
      %v3129 = vadd.f32 0.0, %v3128
      %v3130 = vpop.f32.mrf.mxu0
      %v3131 = vpop.f32.mrf.mxu0
      %v3132 = vadd.f32 0.0, %v3131
      %v3133 = vpop.f32.mrf.mxu0
      %3134 = vmatprep.mubr.bf16.mxu0 0
      %3135 = vmatmul.mubr.bf16.gmra.mxu0 %v2087
      %v3136 = vpop.f32.mrf.mxu0
      %v3137 = vadd.f32 0.0, %v3136
      %v3138 = vpop.f32.mrf.mxu0
      %v3139 = vpop.f32.mrf.mxu0
      %v3140 = vadd.f32 0.0, %v3139
      %v3141 = vpop.f32.mrf.mxu0
      %3142 = vmatprep.mubr.bf16.mxu0 0
      %3143 = vmatmul.mubr.bf16.gmra.mxu0 %v2090
      %v3144 = vpop.f32.mrf.mxu0
      %v3145 = vadd.f32 0.0, %v3144
      %v3146 = vpop.f32.mrf.mxu0
      %v3147 = vpop.f32.mrf.mxu0
      %v3148 = vadd.f32 0.0, %v3147
      %v3149 = vpop.f32.mrf.mxu0
      %3150 = vmatprep.mubr.bf16.mxu0 0
      %3151 = vmatmul.mubr.bf16.gmra.mxu0 %v2093
      %v3152 = vpop.f32.mrf.mxu0
      %v3153 = vadd.f32 0.0, %v3152
      %v3154 = vpop.f32.mrf.mxu0
      %v3155 = vpop.f32.mrf.mxu0
      %v3156 = vadd.f32 0.0, %v3155
      %v3157 = vpop.f32.mrf.mxu0
      %3158 = vdwg.mxu0
      %v3159 = vadd.f32 %v543, %v2137
      %v3160 = vadd.f32 %v544, %v2140
      %v3161 = vadd.f32 %v545, %v2145
      %v3162 = vadd.f32 %v546, %v2148
      %v3163 = vadd.f32 %v547, %v2153
      %v3164 = vadd.f32 %v548, %v2156
      %v3165 = vadd.f32 %v549, %v2161
      %v3166 = vadd.f32 %v550, %v2164
      %v3167 = vadd.f32 %v551, %v2169
      %v3168 = vadd.f32 %v552, %v2172
      %v3169 = vadd.f32 %v553, %v2177
      %v3170 = vadd.f32 %v554, %v2180
      %v3171 = vadd.f32 %v555, %v2185
      %v3172 = vadd.f32 %v556, %v2188
      %v3173 = vadd.f32 %v557, %v2193
      %v3174 = vadd.f32 %v558, %v2196
      %v3175 = vadd.f32 %v559, %v2201
      %v3176 = vadd.f32 %v560, %v2204
      %v3177 = vadd.f32 %v561, %v2209
      %v3178 = vadd.f32 %v562, %v2212
      %v3179 = vadd.f32 %v563, %v2217
      %v3180 = vadd.f32 %v564, %v2220
      %v3181 = vadd.f32 %v565, %v2225
      %v3182 = vadd.f32 %v566, %v2228
      %v3183 = vadd.f32 %v567, %v2233
      %v3184 = vadd.f32 %v568, %v2236
      %v3185 = vadd.f32 %v569, %v2241
      %v3186 = vadd.f32 %v570, %v2244
      %v3187 = vadd.f32 %v571, %v2249
      %v3188 = vadd.f32 %v572, %v2252
      %v3189 = vadd.f32 %v573, %v2257
      %v3190 = vadd.f32 %v574, %v2260
      %v3191 = vadd.f32 %v575, %v2265
      %v3192 = vadd.f32 %v576, %v2268
      %v3193 = vadd.f32 %v577, %v2273
      %v3194 = vadd.f32 %v578, %v2276
      %v3195 = vadd.f32 %v579, %v2281
      %v3196 = vadd.f32 %v580, %v2284
      %v3197 = vadd.f32 %v581, %v2289
      %v3198 = vadd.f32 %v582, %v2292
      %v3199 = vadd.f32 %v583, %v2297
      %v3200 = vadd.f32 %v584, %v2300
      %v3201 = vadd.f32 %v585, %v2305
      %v3202 = vadd.f32 %v586, %v2308
      %v3203 = vadd.f32 %v587, %v2313
      %v3204 = vadd.f32 %v588, %v2316
      %v3205 = vadd.f32 %v589, %v2321
      %v3206 = vadd.f32 %v590, %v2324
      %v3207 = vadd.f32 %v591, %v2329
      %v3208 = vadd.f32 %v592, %v2332
      %v3209 = vadd.f32 %v593, %v2337
      %v3210 = vadd.f32 %v594, %v2340
      %v3211 = vadd.f32 %v595, %v2345
      %v3212 = vadd.f32 %v596, %v2348
      %v3213 = vadd.f32 %v597, %v2353
      %v3214 = vadd.f32 %v598, %v2356
      %v3215 = vadd.f32 %v599, %v2361
      %v3216 = vadd.f32 %v600, %v2364
      %v3217 = vadd.f32 %v601, %v2369
      %v3218 = vadd.f32 %v602, %v2372
      %v3219 = vadd.f32 %v603, %v2377
      %v3220 = vadd.f32 %v604, %v2380
      %v3221 = vadd.f32 %v605, %v2385
      %v3222 = vadd.f32 %v606, %v2388
      %v3223 = vadd.f32 %v607, %v2393
      %v3224 = vadd.f32 %v608, %v2396
      %v3225 = vadd.f32 %v609, %v2401
      %v3226 = vadd.f32 %v610, %v2404
      %v3227 = vadd.f32 %v611, %v2409
      %v3228 = vadd.f32 %v612, %v2412
      %v3229 = vadd.f32 %v613, %v2417
      %v3230 = vadd.f32 %v614, %v2420
      %v3231 = vadd.f32 %v615, %v2425
      %v3232 = vadd.f32 %v616, %v2428
      %v3233 = vadd.f32 %v617, %v2433
      %v3234 = vadd.f32 %v618, %v2436
      %v3235 = vadd.f32 %v619, %v2441
      %v3236 = vadd.f32 %v620, %v2444
      %v3237 = vadd.f32 %v621, %v2449
      %v3238 = vadd.f32 %v622, %v2452
      %v3239 = vadd.f32 %v623, %v2457
      %v3240 = vadd.f32 %v624, %v2460
      %v3241 = vadd.f32 %v625, %v2465
      %v3242 = vadd.f32 %v626, %v2468
      %v3243 = vadd.f32 %v627, %v2473
      %v3244 = vadd.f32 %v628, %v2476
      %v3245 = vadd.f32 %v629, %v2481
      %v3246 = vadd.f32 %v630, %v2484
      %v3247 = vadd.f32 %v631, %v2489
      %v3248 = vadd.f32 %v632, %v2492
      %v3249 = vadd.f32 %v633, %v2497
      %v3250 = vadd.f32 %v634, %v2500
      %v3251 = vadd.f32 %v635, %v2505
      %v3252 = vadd.f32 %v636, %v2508
      %v3253 = vadd.f32 %v637, %v2513
      %v3254 = vadd.f32 %v638, %v2516
      %v3255 = vadd.f32 %v639, %v2521
      %v3256 = vadd.f32 %v640, %v2524
      %v3257 = vadd.f32 %v641, %v2529
      %v3258 = vadd.f32 %v642, %v2532
      %v3259 = vadd.f32 %v643, %v2537
      %v3260 = vadd.f32 %v644, %v2540
      %v3261 = vadd.f32 %v645, %v2545
      %v3262 = vadd.f32 %v646, %v2548
      %v3263 = vadd.f32 %v647, %v2553
      %v3264 = vadd.f32 %v648, %v2556
      %v3265 = vadd.f32 %v649, %v2561
      %v3266 = vadd.f32 %v650, %v2564
      %v3267 = vadd.f32 %v651, %v2569
      %v3268 = vadd.f32 %v652, %v2572
      %v3269 = vadd.f32 %v653, %v2577
      %v3270 = vadd.f32 %v654, %v2580
      %v3271 = vadd.f32 %v655, %v2585
      %v3272 = vadd.f32 %v656, %v2588
      %v3273 = vadd.f32 %v657, %v2593
      %v3274 = vadd.f32 %v658, %v2596
      %v3275 = vadd.f32 %v659, %v2601
      %v3276 = vadd.f32 %v660, %v2604
      %v3277 = vadd.f32 %v661, %v2609
      %v3278 = vadd.f32 %v662, %v2612
      %v3279 = vadd.f32 %v663, %v2617
      %v3280 = vadd.f32 %v664, %v2620
      %v3281 = vadd.f32 %v665, %v2625
      %v3282 = vadd.f32 %v666, %v2628
      %v3283 = vadd.f32 %v667, %v2633
      %v3284 = vadd.f32 %v668, %v2636
      %v3285 = vadd.f32 %v669, %v2641
      %v3286 = vadd.f32 %v670, %v2644
      %v3287 = vadd.f32 %v671, %v2649
      %v3288 = vadd.f32 %v672, %v2652
      %v3289 = vadd.f32 %v673, %v2657
      %v3290 = vadd.f32 %v674, %v2660
      %v3291 = vadd.f32 %v675, %v2665
      %v3292 = vadd.f32 %v676, %v2668
      %v3293 = vadd.f32 %v677, %v2673
      %v3294 = vadd.f32 %v678, %v2676
      %v3295 = vadd.f32 %v679, %v2681
      %v3296 = vadd.f32 %v680, %v2684
      %v3297 = vadd.f32 %v681, %v2689
      %v3298 = vadd.f32 %v682, %v2692
      %v3299 = vadd.f32 %v683, %v2697
      %v3300 = vadd.f32 %v684, %v2700
      %v3301 = vadd.f32 %v685, %v2705
      %v3302 = vadd.f32 %v686, %v2708
      %v3303 = vadd.f32 %v687, %v2713
      %v3304 = vadd.f32 %v688, %v2716
      %v3305 = vadd.f32 %v689, %v2721
      %v3306 = vadd.f32 %v690, %v2724
      %v3307 = vadd.f32 %v691, %v2729
      %v3308 = vadd.f32 %v692, %v2732
      %v3309 = vadd.f32 %v693, %v2737
      %v3310 = vadd.f32 %v694, %v2740
      %v3311 = vadd.f32 %v695, %v2745
      %v3312 = vadd.f32 %v696, %v2748
      %v3313 = vadd.f32 %v697, %v2753
      %v3314 = vadd.f32 %v698, %v2756
      %v3315 = vadd.f32 %v699, %v2761
      %v3316 = vadd.f32 %v700, %v2764
      %v3317 = vadd.f32 %v701, %v2769
      %v3318 = vadd.f32 %v702, %v2772
      %v3319 = vadd.f32 %v703, %v2777
      %v3320 = vadd.f32 %v704, %v2780
      %v3321 = vadd.f32 %v705, %v2785
      %v3322 = vadd.f32 %v706, %v2788
      %v3323 = vadd.f32 %v707, %v2793
      %v3324 = vadd.f32 %v708, %v2796
      %v3325 = vadd.f32 %v709, %v2801
      %v3326 = vadd.f32 %v710, %v2804
      %v3327 = vadd.f32 %v711, %v2809
      %v3328 = vadd.f32 %v712, %v2812
      %v3329 = vadd.f32 %v713, %v2817
      %v3330 = vadd.f32 %v714, %v2820
      %v3331 = vadd.f32 %v715, %v2825
      %v3332 = vadd.f32 %v716, %v2828
      %v3333 = vadd.f32 %v717, %v2833
      %v3334 = vadd.f32 %v718, %v2836
      %v3335 = vadd.f32 %v719, %v2841
      %v3336 = vadd.f32 %v720, %v2844
      %v3337 = vadd.f32 %v721, %v2849
      %v3338 = vadd.f32 %v722, %v2852
      %v3339 = vadd.f32 %v723, %v2857
      %v3340 = vadd.f32 %v724, %v2860
      %v3341 = vadd.f32 %v725, %v2865
      %v3342 = vadd.f32 %v726, %v2868
      %v3343 = vadd.f32 %v727, %v2873
      %v3344 = vadd.f32 %v728, %v2876
      %v3345 = vadd.f32 %v729, %v2881
      %v3346 = vadd.f32 %v730, %v2884
      %v3347 = vadd.f32 %v731, %v2889
      %v3348 = vadd.f32 %v732, %v2892
      %v3349 = vadd.f32 %v733, %v2897
      %v3350 = vadd.f32 %v734, %v2900
      %v3351 = vadd.f32 %v735, %v2905
      %v3352 = vadd.f32 %v736, %v2908
      %v3353 = vadd.f32 %v737, %v2913
      %v3354 = vadd.f32 %v738, %v2916
      %v3355 = vadd.f32 %v739, %v2921
      %v3356 = vadd.f32 %v740, %v2924
      %v3357 = vadd.f32 %v741, %v2929
      %v3358 = vadd.f32 %v742, %v2932
      %v3359 = vadd.f32 %v743, %v2937
      %v3360 = vadd.f32 %v744, %v2940
      %v3361 = vadd.f32 %v745, %v2945
      %v3362 = vadd.f32 %v746, %v2948
      %v3363 = vadd.f32 %v747, %v2953
      %v3364 = vadd.f32 %v748, %v2956
      %v3365 = vadd.f32 %v749, %v2961
      %v3366 = vadd.f32 %v750, %v2964
      %v3367 = vadd.f32 %v751, %v2969
      %v3368 = vadd.f32 %v752, %v2972
      %v3369 = vadd.f32 %v753, %v2977
      %v3370 = vadd.f32 %v754, %v2980
      %v3371 = vadd.f32 %v755, %v2985
      %v3372 = vadd.f32 %v756, %v2988
      %v3373 = vadd.f32 %v757, %v2993
      %v3374 = vadd.f32 %v758, %v2996
      %v3375 = vadd.f32 %v759, %v3001
      %v3376 = vadd.f32 %v760, %v3004
      %v3377 = vadd.f32 %v761, %v3009
      %v3378 = vadd.f32 %v762, %v3012
      %v3379 = vadd.f32 %v763, %v3017
      %v3380 = vadd.f32 %v764, %v3020
      %v3381 = vadd.f32 %v765, %v3025
      %v3382 = vadd.f32 %v766, %v3028
      %v3383 = vadd.f32 %v767, %v3033
      %v3384 = vadd.f32 %v768, %v3036
      %v3385 = vadd.f32 %v769, %v3041
      %v3386 = vadd.f32 %v770, %v3044
      %v3387 = vadd.f32 %v771, %v3049
      %v3388 = vadd.f32 %v772, %v3052
      %v3389 = vadd.f32 %v773, %v3057
      %v3390 = vadd.f32 %v774, %v3060
      %v3391 = vadd.f32 %v775, %v3065
      %v3392 = vadd.f32 %v776, %v3068
      %v3393 = vadd.f32 %v777, %v3073
      %v3394 = vadd.f32 %v778, %v3076
      %v3395 = vadd.f32 %v779, %v3081
      %v3396 = vadd.f32 %v780, %v3084
      %v3397 = vadd.f32 %v781, %v3089
      %v3398 = vadd.f32 %v782, %v3092
      %v3399 = vadd.f32 %v783, %v3097
      %v3400 = vadd.f32 %v784, %v3100
      %v3401 = vadd.f32 %v785, %v3105
      %v3402 = vadd.f32 %v786, %v3108
      %v3403 = vadd.f32 %v787, %v3113
      %v3404 = vadd.f32 %v788, %v3116
      %v3405 = vadd.f32 %v789, %v3121
      %v3406 = vadd.f32 %v790, %v3124
      %v3407 = vadd.f32 %v791, %v3129
      %v3408 = vadd.f32 %v792, %v3132
      %v3409 = vadd.f32 %v793, %v3137
      %v3410 = vadd.f32 %v794, %v3140
      %v3411 = vadd.f32 %v795, %v3145
      %v3412 = vadd.f32 %v796, %v3148
      %v3413 = vadd.f32 %v797, %v3153
      %v3414 = vadd.f32 %v798, %v3156
      %vm3415 = vcmask 523264
      %3416 = vst.msk [vmem:[#allocation2] sm:$0xff] %vm3415, %v3159
      %3417 = vst.msk [vmem:[#allocation2 + $0x8] sm:$0xff] %vm3415, %v3160
      %3418 = vst.msk [vmem:[#allocation2 + $0x10] sm:$0xff] %vm3415, %v3161
      %3419 = vst.msk [vmem:[#allocation2 + $0x18] sm:$0xff] %vm3415, %v3162
      %3420 = vst.msk [vmem:[#allocation2 + $0x20] sm:$0xff] %vm3415, %v3163
      %3421 = vst.msk [vmem:[#allocation2 + $0x28] sm:$0xff] %vm3415, %v3164
      %3422 = vst.msk [vmem:[#allocation2 + $0x30] sm:$0xff] %vm3415, %v3165
      %3423 = vst.msk [vmem:[#allocation2 + $0x38] sm:$0xff] %vm3415, %v3166
      %3424 = vst.msk [vmem:[#allocation2 + $0x40] sm:$0xff] %vm3415, %v3167
      %3425 = vst.msk [vmem:[#allocation2 + $0x48] sm:$0xff] %vm3415, %v3168
      %3426 = vst.msk [vmem:[#allocation2 + $0x50] sm:$0xff] %vm3415, %v3169
      %3427 = vst.msk [vmem:[#allocation2 + $0x58] sm:$0xff] %vm3415, %v3170
      %3428 = vst.msk [vmem:[#allocation2 + $0x60] sm:$0xff] %vm3415, %v3171
      %3429 = vst.msk [vmem:[#allocation2 + $0x68] sm:$0xff] %vm3415, %v3172
      %3430 = vst.msk [vmem:[#allocation2 + $0x70] sm:$0xff] %vm3415, %v3173
      %3431 = vst.msk [vmem:[#allocation2 + $0x78] sm:$0xff] %vm3415, %v3174
      %3432 = vst.msk [vmem:[#allocation2 + $0x80] sm:$0xff] %vm3415, %v3175
      %3433 = vst.msk [vmem:[#allocation2 + $0x88] sm:$0xff] %vm3415, %v3176
      %3434 = vst.msk [vmem:[#allocation2 + $0x90] sm:$0xff] %vm3415, %v3177
      %3435 = vst.msk [vmem:[#allocation2 + $0x98] sm:$0xff] %vm3415, %v3178
      %3436 = vst.msk [vmem:[#allocation2 + $0xa0] sm:$0xff] %vm3415, %v3179
      %3437 = vst.msk [vmem:[#allocation2 + $0xa8] sm:$0xff] %vm3415, %v3180
      %3438 = vst.msk [vmem:[#allocation2 + $0xb0] sm:$0xff] %vm3415, %v3181
      %3439 = vst.msk [vmem:[#allocation2 + $0xb8] sm:$0xff] %vm3415, %v3182
      %3440 = vst.msk [vmem:[#allocation2 + $0xc0] sm:$0xff] %vm3415, %v3183
      %3441 = vst.msk [vmem:[#allocation2 + $0xc8] sm:$0xff] %vm3415, %v3184
      %3442 = vst.msk [vmem:[#allocation2 + $0xd0] sm:$0xff] %vm3415, %v3185
      %3443 = vst.msk [vmem:[#allocation2 + $0xd8] sm:$0xff] %vm3415, %v3186
      %3444 = vst.msk [vmem:[#allocation2 + $0xe0] sm:$0xff] %vm3415, %v3187
      %3445 = vst.msk [vmem:[#allocation2 + $0xe8] sm:$0xff] %vm3415, %v3188
      %3446 = vst.msk [vmem:[#allocation2 + $0xf0] sm:$0xff] %vm3415, %v3189
      %3447 = vst.msk [vmem:[#allocation2 + $0xf8] sm:$0xff] %vm3415, %v3190
      %3448 = vst.msk [vmem:[#allocation2 + $0x100] sm:$0xff] %vm3415, %v3191
      %3449 = vst.msk [vmem:[#allocation2 + $0x108] sm:$0xff] %vm3415, %v3192
      %3450 = vst.msk [vmem:[#allocation2 + $0x110] sm:$0xff] %vm3415, %v3193
      %3451 = vst.msk [vmem:[#allocation2 + $0x118] sm:$0xff] %vm3415, %v3194
      %3452 = vst.msk [vmem:[#allocation2 + $0x120] sm:$0xff] %vm3415, %v3195
      %3453 = vst.msk [vmem:[#allocation2 + $0x128] sm:$0xff] %vm3415, %v3196
      %3454 = vst.msk [vmem:[#allocation2 + $0x130] sm:$0xff] %vm3415, %v3197
      %3455 = vst.msk [vmem:[#allocation2 + $0x138] sm:$0xff] %vm3415, %v3198
      %3456 = vst.msk [vmem:[#allocation2 + $0x140] sm:$0xff] %vm3415, %v3199
      %3457 = vst.msk [vmem:[#allocation2 + $0x148] sm:$0xff] %vm3415, %v3200
      %3458 = vst.msk [vmem:[#allocation2 + $0x150] sm:$0xff] %vm3415, %v3201
      %3459 = vst.msk [vmem:[#allocation2 + $0x158] sm:$0xff] %vm3415, %v3202
      %3460 = vst.msk [vmem:[#allocation2 + $0x160] sm:$0xff] %vm3415, %v3203
      %3461 = vst.msk [vmem:[#allocation2 + $0x168] sm:$0xff] %vm3415, %v3204
      %3462 = vst.msk [vmem:[#allocation2 + $0x170] sm:$0xff] %vm3415, %v3205
      %3463 = vst.msk [vmem:[#allocation2 + $0x178] sm:$0xff] %vm3415, %v3206
      %3464 = vst.msk [vmem:[#allocation2 + $0x180] sm:$0xff] %vm3415, %v3207
      %3465 = vst.msk [vmem:[#allocation2 + $0x188] sm:$0xff] %vm3415, %v3208
      %3466 = vst.msk [vmem:[#allocation2 + $0x190] sm:$0xff] %vm3415, %v3209
      %3467 = vst.msk [vmem:[#allocation2 + $0x198] sm:$0xff] %vm3415, %v3210
      %3468 = vst.msk [vmem:[#allocation2 + $0x1a0] sm:$0xff] %vm3415, %v3211
      %3469 = vst.msk [vmem:[#allocation2 + $0x1a8] sm:$0xff] %vm3415, %v3212
      %3470 = vst.msk [vmem:[#allocation2 + $0x1b0] sm:$0xff] %vm3415, %v3213
      %3471 = vst.msk [vmem:[#allocation2 + $0x1b8] sm:$0xff] %vm3415, %v3214
      %3472 = vst.msk [vmem:[#allocation2 + $0x1c0] sm:$0xff] %vm3415, %v3215
      %3473 = vst.msk [vmem:[#allocation2 + $0x1c8] sm:$0xff] %vm3415, %v3216
      %3474 = vst.msk [vmem:[#allocation2 + $0x1d0] sm:$0xff] %vm3415, %v3217
      %3475 = vst.msk [vmem:[#allocation2 + $0x1d8] sm:$0xff] %vm3415, %v3218
      %3476 = vst.msk [vmem:[#allocation2 + $0x1e0] sm:$0xff] %vm3415, %v3219
      %3477 = vst.msk [vmem:[#allocation2 + $0x1e8] sm:$0xff] %vm3415, %v3220
      %3478 = vst.msk [vmem:[#allocation2 + $0x1f0] sm:$0xff] %vm3415, %v3221
      %3479 = vst.msk [vmem:[#allocation2 + $0x1f8] sm:$0xff] %vm3415, %v3222
      %3480 = vst.msk [vmem:[#allocation2 + $0x200] sm:$0xff] %vm3415, %v3223
      %3481 = vst.msk [vmem:[#allocation2 + $0x208] sm:$0xff] %vm3415, %v3224
      %3482 = vst.msk [vmem:[#allocation2 + $0x210] sm:$0xff] %vm3415, %v3225
      %3483 = vst.msk [vmem:[#allocation2 + $0x218] sm:$0xff] %vm3415, %v3226
      %3484 = vst.msk [vmem:[#allocation2 + $0x220] sm:$0xff] %vm3415, %v3227
      %3485 = vst.msk [vmem:[#allocation2 + $0x228] sm:$0xff] %vm3415, %v3228
      %3486 = vst.msk [vmem:[#allocation2 + $0x230] sm:$0xff] %vm3415, %v3229
      %3487 = vst.msk [vmem:[#allocation2 + $0x238] sm:$0xff] %vm3415, %v3230
      %3488 = vst.msk [vmem:[#allocation2 + $0x240] sm:$0xff] %vm3415, %v3231
      %3489 = vst.msk [vmem:[#allocation2 + $0x248] sm:$0xff] %vm3415, %v3232
      %3490 = vst.msk [vmem:[#allocation2 + $0x250] sm:$0xff] %vm3415, %v3233
      %3491 = vst.msk [vmem:[#allocation2 + $0x258] sm:$0xff] %vm3415, %v3234
      %3492 = vst.msk [vmem:[#allocation2 + $0x260] sm:$0xff] %vm3415, %v3235
      %3493 = vst.msk [vmem:[#allocation2 + $0x268] sm:$0xff] %vm3415, %v3236
      %3494 = vst.msk [vmem:[#allocation2 + $0x270] sm:$0xff] %vm3415, %v3237
      %3495 = vst.msk [vmem:[#allocation2 + $0x278] sm:$0xff] %vm3415, %v3238
      %3496 = vst.msk [vmem:[#allocation2 + $0x280] sm:$0xff] %vm3415, %v3239
      %3497 = vst.msk [vmem:[#allocation2 + $0x288] sm:$0xff] %vm3415, %v3240
      %3498 = vst.msk [vmem:[#allocation2 + $0x290] sm:$0xff] %vm3415, %v3241
      %3499 = vst.msk [vmem:[#allocation2 + $0x298] sm:$0xff] %vm3415, %v3242
      %3500 = vst.msk [vmem:[#allocation2 + $0x2a0] sm:$0xff] %vm3415, %v3243
      %3501 = vst.msk [vmem:[#allocation2 + $0x2a8] sm:$0xff] %vm3415, %v3244
      %3502 = vst.msk [vmem:[#allocation2 + $0x2b0] sm:$0xff] %vm3415, %v3245
      %3503 = vst.msk [vmem:[#allocation2 + $0x2b8] sm:$0xff] %vm3415, %v3246
      %3504 = vst.msk [vmem:[#allocation2 + $0x2c0] sm:$0xff] %vm3415, %v3247
      %3505 = vst.msk [vmem:[#allocation2 + $0x2c8] sm:$0xff] %vm3415, %v3248
      %3506 = vst.msk [vmem:[#allocation2 + $0x2d0] sm:$0xff] %vm3415, %v3249
      %3507 = vst.msk [vmem:[#allocation2 + $0x2d8] sm:$0xff] %vm3415, %v3250
      %3508 = vst.msk [vmem:[#allocation2 + $0x2e0] sm:$0xff] %vm3415, %v3251
      %3509 = vst.msk [vmem:[#allocation2 + $0x2e8] sm:$0xff] %vm3415, %v3252
      %3510 = vst.msk [vmem:[#allocation2 + $0x2f0] sm:$0xff] %vm3415, %v3253
      %3511 = vst.msk [vmem:[#allocation2 + $0x2f8] sm:$0xff] %vm3415, %v3254
      %3512 = vst.msk [vmem:[#allocation2 + $0x300] sm:$0xff] %vm3415, %v3255
      %3513 = vst.msk [vmem:[#allocation2 + $0x308] sm:$0xff] %vm3415, %v3256
      %3514 = vst.msk [vmem:[#allocation2 + $0x310] sm:$0xff] %vm3415, %v3257
      %3515 = vst.msk [vmem:[#allocation2 + $0x318] sm:$0xff] %vm3415, %v3258
      %3516 = vst.msk [vmem:[#allocation2 + $0x320] sm:$0xff] %vm3415, %v3259
      %3517 = vst.msk [vmem:[#allocation2 + $0x328] sm:$0xff] %vm3415, %v3260
      %3518 = vst.msk [vmem:[#allocation2 + $0x330] sm:$0xff] %vm3415, %v3261
      %3519 = vst.msk [vmem:[#allocation2 + $0x338] sm:$0xff] %vm3415, %v3262
      %3520 = vst.msk [vmem:[#allocation2 + $0x340] sm:$0xff] %vm3415, %v3263
      %3521 = vst.msk [vmem:[#allocation2 + $0x348] sm:$0xff] %vm3415, %v3264
      %3522 = vst.msk [vmem:[#allocation2 + $0x350] sm:$0xff] %vm3415, %v3265
      %3523 = vst.msk [vmem:[#allocation2 + $0x358] sm:$0xff] %vm3415, %v3266
      %3524 = vst.msk [vmem:[#allocation2 + $0x360] sm:$0xff] %vm3415, %v3267
      %3525 = vst.msk [vmem:[#allocation2 + $0x368] sm:$0xff] %vm3415, %v3268
      %3526 = vst.msk [vmem:[#allocation2 + $0x370] sm:$0xff] %vm3415, %v3269
      %3527 = vst.msk [vmem:[#allocation2 + $0x378] sm:$0xff] %vm3415, %v3270
      %3528 = vst.msk [vmem:[#allocation2 + $0x380] sm:$0xff] %vm3415, %v3271
      %3529 = vst.msk [vmem:[#allocation2 + $0x388] sm:$0xff] %vm3415, %v3272
      %3530 = vst.msk [vmem:[#allocation2 + $0x390] sm:$0xff] %vm3415, %v3273
      %3531 = vst.msk [vmem:[#allocation2 + $0x398] sm:$0xff] %vm3415, %v3274
      %3532 = vst.msk [vmem:[#allocation2 + $0x3a0] sm:$0xff] %vm3415, %v3275
      %3533 = vst.msk [vmem:[#allocation2 + $0x3a8] sm:$0xff] %vm3415, %v3276
      %3534 = vst.msk [vmem:[#allocation2 + $0x3b0] sm:$0xff] %vm3415, %v3277
      %3535 = vst.msk [vmem:[#allocation2 + $0x3b8] sm:$0xff] %vm3415, %v3278
      %3536 = vst.msk [vmem:[#allocation2 + $0x3c0] sm:$0xff] %vm3415, %v3279
      %3537 = vst.msk [vmem:[#allocation2 + $0x3c8] sm:$0xff] %vm3415, %v3280
      %3538 = vst.msk [vmem:[#allocation2 + $0x3d0] sm:$0xff] %vm3415, %v3281
      %3539 = vst.msk [vmem:[#allocation2 + $0x3d8] sm:$0xff] %vm3415, %v3282
      %3540 = vst.msk [vmem:[#allocation2 + $0x3e0] sm:$0xff] %vm3415, %v3283
      %3541 = vst.msk [vmem:[#allocation2 + $0x3e8] sm:$0xff] %vm3415, %v3284
      %3542 = vst.msk [vmem:[#allocation2 + $0x3f0] sm:$0xff] %vm3415, %v3285
      %3543 = vst.msk [vmem:[#allocation2 + $0x3f8] sm:$0xff] %vm3415, %v3286
      %3544 = vst.msk [vmem:[#allocation2 + $0x400] sm:$0xff] %vm3415, %v3287
      %3545 = vst.msk [vmem:[#allocation2 + $0x408] sm:$0xff] %vm3415, %v3288
      %3546 = vst.msk [vmem:[#allocation2 + $0x410] sm:$0xff] %vm3415, %v3289
      %3547 = vst.msk [vmem:[#allocation2 + $0x418] sm:$0xff] %vm3415, %v3290
      %3548 = vst.msk [vmem:[#allocation2 + $0x420] sm:$0xff] %vm3415, %v3291
      %3549 = vst.msk [vmem:[#allocation2 + $0x428] sm:$0xff] %vm3415, %v3292
      %3550 = vst.msk [vmem:[#allocation2 + $0x430] sm:$0xff] %vm3415, %v3293
      %3551 = vst.msk [vmem:[#allocation2 + $0x438] sm:$0xff] %vm3415, %v3294
      %3552 = vst.msk [vmem:[#allocation2 + $0x440] sm:$0xff] %vm3415, %v3295
      %3553 = vst.msk [vmem:[#allocation2 + $0x448] sm:$0xff] %vm3415, %v3296
      %3554 = vst.msk [vmem:[#allocation2 + $0x450] sm:$0xff] %vm3415, %v3297
      %3555 = vst.msk [vmem:[#allocation2 + $0x458] sm:$0xff] %vm3415, %v3298
      %3556 = vst.msk [vmem:[#allocation2 + $0x460] sm:$0xff] %vm3415, %v3299
      %3557 = vst.msk [vmem:[#allocation2 + $0x468] sm:$0xff] %vm3415, %v3300
      %3558 = vst.msk [vmem:[#allocation2 + $0x470] sm:$0xff] %vm3415, %v3301
      %3559 = vst.msk [vmem:[#allocation2 + $0x478] sm:$0xff] %vm3415, %v3302
      %3560 = vst.msk [vmem:[#allocation2 + $0x480] sm:$0xff] %vm3415, %v3303
      %3561 = vst.msk [vmem:[#allocation2 + $0x488] sm:$0xff] %vm3415, %v3304
      %3562 = vst.msk [vmem:[#allocation2 + $0x490] sm:$0xff] %vm3415, %v3305
      %3563 = vst.msk [vmem:[#allocation2 + $0x498] sm:$0xff] %vm3415, %v3306
      %3564 = vst.msk [vmem:[#allocation2 + $0x4a0] sm:$0xff] %vm3415, %v3307
      %3565 = vst.msk [vmem:[#allocation2 + $0x4a8] sm:$0xff] %vm3415, %v3308
      %3566 = vst.msk [vmem:[#allocation2 + $0x4b0] sm:$0xff] %vm3415, %v3309
      %3567 = vst.msk [vmem:[#allocation2 + $0x4b8] sm:$0xff] %vm3415, %v3310
      %3568 = vst.msk [vmem:[#allocation2 + $0x4c0] sm:$0xff] %vm3415, %v3311
      %3569 = vst.msk [vmem:[#allocation2 + $0x4c8] sm:$0xff] %vm3415, %v3312
      %3570 = vst.msk [vmem:[#allocation2 + $0x4d0] sm:$0xff] %vm3415, %v3313
      %3571 = vst.msk [vmem:[#allocation2 + $0x4d8] sm:$0xff] %vm3415, %v3314
      %3572 = vst.msk [vmem:[#allocation2 + $0x4e0] sm:$0xff] %vm3415, %v3315
      %3573 = vst.msk [vmem:[#allocation2 + $0x4e8] sm:$0xff] %vm3415, %v3316
      %3574 = vst.msk [vmem:[#allocation2 + $0x4f0] sm:$0xff] %vm3415, %v3317
      %3575 = vst.msk [vmem:[#allocation2 + $0x4f8] sm:$0xff] %vm3415, %v3318
      %3576 = vst.msk [vmem:[#allocation2 + $0x500] sm:$0xff] %vm3415, %v3319
      %3577 = vst.msk [vmem:[#allocation2 + $0x508] sm:$0xff] %vm3415, %v3320
      %3578 = vst.msk [vmem:[#allocation2 + $0x510] sm:$0xff] %vm3415, %v3321
      %3579 = vst.msk [vmem:[#allocation2 + $0x518] sm:$0xff] %vm3415, %v3322
      %3580 = vst.msk [vmem:[#allocation2 + $0x520] sm:$0xff] %vm3415, %v3323
      %3581 = vst.msk [vmem:[#allocation2 + $0x528] sm:$0xff] %vm3415, %v3324
      %3582 = vst.msk [vmem:[#allocation2 + $0x530] sm:$0xff] %vm3415, %v3325
      %3583 = vst.msk [vmem:[#allocation2 + $0x538] sm:$0xff] %vm3415, %v3326
      %3584 = vst.msk [vmem:[#allocation2 + $0x540] sm:$0xff] %vm3415, %v3327
      %3585 = vst.msk [vmem:[#allocation2 + $0x548] sm:$0xff] %vm3415, %v3328
      %3586 = vst.msk [vmem:[#allocation2 + $0x550] sm:$0xff] %vm3415, %v3329
      %3587 = vst.msk [vmem:[#allocation2 + $0x558] sm:$0xff] %vm3415, %v3330
      %3588 = vst.msk [vmem:[#allocation2 + $0x560] sm:$0xff] %vm3415, %v3331
      %3589 = vst.msk [vmem:[#allocation2 + $0x568] sm:$0xff] %vm3415, %v3332
      %3590 = vst.msk [vmem:[#allocation2 + $0x570] sm:$0xff] %vm3415, %v3333
      %3591 = vst.msk [vmem:[#allocation2 + $0x578] sm:$0xff] %vm3415, %v3334
      %3592 = vst.msk [vmem:[#allocation2 + $0x580] sm:$0xff] %vm3415, %v3335
      %3593 = vst.msk [vmem:[#allocation2 + $0x588] sm:$0xff] %vm3415, %v3336
      %3594 = vst.msk [vmem:[#allocation2 + $0x590] sm:$0xff] %vm3415, %v3337
      %3595 = vst.msk [vmem:[#allocation2 + $0x598] sm:$0xff] %vm3415, %v3338
      %3596 = vst.msk [vmem:[#allocation2 + $0x5a0] sm:$0xff] %vm3415, %v3339
      %3597 = vst.msk [vmem:[#allocation2 + $0x5a8] sm:$0xff] %vm3415, %v3340
      %3598 = vst.msk [vmem:[#allocation2 + $0x5b0] sm:$0xff] %vm3415, %v3341
      %3599 = vst.msk [vmem:[#allocation2 + $0x5b8] sm:$0xff] %vm3415, %v3342
      %3600 = vst.msk [vmem:[#allocation2 + $0x5c0] sm:$0xff] %vm3415, %v3343
      %3601 = vst.msk [vmem:[#allocation2 + $0x5c8] sm:$0xff] %vm3415, %v3344
      %3602 = vst.msk [vmem:[#allocation2 + $0x5d0] sm:$0xff] %vm3415, %v3345
      %3603 = vst.msk [vmem:[#allocation2 + $0x5d8] sm:$0xff] %vm3415, %v3346
      %3604 = vst.msk [vmem:[#allocation2 + $0x5e0] sm:$0xff] %vm3415, %v3347
      %3605 = vst.msk [vmem:[#allocation2 + $0x5e8] sm:$0xff] %vm3415, %v3348
      %3606 = vst.msk [vmem:[#allocation2 + $0x5f0] sm:$0xff] %vm3415, %v3349
      %3607 = vst.msk [vmem:[#allocation2 + $0x5f8] sm:$0xff] %vm3415, %v3350
      %3608 = vst.msk [vmem:[#allocation2 + $0x600] sm:$0xff] %vm3415, %v3351
      %3609 = vst.msk [vmem:[#allocation2 + $0x608] sm:$0xff] %vm3415, %v3352
      %3610 = vst.msk [vmem:[#allocation2 + $0x610] sm:$0xff] %vm3415, %v3353
      %3611 = vst.msk [vmem:[#allocation2 + $0x618] sm:$0xff] %vm3415, %v3354
      %3612 = vst.msk [vmem:[#allocation2 + $0x620] sm:$0xff] %vm3415, %v3355
      %3613 = vst.msk [vmem:[#allocation2 + $0x628] sm:$0xff] %vm3415, %v3356
      %3614 = vst.msk [vmem:[#allocation2 + $0x630] sm:$0xff] %vm3415, %v3357
      %3615 = vst.msk [vmem:[#allocation2 + $0x638] sm:$0xff] %vm3415, %v3358
      %3616 = vst.msk [vmem:[#allocation2 + $0x640] sm:$0xff] %vm3415, %v3359
      %3617 = vst.msk [vmem:[#allocation2 + $0x648] sm:$0xff] %vm3415, %v3360
      %3618 = vst.msk [vmem:[#allocation2 + $0x650] sm:$0xff] %vm3415, %v3361
      %3619 = vst.msk [vmem:[#allocation2 + $0x658] sm:$0xff] %vm3415, %v3362
      %3620 = vst.msk [vmem:[#allocation2 + $0x660] sm:$0xff] %vm3415, %v3363
      %3621 = vst.msk [vmem:[#allocation2 + $0x668] sm:$0xff] %vm3415, %v3364
      %3622 = vst.msk [vmem:[#allocation2 + $0x670] sm:$0xff] %vm3415, %v3365
      %3623 = vst.msk [vmem:[#allocation2 + $0x678] sm:$0xff] %vm3415, %v3366
      %3624 = vst.msk [vmem:[#allocation2 + $0x680] sm:$0xff] %vm3415, %v3367
      %3625 = vst.msk [vmem:[#allocation2 + $0x688] sm:$0xff] %vm3415, %v3368
      %3626 = vst.msk [vmem:[#allocation2 + $0x690] sm:$0xff] %vm3415, %v3369
      %3627 = vst.msk [vmem:[#allocation2 + $0x698] sm:$0xff] %vm3415, %v3370
      %3628 = vst.msk [vmem:[#allocation2 + $0x6a0] sm:$0xff] %vm3415, %v3371
      %3629 = vst.msk [vmem:[#allocation2 + $0x6a8] sm:$0xff] %vm3415, %v3372
      %3630 = vst.msk [vmem:[#allocation2 + $0x6b0] sm:$0xff] %vm3415, %v3373
      %3631 = vst.msk [vmem:[#allocation2 + $0x6b8] sm:$0xff] %vm3415, %v3374
      %3632 = vst.msk [vmem:[#allocation2 + $0x6c0] sm:$0xff] %vm3415, %v3375
      %3633 = vst.msk [vmem:[#allocation2 + $0x6c8] sm:$0xff] %vm3415, %v3376
      %3634 = vst.msk [vmem:[#allocation2 + $0x6d0] sm:$0xff] %vm3415, %v3377
      %3635 = vst.msk [vmem:[#allocation2 + $0x6d8] sm:$0xff] %vm3415, %v3378
      %3636 = vst.msk [vmem:[#allocation2 + $0x6e0] sm:$0xff] %vm3415, %v3379
      %3637 = vst.msk [vmem:[#allocation2 + $0x6e8] sm:$0xff] %vm3415, %v3380
      %3638 = vst.msk [vmem:[#allocation2 + $0x6f0] sm:$0xff] %vm3415, %v3381
      %3639 = vst.msk [vmem:[#allocation2 + $0x6f8] sm:$0xff] %vm3415, %v3382
      %3640 = vst.msk [vmem:[#allocation2 + $0x700] sm:$0xff] %vm3415, %v3383
      %3641 = vst.msk [vmem:[#allocation2 + $0x708] sm:$0xff] %vm3415, %v3384
      %3642 = vst.msk [vmem:[#allocation2 + $0x710] sm:$0xff] %vm3415, %v3385
      %3643 = vst.msk [vmem:[#allocation2 + $0x718] sm:$0xff] %vm3415, %v3386
      %3644 = vst.msk [vmem:[#allocation2 + $0x720] sm:$0xff] %vm3415, %v3387
      %3645 = vst.msk [vmem:[#allocation2 + $0x728] sm:$0xff] %vm3415, %v3388
      %3646 = vst.msk [vmem:[#allocation2 + $0x730] sm:$0xff] %vm3415, %v3389
      %3647 = vst.msk [vmem:[#allocation2 + $0x738] sm:$0xff] %vm3415, %v3390
      %3648 = vst.msk [vmem:[#allocation2 + $0x740] sm:$0xff] %vm3415, %v3391
      %3649 = vst.msk [vmem:[#allocation2 + $0x748] sm:$0xff] %vm3415, %v3392
      %3650 = vst.msk [vmem:[#allocation2 + $0x750] sm:$0xff] %vm3415, %v3393
      %3651 = vst.msk [vmem:[#allocation2 + $0x758] sm:$0xff] %vm3415, %v3394
      %3652 = vst.msk [vmem:[#allocation2 + $0x760] sm:$0xff] %vm3415, %v3395
      %3653 = vst.msk [vmem:[#allocation2 + $0x768] sm:$0xff] %vm3415, %v3396
      %3654 = vst.msk [vmem:[#allocation2 + $0x770] sm:$0xff] %vm3415, %v3397
      %3655 = vst.msk [vmem:[#allocation2 + $0x778] sm:$0xff] %vm3415, %v3398
      %3656 = vst.msk [vmem:[#allocation2 + $0x780] sm:$0xff] %vm3415, %v3399
      %3657 = vst.msk [vmem:[#allocation2 + $0x788] sm:$0xff] %vm3415, %v3400
      %3658 = vst.msk [vmem:[#allocation2 + $0x790] sm:$0xff] %vm3415, %v3401
      %3659 = vst.msk [vmem:[#allocation2 + $0x798] sm:$0xff] %vm3415, %v3402
      %3660 = vst.msk [vmem:[#allocation2 + $0x7a0] sm:$0xff] %vm3415, %v3403
      %3661 = vst.msk [vmem:[#allocation2 + $0x7a8] sm:$0xff] %vm3415, %v3404
      %3662 = vst.msk [vmem:[#allocation2 + $0x7b0] sm:$0xff] %vm3415, %v3405
      %3663 = vst.msk [vmem:[#allocation2 + $0x7b8] sm:$0xff] %vm3415, %v3406
      %3664 = vst.msk [vmem:[#allocation2 + $0x7c0] sm:$0xff] %vm3415, %v3407
      %3665 = vst.msk [vmem:[#allocation2 + $0x7c8] sm:$0xff] %vm3415, %v3408
      %3666 = vst.msk [vmem:[#allocation2 + $0x7d0] sm:$0xff] %vm3415, %v3409
      %3667 = vst.msk [vmem:[#allocation2 + $0x7d8] sm:$0xff] %vm3415, %v3410
      %3668 = vst.msk [vmem:[#allocation2 + $0x7e0] sm:$0xff] %vm3415, %v3411
      %3669 = vst.msk [vmem:[#allocation2 + $0x7e8] sm:$0xff] %vm3415, %v3412
      %3670 = vst.msk [vmem:[#allocation2 + $0x7f0] sm:$0xff] %vm3415, %v3413
      %3671 = vst.msk [vmem:[#allocation2 + $0x7f8] sm:$0xff] %vm3415, %v3414
      // Predicated region
      $region37: #{tpu_custom_call.1} parent=31 // pred_check
        %p3672 = pneg %p282
      $region38: #{tpu_custom_call.1} parent=31 // pred_check_branch
        %3674 = sbr.rel (%p3672) target = $region40
      $region39: #{tpu_custom_call.1} parent=31 // pred_region
        %v3675 = vld [vmem:[#allocation2] sm:$0xff]
        %v3676 = vld [vmem:[#allocation2 + $0x8] sm:$0xff]
        %v3677 = vld [vmem:[#allocation2 + $0x10] sm:$0xff]
        %v3678 = vld [vmem:[#allocation2 + $0x18] sm:$0xff]
        %v3679 = vld [vmem:[#allocation2 + $0x20] sm:$0xff]
        %v3680 = vld [vmem:[#allocation2 + $0x28] sm:$0xff]
        %v3681 = vld [vmem:[#allocation2 + $0x30] sm:$0xff]
        %v3682 = vld [vmem:[#allocation2 + $0x38] sm:$0xff]
        %v3683 = vld [vmem:[#allocation2 + $0x40] sm:$0xff]
        %v3684 = vld [vmem:[#allocation2 + $0x48] sm:$0xff]
        %v3685 = vld [vmem:[#allocation2 + $0x50] sm:$0xff]
        %v3686 = vld [vmem:[#allocation2 + $0x58] sm:$0xff]
        %v3687 = vld [vmem:[#allocation2 + $0x60] sm:$0xff]
        %v3688 = vld [vmem:[#allocation2 + $0x68] sm:$0xff]
        %v3689 = vld [vmem:[#allocation2 + $0x70] sm:$0xff]
        %v3690 = vld [vmem:[#allocation2 + $0x78] sm:$0xff]
        %v3691 = vld [vmem:[#allocation2 + $0x80] sm:$0xff]
        %v3692 = vld [vmem:[#allocation2 + $0x88] sm:$0xff]
        %v3693 = vld [vmem:[#allocation2 + $0x90] sm:$0xff]
        %v3694 = vld [vmem:[#allocation2 + $0x98] sm:$0xff]
        %v3695 = vld [vmem:[#allocation2 + $0xa0] sm:$0xff]
        %v3696 = vld [vmem:[#allocation2 + $0xa8] sm:$0xff]
        %v3697 = vld [vmem:[#allocation2 + $0xb0] sm:$0xff]
        %v3698 = vld [vmem:[#allocation2 + $0xb8] sm:$0xff]
        %v3699 = vld [vmem:[#allocation2 + $0xc0] sm:$0xff]
        %v3700 = vld [vmem:[#allocation2 + $0xc8] sm:$0xff]
        %v3701 = vld [vmem:[#allocation2 + $0xd0] sm:$0xff]
        %v3702 = vld [vmem:[#allocation2 + $0xd8] sm:$0xff]
        %v3703 = vld [vmem:[#allocation2 + $0xe0] sm:$0xff]
        %v3704 = vld [vmem:[#allocation2 + $0xe8] sm:$0xff]
        %v3705 = vld [vmem:[#allocation2 + $0xf0] sm:$0xff]
        %v3706 = vld [vmem:[#allocation2 + $0xf8] sm:$0xff]
        %v3707 = vld [vmem:[#allocation2 + $0x100] sm:$0xff]
        %v3708 = vld [vmem:[#allocation2 + $0x108] sm:$0xff]
        %v3709 = vld [vmem:[#allocation2 + $0x110] sm:$0xff]
        %v3710 = vld [vmem:[#allocation2 + $0x118] sm:$0xff]
        %v3711 = vld [vmem:[#allocation2 + $0x120] sm:$0xff]
        %v3712 = vld [vmem:[#allocation2 + $0x128] sm:$0xff]
        %v3713 = vld [vmem:[#allocation2 + $0x130] sm:$0xff]
        %v3714 = vld [vmem:[#allocation2 + $0x138] sm:$0xff]
        %v3715 = vld [vmem:[#allocation2 + $0x140] sm:$0xff]
        %v3716 = vld [vmem:[#allocation2 + $0x148] sm:$0xff]
        %v3717 = vld [vmem:[#allocation2 + $0x150] sm:$0xff]
        %v3718 = vld [vmem:[#allocation2 + $0x158] sm:$0xff]
        %v3719 = vld [vmem:[#allocation2 + $0x160] sm:$0xff]
        %v3720 = vld [vmem:[#allocation2 + $0x168] sm:$0xff]
        %v3721 = vld [vmem:[#allocation2 + $0x170] sm:$0xff]
        %v3722 = vld [vmem:[#allocation2 + $0x178] sm:$0xff]
        %v3723 = vld [vmem:[#allocation2 + $0x180] sm:$0xff]
        %v3724 = vld [vmem:[#allocation2 + $0x188] sm:$0xff]
        %v3725 = vld [vmem:[#allocation2 + $0x190] sm:$0xff]
        %v3726 = vld [vmem:[#allocation2 + $0x198] sm:$0xff]
        %v3727 = vld [vmem:[#allocation2 + $0x1a0] sm:$0xff]
        %v3728 = vld [vmem:[#allocation2 + $0x1a8] sm:$0xff]
        %v3729 = vld [vmem:[#allocation2 + $0x1b0] sm:$0xff]
        %v3730 = vld [vmem:[#allocation2 + $0x1b8] sm:$0xff]
        %v3731 = vld [vmem:[#allocation2 + $0x1c0] sm:$0xff]
        %v3732 = vld [vmem:[#allocation2 + $0x1c8] sm:$0xff]
        %v3733 = vld [vmem:[#allocation2 + $0x1d0] sm:$0xff]
        %v3734 = vld [vmem:[#allocation2 + $0x1d8] sm:$0xff]
        %v3735 = vld [vmem:[#allocation2 + $0x1e0] sm:$0xff]
        %v3736 = vld [vmem:[#allocation2 + $0x1e8] sm:$0xff]
        %v3737 = vld [vmem:[#allocation2 + $0x1f0] sm:$0xff]
        %v3738 = vld [vmem:[#allocation2 + $0x1f8] sm:$0xff]
        %v3739 = vld [vmem:[#allocation2 + $0x200] sm:$0xff]
        %v3740 = vld [vmem:[#allocation2 + $0x208] sm:$0xff]
        %v3741 = vld [vmem:[#allocation2 + $0x210] sm:$0xff]
        %v3742 = vld [vmem:[#allocation2 + $0x218] sm:$0xff]
        %v3743 = vld [vmem:[#allocation2 + $0x220] sm:$0xff]
        %v3744 = vld [vmem:[#allocation2 + $0x228] sm:$0xff]
        %v3745 = vld [vmem:[#allocation2 + $0x230] sm:$0xff]
        %v3746 = vld [vmem:[#allocation2 + $0x238] sm:$0xff]
        %v3747 = vld [vmem:[#allocation2 + $0x240] sm:$0xff]
        %v3748 = vld [vmem:[#allocation2 + $0x248] sm:$0xff]
        %v3749 = vld [vmem:[#allocation2 + $0x250] sm:$0xff]
        %v3750 = vld [vmem:[#allocation2 + $0x258] sm:$0xff]
        %v3751 = vld [vmem:[#allocation2 + $0x260] sm:$0xff]
        %v3752 = vld [vmem:[#allocation2 + $0x268] sm:$0xff]
        %v3753 = vld [vmem:[#allocation2 + $0x270] sm:$0xff]
        %v3754 = vld [vmem:[#allocation2 + $0x278] sm:$0xff]
        %v3755 = vld [vmem:[#allocation2 + $0x280] sm:$0xff]
        %v3756 = vld [vmem:[#allocation2 + $0x288] sm:$0xff]
        %v3757 = vld [vmem:[#allocation2 + $0x290] sm:$0xff]
        %v3758 = vld [vmem:[#allocation2 + $0x298] sm:$0xff]
        %v3759 = vld [vmem:[#allocation2 + $0x2a0] sm:$0xff]
        %v3760 = vld [vmem:[#allocation2 + $0x2a8] sm:$0xff]
        %v3761 = vld [vmem:[#allocation2 + $0x2b0] sm:$0xff]
        %v3762 = vld [vmem:[#allocation2 + $0x2b8] sm:$0xff]
        %v3763 = vld [vmem:[#allocation2 + $0x2c0] sm:$0xff]
        %v3764 = vld [vmem:[#allocation2 + $0x2c8] sm:$0xff]
        %v3765 = vld [vmem:[#allocation2 + $0x2d0] sm:$0xff]
        %v3766 = vld [vmem:[#allocation2 + $0x2d8] sm:$0xff]
        %v3767 = vld [vmem:[#allocation2 + $0x2e0] sm:$0xff]
        %v3768 = vld [vmem:[#allocation2 + $0x2e8] sm:$0xff]
        %v3769 = vld [vmem:[#allocation2 + $0x2f0] sm:$0xff]
        %v3770 = vld [vmem:[#allocation2 + $0x2f8] sm:$0xff]
        %v3771 = vld [vmem:[#allocation2 + $0x300] sm:$0xff]
        %v3772 = vld [vmem:[#allocation2 + $0x308] sm:$0xff]
        %v3773 = vld [vmem:[#allocation2 + $0x310] sm:$0xff]
        %v3774 = vld [vmem:[#allocation2 + $0x318] sm:$0xff]
        %v3775 = vld [vmem:[#allocation2 + $0x320] sm:$0xff]
        %v3776 = vld [vmem:[#allocation2 + $0x328] sm:$0xff]
        %v3777 = vld [vmem:[#allocation2 + $0x330] sm:$0xff]
        %v3778 = vld [vmem:[#allocation2 + $0x338] sm:$0xff]
        %v3779 = vld [vmem:[#allocation2 + $0x340] sm:$0xff]
        %v3780 = vld [vmem:[#allocation2 + $0x348] sm:$0xff]
        %v3781 = vld [vmem:[#allocation2 + $0x350] sm:$0xff]
        %v3782 = vld [vmem:[#allocation2 + $0x358] sm:$0xff]
        %v3783 = vld [vmem:[#allocation2 + $0x360] sm:$0xff]
        %v3784 = vld [vmem:[#allocation2 + $0x368] sm:$0xff]
        %v3785 = vld [vmem:[#allocation2 + $0x370] sm:$0xff]
        %v3786 = vld [vmem:[#allocation2 + $0x378] sm:$0xff]
        %v3787 = vld [vmem:[#allocation2 + $0x380] sm:$0xff]
        %v3788 = vld [vmem:[#allocation2 + $0x388] sm:$0xff]
        %v3789 = vld [vmem:[#allocation2 + $0x390] sm:$0xff]
        %v3790 = vld [vmem:[#allocation2 + $0x398] sm:$0xff]
        %v3791 = vld [vmem:[#allocation2 + $0x3a0] sm:$0xff]
        %v3792 = vld [vmem:[#allocation2 + $0x3a8] sm:$0xff]
        %v3793 = vld [vmem:[#allocation2 + $0x3b0] sm:$0xff]
        %v3794 = vld [vmem:[#allocation2 + $0x3b8] sm:$0xff]
        %v3795 = vld [vmem:[#allocation2 + $0x3c0] sm:$0xff]
        %v3796 = vld [vmem:[#allocation2 + $0x3c8] sm:$0xff]
        %v3797 = vld [vmem:[#allocation2 + $0x3d0] sm:$0xff]
        %v3798 = vld [vmem:[#allocation2 + $0x3d8] sm:$0xff]
        %v3799 = vld [vmem:[#allocation2 + $0x3e0] sm:$0xff]
        %v3800 = vld [vmem:[#allocation2 + $0x3e8] sm:$0xff]
        %v3801 = vld [vmem:[#allocation2 + $0x3f0] sm:$0xff]
        %v3802 = vld [vmem:[#allocation2 + $0x3f8] sm:$0xff]
        %v3803 = vld [vmem:[#allocation2 + $0x400] sm:$0xff]
        %v3804 = vld [vmem:[#allocation2 + $0x408] sm:$0xff]
        %v3805 = vld [vmem:[#allocation2 + $0x410] sm:$0xff]
        %v3806 = vld [vmem:[#allocation2 + $0x418] sm:$0xff]
        %v3807 = vld [vmem:[#allocation2 + $0x420] sm:$0xff]
        %v3808 = vld [vmem:[#allocation2 + $0x428] sm:$0xff]
        %v3809 = vld [vmem:[#allocation2 + $0x430] sm:$0xff]
        %v3810 = vld [vmem:[#allocation2 + $0x438] sm:$0xff]
        %v3811 = vld [vmem:[#allocation2 + $0x440] sm:$0xff]
        %v3812 = vld [vmem:[#allocation2 + $0x448] sm:$0xff]
        %v3813 = vld [vmem:[#allocation2 + $0x450] sm:$0xff]
        %v3814 = vld [vmem:[#allocation2 + $0x458] sm:$0xff]
        %v3815 = vld [vmem:[#allocation2 + $0x460] sm:$0xff]
        %v3816 = vld [vmem:[#allocation2 + $0x468] sm:$0xff]
        %v3817 = vld [vmem:[#allocation2 + $0x470] sm:$0xff]
        %v3818 = vld [vmem:[#allocation2 + $0x478] sm:$0xff]
        %v3819 = vld [vmem:[#allocation2 + $0x480] sm:$0xff]
        %v3820 = vld [vmem:[#allocation2 + $0x488] sm:$0xff]
        %v3821 = vld [vmem:[#allocation2 + $0x490] sm:$0xff]
        %v3822 = vld [vmem:[#allocation2 + $0x498] sm:$0xff]
        %v3823 = vld [vmem:[#allocation2 + $0x4a0] sm:$0xff]
        %v3824 = vld [vmem:[#allocation2 + $0x4a8] sm:$0xff]
        %v3825 = vld [vmem:[#allocation2 + $0x4b0] sm:$0xff]
        %v3826 = vld [vmem:[#allocation2 + $0x4b8] sm:$0xff]
        %v3827 = vld [vmem:[#allocation2 + $0x4c0] sm:$0xff]
        %v3828 = vld [vmem:[#allocation2 + $0x4c8] sm:$0xff]
        %v3829 = vld [vmem:[#allocation2 + $0x4d0] sm:$0xff]
        %v3830 = vld [vmem:[#allocation2 + $0x4d8] sm:$0xff]
        %v3831 = vld [vmem:[#allocation2 + $0x4e0] sm:$0xff]
        %v3832 = vld [vmem:[#allocation2 + $0x4e8] sm:$0xff]
        %v3833 = vld [vmem:[#allocation2 + $0x4f0] sm:$0xff]
        %v3834 = vld [vmem:[#allocation2 + $0x4f8] sm:$0xff]
        %v3835 = vld [vmem:[#allocation2 + $0x500] sm:$0xff]
        %v3836 = vld [vmem:[#allocation2 + $0x508] sm:$0xff]
        %v3837 = vld [vmem:[#allocation2 + $0x510] sm:$0xff]
        %v3838 = vld [vmem:[#allocation2 + $0x518] sm:$0xff]
        %v3839 = vld [vmem:[#allocation2 + $0x520] sm:$0xff]
        %v3840 = vld [vmem:[#allocation2 + $0x528] sm:$0xff]
        %v3841 = vld [vmem:[#allocation2 + $0x530] sm:$0xff]
        %v3842 = vld [vmem:[#allocation2 + $0x538] sm:$0xff]
        %v3843 = vld [vmem:[#allocation2 + $0x540] sm:$0xff]
        %v3844 = vld [vmem:[#allocation2 + $0x548] sm:$0xff]
        %v3845 = vld [vmem:[#allocation2 + $0x550] sm:$0xff]
        %v3846 = vld [vmem:[#allocation2 + $0x558] sm:$0xff]
        %v3847 = vld [vmem:[#allocation2 + $0x560] sm:$0xff]
        %v3848 = vld [vmem:[#allocation2 + $0x568] sm:$0xff]
        %v3849 = vld [vmem:[#allocation2 + $0x570] sm:$0xff]
        %v3850 = vld [vmem:[#allocation2 + $0x578] sm:$0xff]
        %v3851 = vld [vmem:[#allocation2 + $0x580] sm:$0xff]
        %v3852 = vld [vmem:[#allocation2 + $0x588] sm:$0xff]
        %v3853 = vld [vmem:[#allocation2 + $0x590] sm:$0xff]
        %v3854 = vld [vmem:[#allocation2 + $0x598] sm:$0xff]
        %v3855 = vld [vmem:[#allocation2 + $0x5a0] sm:$0xff]
        %v3856 = vld [vmem:[#allocation2 + $0x5a8] sm:$0xff]
        %v3857 = vld [vmem:[#allocation2 + $0x5b0] sm:$0xff]
        %v3858 = vld [vmem:[#allocation2 + $0x5b8] sm:$0xff]
        %v3859 = vld [vmem:[#allocation2 + $0x5c0] sm:$0xff]
        %v3860 = vld [vmem:[#allocation2 + $0x5c8] sm:$0xff]
        %v3861 = vld [vmem:[#allocation2 + $0x5d0] sm:$0xff]
        %v3862 = vld [vmem:[#allocation2 + $0x5d8] sm:$0xff]
        %v3863 = vld [vmem:[#allocation2 + $0x5e0] sm:$0xff]
        %v3864 = vld [vmem:[#allocation2 + $0x5e8] sm:$0xff]
        %v3865 = vld [vmem:[#allocation2 + $0x5f0] sm:$0xff]
        %v3866 = vld [vmem:[#allocation2 + $0x5f8] sm:$0xff]
        %v3867 = vld [vmem:[#allocation2 + $0x600] sm:$0xff]
        %v3868 = vld [vmem:[#allocation2 + $0x608] sm:$0xff]
        %v3869 = vld [vmem:[#allocation2 + $0x610] sm:$0xff]
        %v3870 = vld [vmem:[#allocation2 + $0x618] sm:$0xff]
        %v3871 = vld [vmem:[#allocation2 + $0x620] sm:$0xff]
        %v3872 = vld [vmem:[#allocation2 + $0x628] sm:$0xff]
        %v3873 = vld [vmem:[#allocation2 + $0x630] sm:$0xff]
        %v3874 = vld [vmem:[#allocation2 + $0x638] sm:$0xff]
        %v3875 = vld [vmem:[#allocation2 + $0x640] sm:$0xff]
        %v3876 = vld [vmem:[#allocation2 + $0x648] sm:$0xff]
        %v3877 = vld [vmem:[#allocation2 + $0x650] sm:$0xff]
        %v3878 = vld [vmem:[#allocation2 + $0x658] sm:$0xff]
        %v3879 = vld [vmem:[#allocation2 + $0x660] sm:$0xff]
        %v3880 = vld [vmem:[#allocation2 + $0x668] sm:$0xff]
        %v3881 = vld [vmem:[#allocation2 + $0x670] sm:$0xff]
        %v3882 = vld [vmem:[#allocation2 + $0x678] sm:$0xff]
        %v3883 = vld [vmem:[#allocation2 + $0x680] sm:$0xff]
        %v3884 = vld [vmem:[#allocation2 + $0x688] sm:$0xff]
        %v3885 = vld [vmem:[#allocation2 + $0x690] sm:$0xff]
        %v3886 = vld [vmem:[#allocation2 + $0x698] sm:$0xff]
        %v3887 = vld [vmem:[#allocation2 + $0x6a0] sm:$0xff]
        %v3888 = vld [vmem:[#allocation2 + $0x6a8] sm:$0xff]
        %v3889 = vld [vmem:[#allocation2 + $0x6b0] sm:$0xff]
        %v3890 = vld [vmem:[#allocation2 + $0x6b8] sm:$0xff]
        %v3891 = vld [vmem:[#allocation2 + $0x6c0] sm:$0xff]
        %v3892 = vld [vmem:[#allocation2 + $0x6c8] sm:$0xff]
        %v3893 = vld [vmem:[#allocation2 + $0x6d0] sm:$0xff]
        %v3894 = vld [vmem:[#allocation2 + $0x6d8] sm:$0xff]
        %v3895 = vld [vmem:[#allocation2 + $0x6e0] sm:$0xff]
        %v3896 = vld [vmem:[#allocation2 + $0x6e8] sm:$0xff]
        %v3897 = vld [vmem:[#allocation2 + $0x6f0] sm:$0xff]
        %v3898 = vld [vmem:[#allocation2 + $0x6f8] sm:$0xff]
        %v3899 = vld [vmem:[#allocation2 + $0x700] sm:$0xff]
        %v3900 = vld [vmem:[#allocation2 + $0x708] sm:$0xff]
        %v3901 = vld [vmem:[#allocation2 + $0x710] sm:$0xff]
        %v3902 = vld [vmem:[#allocation2 + $0x718] sm:$0xff]
        %v3903 = vld [vmem:[#allocation2 + $0x720] sm:$0xff]
        %v3904 = vld [vmem:[#allocation2 + $0x728] sm:$0xff]
        %v3905 = vld [vmem:[#allocation2 + $0x730] sm:$0xff]
        %v3906 = vld [vmem:[#allocation2 + $0x738] sm:$0xff]
        %v3907 = vld [vmem:[#allocation2 + $0x740] sm:$0xff]
        %v3908 = vld [vmem:[#allocation2 + $0x748] sm:$0xff]
        %v3909 = vld [vmem:[#allocation2 + $0x750] sm:$0xff]
        %v3910 = vld [vmem:[#allocation2 + $0x758] sm:$0xff]
        %v3911 = vld [vmem:[#allocation2 + $0x760] sm:$0xff]
        %v3912 = vld [vmem:[#allocation2 + $0x768] sm:$0xff]
        %v3913 = vld [vmem:[#allocation2 + $0x770] sm:$0xff]
        %v3914 = vld [vmem:[#allocation2 + $0x778] sm:$0xff]
        %v3915 = vld [vmem:[#allocation2 + $0x780] sm:$0xff]
        %v3916 = vld [vmem:[#allocation2 + $0x788] sm:$0xff]
        %v3917 = vld [vmem:[#allocation2 + $0x790] sm:$0xff]
        %v3918 = vld [vmem:[#allocation2 + $0x798] sm:$0xff]
        %v3919 = vld [vmem:[#allocation2 + $0x7a0] sm:$0xff]
        %v3920 = vld [vmem:[#allocation2 + $0x7a8] sm:$0xff]
        %v3921 = vld [vmem:[#allocation2 + $0x7b0] sm:$0xff]
        %v3922 = vld [vmem:[#allocation2 + $0x7b8] sm:$0xff]
        %v3923 = vld [vmem:[#allocation2 + $0x7c0] sm:$0xff]
        %v3924 = vld [vmem:[#allocation2 + $0x7c8] sm:$0xff]
        %v3925 = vld [vmem:[#allocation2 + $0x7d0] sm:$0xff]
        %v3926 = vld [vmem:[#allocation2 + $0x7d8] sm:$0xff]
        %v3927 = vld [vmem:[#allocation2 + $0x7e0] sm:$0xff]
        %v3928 = vld [vmem:[#allocation2 + $0x7e8] sm:$0xff]
        %v3929 = vld [vmem:[#allocation2 + $0x7f0] sm:$0xff]
        %v3930 = vld [vmem:[#allocation2 + $0x7f8] sm:$0xff]
        %v3931 = vld [vmem:[%s272] sm:$0x1]
        %v3933 = vlaneseq
        %v3934 = vshrl.u32 %v3933, 7
        %v3935 = vsub.s32 0, %v3934
        %v3936 = vrot.slane %v3931, %v3935
        %v3938 = vadd.f32 %v3675, %v3936
        %v3939 = vadd.f32 %v3676, %v3936
        %v3940 = vadd.f32 %v3677, %v3936
        %v3941 = vadd.f32 %v3678, %v3936
        %v3942 = vadd.f32 %v3679, %v3936
        %v3943 = vadd.f32 %v3680, %v3936
        %v3944 = vadd.f32 %v3681, %v3936
        %v3945 = vadd.f32 %v3682, %v3936
        %v3946 = vadd.f32 %v3683, %v3936
        %v3947 = vadd.f32 %v3684, %v3936
        %v3948 = vadd.f32 %v3685, %v3936
        %v3949 = vadd.f32 %v3686, %v3936
        %v3950 = vadd.f32 %v3687, %v3936
        %v3951 = vadd.f32 %v3688, %v3936
        %v3952 = vadd.f32 %v3689, %v3936
        %v3953 = vadd.f32 %v3690, %v3936
        %v3954 = vadd.f32 %v3691, %v3936
        %v3955 = vadd.f32 %v3692, %v3936
        %v3956 = vadd.f32 %v3693, %v3936
        %v3957 = vadd.f32 %v3694, %v3936
        %v3958 = vadd.f32 %v3695, %v3936
        %v3959 = vadd.f32 %v3696, %v3936
        %v3960 = vadd.f32 %v3697, %v3936
        %v3961 = vadd.f32 %v3698, %v3936
        %v3962 = vadd.f32 %v3699, %v3936
        %v3963 = vadd.f32 %v3700, %v3936
        %v3964 = vadd.f32 %v3701, %v3936
        %v3965 = vadd.f32 %v3702, %v3936
        %v3966 = vadd.f32 %v3703, %v3936
        %v3967 = vadd.f32 %v3704, %v3936
        %v3968 = vadd.f32 %v3705, %v3936
        %v3969 = vadd.f32 %v3706, %v3936
        %v3970 = vadd.f32 %v3707, %v3936
        %v3971 = vadd.f32 %v3708, %v3936
        %v3972 = vadd.f32 %v3709, %v3936
        %v3973 = vadd.f32 %v3710, %v3936
        %v3974 = vadd.f32 %v3711, %v3936
        %v3975 = vadd.f32 %v3712, %v3936
        %v3976 = vadd.f32 %v3713, %v3936
        %v3977 = vadd.f32 %v3714, %v3936
        %v3978 = vadd.f32 %v3715, %v3936
        %v3979 = vadd.f32 %v3716, %v3936
        %v3980 = vadd.f32 %v3717, %v3936
        %v3981 = vadd.f32 %v3718, %v3936
        %v3982 = vadd.f32 %v3719, %v3936
        %v3983 = vadd.f32 %v3720, %v3936
        %v3984 = vadd.f32 %v3721, %v3936
        %v3985 = vadd.f32 %v3722, %v3936
        %v3986 = vadd.f32 %v3723, %v3936
        %v3987 = vadd.f32 %v3724, %v3936
        %v3988 = vadd.f32 %v3725, %v3936
        %v3989 = vadd.f32 %v3726, %v3936
        %v3990 = vadd.f32 %v3727, %v3936
        %v3991 = vadd.f32 %v3728, %v3936
        %v3992 = vadd.f32 %v3729, %v3936
        %v3993 = vadd.f32 %v3730, %v3936
        %v3994 = vadd.f32 %v3731, %v3936
        %v3995 = vadd.f32 %v3732, %v3936
        %v3996 = vadd.f32 %v3733, %v3936
        %v3997 = vadd.f32 %v3734, %v3936
        %v3998 = vadd.f32 %v3735, %v3936
        %v3999 = vadd.f32 %v3736, %v3936
        %v4000 = vadd.f32 %v3737, %v3936
        %v4001 = vadd.f32 %v3738, %v3936
        %v4002 = vadd.f32 %v3739, %v3936
        %v4003 = vadd.f32 %v3740, %v3936
        %v4004 = vadd.f32 %v3741, %v3936
        %v4005 = vadd.f32 %v3742, %v3936
        %v4006 = vadd.f32 %v3743, %v3936
        %v4007 = vadd.f32 %v3744, %v3936
        %v4008 = vadd.f32 %v3745, %v3936
        %v4009 = vadd.f32 %v3746, %v3936
        %v4010 = vadd.f32 %v3747, %v3936
        %v4011 = vadd.f32 %v3748, %v3936
        %v4012 = vadd.f32 %v3749, %v3936
        %v4013 = vadd.f32 %v3750, %v3936
        %v4014 = vadd.f32 %v3751, %v3936
        %v4015 = vadd.f32 %v3752, %v3936
        %v4016 = vadd.f32 %v3753, %v3936
        %v4017 = vadd.f32 %v3754, %v3936
        %v4018 = vadd.f32 %v3755, %v3936
        %v4019 = vadd.f32 %v3756, %v3936
        %v4020 = vadd.f32 %v3757, %v3936
        %v4021 = vadd.f32 %v3758, %v3936
        %v4022 = vadd.f32 %v3759, %v3936
        %v4023 = vadd.f32 %v3760, %v3936
        %v4024 = vadd.f32 %v3761, %v3936
        %v4025 = vadd.f32 %v3762, %v3936
        %v4026 = vadd.f32 %v3763, %v3936
        %v4027 = vadd.f32 %v3764, %v3936
        %v4028 = vadd.f32 %v3765, %v3936
        %v4029 = vadd.f32 %v3766, %v3936
        %v4030 = vadd.f32 %v3767, %v3936
        %v4031 = vadd.f32 %v3768, %v3936
        %v4032 = vadd.f32 %v3769, %v3936
        %v4033 = vadd.f32 %v3770, %v3936
        %v4034 = vadd.f32 %v3771, %v3936
        %v4035 = vadd.f32 %v3772, %v3936
        %v4036 = vadd.f32 %v3773, %v3936
        %v4037 = vadd.f32 %v3774, %v3936
        %v4038 = vadd.f32 %v3775, %v3936
        %v4039 = vadd.f32 %v3776, %v3936
        %v4040 = vadd.f32 %v3777, %v3936
        %v4041 = vadd.f32 %v3778, %v3936
        %v4042 = vadd.f32 %v3779, %v3936
        %v4043 = vadd.f32 %v3780, %v3936
        %v4044 = vadd.f32 %v3781, %v3936
        %v4045 = vadd.f32 %v3782, %v3936
        %v4046 = vadd.f32 %v3783, %v3936
        %v4047 = vadd.f32 %v3784, %v3936
        %v4048 = vadd.f32 %v3785, %v3936
        %v4049 = vadd.f32 %v3786, %v3936
        %v4050 = vadd.f32 %v3787, %v3936
        %v4051 = vadd.f32 %v3788, %v3936
        %v4052 = vadd.f32 %v3789, %v3936
        %v4053 = vadd.f32 %v3790, %v3936
        %v4054 = vadd.f32 %v3791, %v3936
        %v4055 = vadd.f32 %v3792, %v3936
        %v4056 = vadd.f32 %v3793, %v3936
        %v4057 = vadd.f32 %v3794, %v3936
        %v4058 = vadd.f32 %v3795, %v3936
        %v4059 = vadd.f32 %v3796, %v3936
        %v4060 = vadd.f32 %v3797, %v3936
        %v4061 = vadd.f32 %v3798, %v3936
        %v4062 = vadd.f32 %v3799, %v3936
        %v4063 = vadd.f32 %v3800, %v3936
        %v4064 = vadd.f32 %v3801, %v3936
        %v4065 = vadd.f32 %v3802, %v3936
        %v4066 = vadd.f32 %v3803, %v3936
        %v4067 = vadd.f32 %v3804, %v3936
        %v4068 = vadd.f32 %v3805, %v3936
        %v4069 = vadd.f32 %v3806, %v3936
        %v4070 = vadd.f32 %v3807, %v3936
        %v4071 = vadd.f32 %v3808, %v3936
        %v4072 = vadd.f32 %v3809, %v3936
        %v4073 = vadd.f32 %v3810, %v3936
        %v4074 = vadd.f32 %v3811, %v3936
        %v4075 = vadd.f32 %v3812, %v3936
        %v4076 = vadd.f32 %v3813, %v3936
        %v4077 = vadd.f32 %v3814, %v3936
        %v4078 = vadd.f32 %v3815, %v3936
        %v4079 = vadd.f32 %v3816, %v3936
        %v4080 = vadd.f32 %v3817, %v3936
        %v4081 = vadd.f32 %v3818, %v3936
        %v4082 = vadd.f32 %v3819, %v3936
        %v4083 = vadd.f32 %v3820, %v3936
        %v4084 = vadd.f32 %v3821, %v3936
        %v4085 = vadd.f32 %v3822, %v3936
        %v4086 = vadd.f32 %v3823, %v3936
        %v4087 = vadd.f32 %v3824, %v3936
        %v4088 = vadd.f32 %v3825, %v3936
        %v4089 = vadd.f32 %v3826, %v3936
        %v4090 = vadd.f32 %v3827, %v3936
        %v4091 = vadd.f32 %v3828, %v3936
        %v4092 = vadd.f32 %v3829, %v3936
        %v4093 = vadd.f32 %v3830, %v3936
        %v4094 = vadd.f32 %v3831, %v3936
        %v4095 = vadd.f32 %v3832, %v3936
        %v4096 = vadd.f32 %v3833, %v3936
        %v4097 = vadd.f32 %v3834, %v3936
        %v4098 = vadd.f32 %v3835, %v3936
        %v4099 = vadd.f32 %v3836, %v3936
        %v4100 = vadd.f32 %v3837, %v3936
        %v4101 = vadd.f32 %v3838, %v3936
        %v4102 = vadd.f32 %v3839, %v3936
        %v4103 = vadd.f32 %v3840, %v3936
        %v4104 = vadd.f32 %v3841, %v3936
        %v4105 = vadd.f32 %v3842, %v3936
        %v4106 = vadd.f32 %v3843, %v3936
        %v4107 = vadd.f32 %v3844, %v3936
        %v4108 = vadd.f32 %v3845, %v3936
        %v4109 = vadd.f32 %v3846, %v3936
        %v4110 = vadd.f32 %v3847, %v3936
        %v4111 = vadd.f32 %v3848, %v3936
        %v4112 = vadd.f32 %v3849, %v3936
        %v4113 = vadd.f32 %v3850, %v3936
        %v4114 = vadd.f32 %v3851, %v3936
        %v4115 = vadd.f32 %v3852, %v3936
        %v4116 = vadd.f32 %v3853, %v3936
        %v4117 = vadd.f32 %v3854, %v3936
        %v4118 = vadd.f32 %v3855, %v3936
        %v4119 = vadd.f32 %v3856, %v3936
        %v4120 = vadd.f32 %v3857, %v3936
        %v4121 = vadd.f32 %v3858, %v3936
        %v4122 = vadd.f32 %v3859, %v3936
        %v4123 = vadd.f32 %v3860, %v3936
        %v4124 = vadd.f32 %v3861, %v3936
        %v4125 = vadd.f32 %v3862, %v3936
        %v4126 = vadd.f32 %v3863, %v3936
        %v4127 = vadd.f32 %v3864, %v3936
        %v4128 = vadd.f32 %v3865, %v3936
        %v4129 = vadd.f32 %v3866, %v3936
        %v4130 = vadd.f32 %v3867, %v3936
        %v4131 = vadd.f32 %v3868, %v3936
        %v4132 = vadd.f32 %v3869, %v3936
        %v4133 = vadd.f32 %v3870, %v3936
        %v4134 = vadd.f32 %v3871, %v3936
        %v4135 = vadd.f32 %v3872, %v3936
        %v4136 = vadd.f32 %v3873, %v3936
        %v4137 = vadd.f32 %v3874, %v3936
        %v4138 = vadd.f32 %v3875, %v3936
        %v4139 = vadd.f32 %v3876, %v3936
        %v4140 = vadd.f32 %v3877, %v3936
        %v4141 = vadd.f32 %v3878, %v3936
        %v4142 = vadd.f32 %v3879, %v3936
        %v4143 = vadd.f32 %v3880, %v3936
        %v4144 = vadd.f32 %v3881, %v3936
        %v4145 = vadd.f32 %v3882, %v3936
        %v4146 = vadd.f32 %v3883, %v3936
        %v4147 = vadd.f32 %v3884, %v3936
        %v4148 = vadd.f32 %v3885, %v3936
        %v4149 = vadd.f32 %v3886, %v3936
        %v4150 = vadd.f32 %v3887, %v3936
        %v4151 = vadd.f32 %v3888, %v3936
        %v4152 = vadd.f32 %v3889, %v3936
        %v4153 = vadd.f32 %v3890, %v3936
        %v4154 = vadd.f32 %v3891, %v3936
        %v4155 = vadd.f32 %v3892, %v3936
        %v4156 = vadd.f32 %v3893, %v3936
        %v4157 = vadd.f32 %v3894, %v3936
        %v4158 = vadd.f32 %v3895, %v3936
        %v4159 = vadd.f32 %v3896, %v3936
        %v4160 = vadd.f32 %v3897, %v3936
        %v4161 = vadd.f32 %v3898, %v3936
        %v4162 = vadd.f32 %v3899, %v3936
        %v4163 = vadd.f32 %v3900, %v3936
        %v4164 = vadd.f32 %v3901, %v3936
        %v4165 = vadd.f32 %v3902, %v3936
        %v4166 = vadd.f32 %v3903, %v3936
        %v4167 = vadd.f32 %v3904, %v3936
        %v4168 = vadd.f32 %v3905, %v3936
        %v4169 = vadd.f32 %v3906, %v3936
        %v4170 = vadd.f32 %v3907, %v3936
        %v4171 = vadd.f32 %v3908, %v3936
        %v4172 = vadd.f32 %v3909, %v3936
        %v4173 = vadd.f32 %v3910, %v3936
        %v4174 = vadd.f32 %v3911, %v3936
        %v4175 = vadd.f32 %v3912, %v3936
        %v4176 = vadd.f32 %v3913, %v3936
        %v4177 = vadd.f32 %v3914, %v3936
        %v4178 = vadd.f32 %v3915, %v3936
        %v4179 = vadd.f32 %v3916, %v3936
        %v4180 = vadd.f32 %v3917, %v3936
        %v4181 = vadd.f32 %v3918, %v3936
        %v4182 = vadd.f32 %v3919, %v3936
        %v4183 = vadd.f32 %v3920, %v3936
        %v4184 = vadd.f32 %v3921, %v3936
        %v4185 = vadd.f32 %v3922, %v3936
        %v4186 = vadd.f32 %v3923, %v3936
        %v4187 = vadd.f32 %v3924, %v3936
        %v4188 = vadd.f32 %v3925, %v3936
        %v4189 = vadd.f32 %v3926, %v3936
        %v4190 = vadd.f32 %v3927, %v3936
        %v4191 = vadd.f32 %v3928, %v3936
        %v4192 = vadd.f32 %v3929, %v3936
        %v4193 = vadd.f32 %v3930, %v3936
        %v4194 = vmax.f32 %v3938, 0.0
        %v4195 = vmax.f32 %v3939, 0.0
        %v4196 = vmax.f32 %v3940, 0.0
        %v4197 = vmax.f32 %v3941, 0.0
        %v4198 = vmax.f32 %v3942, 0.0
        %v4199 = vmax.f32 %v3943, 0.0
        %v4200 = vmax.f32 %v3944, 0.0
        %v4201 = vmax.f32 %v3945, 0.0
        %v4202 = vmax.f32 %v3946, 0.0
        %v4203 = vmax.f32 %v3947, 0.0
        %v4204 = vmax.f32 %v3948, 0.0
        %v4205 = vmax.f32 %v3949, 0.0
        %v4206 = vmax.f32 %v3950, 0.0
        %v4207 = vmax.f32 %v3951, 0.0
        %v4208 = vmax.f32 %v3952, 0.0
        %v4209 = vmax.f32 %v3953, 0.0
        %v4210 = vmax.f32 %v3954, 0.0
        %v4211 = vmax.f32 %v3955, 0.0
        %v4212 = vmax.f32 %v3956, 0.0
        %v4213 = vmax.f32 %v3957, 0.0
        %v4214 = vmax.f32 %v3958, 0.0
        %v4215 = vmax.f32 %v3959, 0.0
        %v4216 = vmax.f32 %v3960, 0.0
        %v4217 = vmax.f32 %v3961, 0.0
        %v4218 = vmax.f32 %v3962, 0.0
        %v4219 = vmax.f32 %v3963, 0.0
        %v4220 = vmax.f32 %v3964, 0.0
        %v4221 = vmax.f32 %v3965, 0.0
        %v4222 = vmax.f32 %v3966, 0.0
        %v4223 = vmax.f32 %v3967, 0.0
        %v4224 = vmax.f32 %v3968, 0.0
        %v4225 = vmax.f32 %v3969, 0.0
        %v4226 = vmax.f32 %v3970, 0.0
        %v4227 = vmax.f32 %v3971, 0.0
        %v4228 = vmax.f32 %v3972, 0.0
        %v4229 = vmax.f32 %v3973, 0.0
        %v4230 = vmax.f32 %v3974, 0.0
        %v4231 = vmax.f32 %v3975, 0.0
        %v4232 = vmax.f32 %v3976, 0.0
        %v4233 = vmax.f32 %v3977, 0.0
        %v4234 = vmax.f32 %v3978, 0.0
        %v4235 = vmax.f32 %v3979, 0.0
        %v4236 = vmax.f32 %v3980, 0.0
        %v4237 = vmax.f32 %v3981, 0.0
        %v4238 = vmax.f32 %v3982, 0.0
        %v4239 = vmax.f32 %v3983, 0.0
        %v4240 = vmax.f32 %v3984, 0.0
        %v4241 = vmax.f32 %v3985, 0.0
        %v4242 = vmax.f32 %v3986, 0.0
        %v4243 = vmax.f32 %v3987, 0.0
        %v4244 = vmax.f32 %v3988, 0.0
        %v4245 = vmax.f32 %v3989, 0.0
        %v4246 = vmax.f32 %v3990, 0.0
        %v4247 = vmax.f32 %v3991, 0.0
        %v4248 = vmax.f32 %v3992, 0.0
        %v4249 = vmax.f32 %v3993, 0.0
        %v4250 = vmax.f32 %v3994, 0.0
        %v4251 = vmax.f32 %v3995, 0.0
        %v4252 = vmax.f32 %v3996, 0.0
        %v4253 = vmax.f32 %v3997, 0.0
        %v4254 = vmax.f32 %v3998, 0.0
        %v4255 = vmax.f32 %v3999, 0.0
        %v4256 = vmax.f32 %v4000, 0.0
        %v4257 = vmax.f32 %v4001, 0.0
        %v4258 = vmax.f32 %v4002, 0.0
        %v4259 = vmax.f32 %v4003, 0.0
        %v4260 = vmax.f32 %v4004, 0.0
        %v4261 = vmax.f32 %v4005, 0.0
        %v4262 = vmax.f32 %v4006, 0.0
        %v4263 = vmax.f32 %v4007, 0.0
        %v4264 = vmax.f32 %v4008, 0.0
        %v4265 = vmax.f32 %v4009, 0.0
        %v4266 = vmax.f32 %v4010, 0.0
        %v4267 = vmax.f32 %v4011, 0.0
        %v4268 = vmax.f32 %v4012, 0.0
        %v4269 = vmax.f32 %v4013, 0.0
        %v4270 = vmax.f32 %v4014, 0.0
        %v4271 = vmax.f32 %v4015, 0.0
        %v4272 = vmax.f32 %v4016, 0.0
        %v4273 = vmax.f32 %v4017, 0.0
        %v4274 = vmax.f32 %v4018, 0.0
        %v4275 = vmax.f32 %v4019, 0.0
        %v4276 = vmax.f32 %v4020, 0.0
        %v4277 = vmax.f32 %v4021, 0.0
        %v4278 = vmax.f32 %v4022, 0.0
        %v4279 = vmax.f32 %v4023, 0.0
        %v4280 = vmax.f32 %v4024, 0.0
        %v4281 = vmax.f32 %v4025, 0.0
        %v4282 = vmax.f32 %v4026, 0.0
        %v4283 = vmax.f32 %v4027, 0.0
        %v4284 = vmax.f32 %v4028, 0.0
        %v4285 = vmax.f32 %v4029, 0.0
        %v4286 = vmax.f32 %v4030, 0.0
        %v4287 = vmax.f32 %v4031, 0.0
        %v4288 = vmax.f32 %v4032, 0.0
        %v4289 = vmax.f32 %v4033, 0.0
        %v4290 = vmax.f32 %v4034, 0.0
        %v4291 = vmax.f32 %v4035, 0.0
        %v4292 = vmax.f32 %v4036, 0.0
        %v4293 = vmax.f32 %v4037, 0.0
        %v4294 = vmax.f32 %v4038, 0.0
        %v4295 = vmax.f32 %v4039, 0.0
        %v4296 = vmax.f32 %v4040, 0.0
        %v4297 = vmax.f32 %v4041, 0.0
        %v4298 = vmax.f32 %v4042, 0.0
        %v4299 = vmax.f32 %v4043, 0.0
        %v4300 = vmax.f32 %v4044, 0.0
        %v4301 = vmax.f32 %v4045, 0.0
        %v4302 = vmax.f32 %v4046, 0.0
        %v4303 = vmax.f32 %v4047, 0.0
        %v4304 = vmax.f32 %v4048, 0.0
        %v4305 = vmax.f32 %v4049, 0.0
        %v4306 = vmax.f32 %v4050, 0.0
        %v4307 = vmax.f32 %v4051, 0.0
        %v4308 = vmax.f32 %v4052, 0.0
        %v4309 = vmax.f32 %v4053, 0.0
        %v4310 = vmax.f32 %v4054, 0.0
        %v4311 = vmax.f32 %v4055, 0.0
        %v4312 = vmax.f32 %v4056, 0.0
        %v4313 = vmax.f32 %v4057, 0.0
        %v4314 = vmax.f32 %v4058, 0.0
        %v4315 = vmax.f32 %v4059, 0.0
        %v4316 = vmax.f32 %v4060, 0.0
        %v4317 = vmax.f32 %v4061, 0.0
        %v4318 = vmax.f32 %v4062, 0.0
        %v4319 = vmax.f32 %v4063, 0.0
        %v4320 = vmax.f32 %v4064, 0.0
        %v4321 = vmax.f32 %v4065, 0.0
        %v4322 = vmax.f32 %v4066, 0.0
        %v4323 = vmax.f32 %v4067, 0.0
        %v4324 = vmax.f32 %v4068, 0.0
        %v4325 = vmax.f32 %v4069, 0.0
        %v4326 = vmax.f32 %v4070, 0.0
        %v4327 = vmax.f32 %v4071, 0.0
        %v4328 = vmax.f32 %v4072, 0.0
        %v4329 = vmax.f32 %v4073, 0.0
        %v4330 = vmax.f32 %v4074, 0.0
        %v4331 = vmax.f32 %v4075, 0.0
        %v4332 = vmax.f32 %v4076, 0.0
        %v4333 = vmax.f32 %v4077, 0.0
        %v4334 = vmax.f32 %v4078, 0.0
        %v4335 = vmax.f32 %v4079, 0.0
        %v4336 = vmax.f32 %v4080, 0.0
        %v4337 = vmax.f32 %v4081, 0.0
        %v4338 = vmax.f32 %v4082, 0.0
        %v4339 = vmax.f32 %v4083, 0.0
        %v4340 = vmax.f32 %v4084, 0.0
        %v4341 = vmax.f32 %v4085, 0.0
        %v4342 = vmax.f32 %v4086, 0.0
        %v4343 = vmax.f32 %v4087, 0.0
        %v4344 = vmax.f32 %v4088, 0.0
        %v4345 = vmax.f32 %v4089, 0.0
        %v4346 = vmax.f32 %v4090, 0.0
        %v4347 = vmax.f32 %v4091, 0.0
        %v4348 = vmax.f32 %v4092, 0.0
        %v4349 = vmax.f32 %v4093, 0.0
        %v4350 = vmax.f32 %v4094, 0.0
        %v4351 = vmax.f32 %v4095, 0.0
        %v4352 = vmax.f32 %v4096, 0.0
        %v4353 = vmax.f32 %v4097, 0.0
        %v4354 = vmax.f32 %v4098, 0.0
        %v4355 = vmax.f32 %v4099, 0.0
        %v4356 = vmax.f32 %v4100, 0.0
        %v4357 = vmax.f32 %v4101, 0.0
        %v4358 = vmax.f32 %v4102, 0.0
        %v4359 = vmax.f32 %v4103, 0.0
        %v4360 = vmax.f32 %v4104, 0.0
        %v4361 = vmax.f32 %v4105, 0.0
        %v4362 = vmax.f32 %v4106, 0.0
        %v4363 = vmax.f32 %v4107, 0.0
        %v4364 = vmax.f32 %v4108, 0.0
        %v4365 = vmax.f32 %v4109, 0.0
        %v4366 = vmax.f32 %v4110, 0.0
        %v4367 = vmax.f32 %v4111, 0.0
        %v4368 = vmax.f32 %v4112, 0.0
        %v4369 = vmax.f32 %v4113, 0.0
        %v4370 = vmax.f32 %v4114, 0.0
        %v4371 = vmax.f32 %v4115, 0.0
        %v4372 = vmax.f32 %v4116, 0.0
        %v4373 = vmax.f32 %v4117, 0.0
        %v4374 = vmax.f32 %v4118, 0.0
        %v4375 = vmax.f32 %v4119, 0.0
        %v4376 = vmax.f32 %v4120, 0.0
        %v4377 = vmax.f32 %v4121, 0.0
        %v4378 = vmax.f32 %v4122, 0.0
        %v4379 = vmax.f32 %v4123, 0.0
        %v4380 = vmax.f32 %v4124, 0.0
        %v4381 = vmax.f32 %v4125, 0.0
        %v4382 = vmax.f32 %v4126, 0.0
        %v4383 = vmax.f32 %v4127, 0.0
        %v4384 = vmax.f32 %v4128, 0.0
        %v4385 = vmax.f32 %v4129, 0.0
        %v4386 = vmax.f32 %v4130, 0.0
        %v4387 = vmax.f32 %v4131, 0.0
        %v4388 = vmax.f32 %v4132, 0.0
        %v4389 = vmax.f32 %v4133, 0.0
        %v4390 = vmax.f32 %v4134, 0.0
        %v4391 = vmax.f32 %v4135, 0.0
        %v4392 = vmax.f32 %v4136, 0.0
        %v4393 = vmax.f32 %v4137, 0.0
        %v4394 = vmax.f32 %v4138, 0.0
        %v4395 = vmax.f32 %v4139, 0.0
        %v4396 = vmax.f32 %v4140, 0.0
        %v4397 = vmax.f32 %v4141, 0.0
        %v4398 = vmax.f32 %v4142, 0.0
        %v4399 = vmax.f32 %v4143, 0.0
        %v4400 = vmax.f32 %v4144, 0.0
        %v4401 = vmax.f32 %v4145, 0.0
        %v4402 = vmax.f32 %v4146, 0.0
        %v4403 = vmax.f32 %v4147, 0.0
        %v4404 = vmax.f32 %v4148, 0.0
        %v4405 = vmax.f32 %v4149, 0.0
        %v4406 = vmax.f32 %v4150, 0.0
        %v4407 = vmax.f32 %v4151, 0.0
        %v4408 = vmax.f32 %v4152, 0.0
        %v4409 = vmax.f32 %v4153, 0.0
        %v4410 = vmax.f32 %v4154, 0.0
        %v4411 = vmax.f32 %v4155, 0.0
        %v4412 = vmax.f32 %v4156, 0.0
        %v4413 = vmax.f32 %v4157, 0.0
        %v4414 = vmax.f32 %v4158, 0.0
        %v4415 = vmax.f32 %v4159, 0.0
        %v4416 = vmax.f32 %v4160, 0.0
        %v4417 = vmax.f32 %v4161, 0.0
        %v4418 = vmax.f32 %v4162, 0.0
        %v4419 = vmax.f32 %v4163, 0.0
        %v4420 = vmax.f32 %v4164, 0.0
        %v4421 = vmax.f32 %v4165, 0.0
        %v4422 = vmax.f32 %v4166, 0.0
        %v4423 = vmax.f32 %v4167, 0.0
        %v4424 = vmax.f32 %v4168, 0.0
        %v4425 = vmax.f32 %v4169, 0.0
        %v4426 = vmax.f32 %v4170, 0.0
        %v4427 = vmax.f32 %v4171, 0.0
        %v4428 = vmax.f32 %v4172, 0.0
        %v4429 = vmax.f32 %v4173, 0.0
        %v4430 = vmax.f32 %v4174, 0.0
        %v4431 = vmax.f32 %v4175, 0.0
        %v4432 = vmax.f32 %v4176, 0.0
        %v4433 = vmax.f32 %v4177, 0.0
        %v4434 = vmax.f32 %v4178, 0.0
        %v4435 = vmax.f32 %v4179, 0.0
        %v4436 = vmax.f32 %v4180, 0.0
        %v4437 = vmax.f32 %v4181, 0.0
        %v4438 = vmax.f32 %v4182, 0.0
        %v4439 = vmax.f32 %v4183, 0.0
        %v4440 = vmax.f32 %v4184, 0.0
        %v4441 = vmax.f32 %v4185, 0.0
        %v4442 = vmax.f32 %v4186, 0.0
        %v4443 = vmax.f32 %v4187, 0.0
        %v4444 = vmax.f32 %v4188, 0.0
        %v4445 = vmax.f32 %v4189, 0.0
        %v4446 = vmax.f32 %v4190, 0.0
        %v4447 = vmax.f32 %v4191, 0.0
        %v4448 = vmax.f32 %v4192, 0.0
        %v4449 = vmax.f32 %v4193, 0.0
        %v4450 = vpack.c.bf16 %v4195, %v4194
        %v4451 = vpack.c.bf16 %v4197, %v4196
        %v4452 = vpack.c.bf16 %v4199, %v4198
        %v4453 = vpack.c.bf16 %v4201, %v4200
        %v4454 = vpack.c.bf16 %v4203, %v4202
        %v4455 = vpack.c.bf16 %v4205, %v4204
        %v4456 = vpack.c.bf16 %v4207, %v4206
        %v4457 = vpack.c.bf16 %v4209, %v4208
        %v4458 = vpack.c.bf16 %v4211, %v4210
        %v4459 = vpack.c.bf16 %v4213, %v4212
        %v4460 = vpack.c.bf16 %v4215, %v4214
        %v4461 = vpack.c.bf16 %v4217, %v4216
        %v4462 = vpack.c.bf16 %v4219, %v4218
        %v4463 = vpack.c.bf16 %v4221, %v4220
        %v4464 = vpack.c.bf16 %v4223, %v4222
        %v4465 = vpack.c.bf16 %v4225, %v4224
        %v4466 = vpack.c.bf16 %v4227, %v4226
        %v4467 = vpack.c.bf16 %v4229, %v4228
        %v4468 = vpack.c.bf16 %v4231, %v4230
        %v4469 = vpack.c.bf16 %v4233, %v4232
        %v4470 = vpack.c.bf16 %v4235, %v4234
        %v4471 = vpack.c.bf16 %v4237, %v4236
        %v4472 = vpack.c.bf16 %v4239, %v4238
        %v4473 = vpack.c.bf16 %v4241, %v4240
        %v4474 = vpack.c.bf16 %v4243, %v4242
        %v4475 = vpack.c.bf16 %v4245, %v4244
        %v4476 = vpack.c.bf16 %v4247, %v4246
        %v4477 = vpack.c.bf16 %v4249, %v4248
        %v4478 = vpack.c.bf16 %v4251, %v4250
        %v4479 = vpack.c.bf16 %v4253, %v4252
        %v4480 = vpack.c.bf16 %v4255, %v4254
        %v4481 = vpack.c.bf16 %v4257, %v4256
        %v4482 = vpack.c.bf16 %v4259, %v4258
        %v4483 = vpack.c.bf16 %v4261, %v4260
        %v4484 = vpack.c.bf16 %v4263, %v4262
        %v4485 = vpack.c.bf16 %v4265, %v4264
        %v4486 = vpack.c.bf16 %v4267, %v4266
        %v4487 = vpack.c.bf16 %v4269, %v4268
        %v4488 = vpack.c.bf16 %v4271, %v4270
        %v4489 = vpack.c.bf16 %v4273, %v4272
        %v4490 = vpack.c.bf16 %v4275, %v4274
        %v4491 = vpack.c.bf16 %v4277, %v4276
        %v4492 = vpack.c.bf16 %v4279, %v4278
        %v4493 = vpack.c.bf16 %v4281, %v4280
        %v4494 = vpack.c.bf16 %v4283, %v4282
        %v4495 = vpack.c.bf16 %v4285, %v4284
        %v4496 = vpack.c.bf16 %v4287, %v4286
        %v4497 = vpack.c.bf16 %v4289, %v4288
        %v4498 = vpack.c.bf16 %v4291, %v4290
        %v4499 = vpack.c.bf16 %v4293, %v4292
        %v4500 = vpack.c.bf16 %v4295, %v4294
        %v4501 = vpack.c.bf16 %v4297, %v4296
        %v4502 = vpack.c.bf16 %v4299, %v4298
        %v4503 = vpack.c.bf16 %v4301, %v4300
        %v4504 = vpack.c.bf16 %v4303, %v4302
        %v4505 = vpack.c.bf16 %v4305, %v4304
        %v4506 = vpack.c.bf16 %v4307, %v4306
        %v4507 = vpack.c.bf16 %v4309, %v4308
        %v4508 = vpack.c.bf16 %v4311, %v4310
        %v4509 = vpack.c.bf16 %v4313, %v4312
        %v4510 = vpack.c.bf16 %v4315, %v4314
        %v4511 = vpack.c.bf16 %v4317, %v4316
        %v4512 = vpack.c.bf16 %v4319, %v4318
        %v4513 = vpack.c.bf16 %v4321, %v4320
        %v4514 = vpack.c.bf16 %v4323, %v4322
        %v4515 = vpack.c.bf16 %v4325, %v4324
        %v4516 = vpack.c.bf16 %v4327, %v4326
        %v4517 = vpack.c.bf16 %v4329, %v4328
        %v4518 = vpack.c.bf16 %v4331, %v4330
        %v4519 = vpack.c.bf16 %v4333, %v4332
        %v4520 = vpack.c.bf16 %v4335, %v4334
        %v4521 = vpack.c.bf16 %v4337, %v4336
        %v4522 = vpack.c.bf16 %v4339, %v4338
        %v4523 = vpack.c.bf16 %v4341, %v4340
        %v4524 = vpack.c.bf16 %v4343, %v4342
        %v4525 = vpack.c.bf16 %v4345, %v4344
        %v4526 = vpack.c.bf16 %v4347, %v4346
        %v4527 = vpack.c.bf16 %v4349, %v4348
        %v4528 = vpack.c.bf16 %v4351, %v4350
        %v4529 = vpack.c.bf16 %v4353, %v4352
        %v4530 = vpack.c.bf16 %v4355, %v4354
        %v4531 = vpack.c.bf16 %v4357, %v4356
        %v4532 = vpack.c.bf16 %v4359, %v4358
        %v4533 = vpack.c.bf16 %v4361, %v4360
        %v4534 = vpack.c.bf16 %v4363, %v4362
        %v4535 = vpack.c.bf16 %v4365, %v4364
        %v4536 = vpack.c.bf16 %v4367, %v4366
        %v4537 = vpack.c.bf16 %v4369, %v4368
        %v4538 = vpack.c.bf16 %v4371, %v4370
        %v4539 = vpack.c.bf16 %v4373, %v4372
        %v4540 = vpack.c.bf16 %v4375, %v4374
        %v4541 = vpack.c.bf16 %v4377, %v4376
        %v4542 = vpack.c.bf16 %v4379, %v4378
        %v4543 = vpack.c.bf16 %v4381, %v4380
        %v4544 = vpack.c.bf16 %v4383, %v4382
        %v4545 = vpack.c.bf16 %v4385, %v4384
        %v4546 = vpack.c.bf16 %v4387, %v4386
        %v4547 = vpack.c.bf16 %v4389, %v4388
        %v4548 = vpack.c.bf16 %v4391, %v4390
        %v4549 = vpack.c.bf16 %v4393, %v4392
        %v4550 = vpack.c.bf16 %v4395, %v4394
        %v4551 = vpack.c.bf16 %v4397, %v4396
        %v4552 = vpack.c.bf16 %v4399, %v4398
        %v4553 = vpack.c.bf16 %v4401, %v4400
        %v4554 = vpack.c.bf16 %v4403, %v4402
        %v4555 = vpack.c.bf16 %v4405, %v4404
        %v4556 = vpack.c.bf16 %v4407, %v4406
        %v4557 = vpack.c.bf16 %v4409, %v4408
        %v4558 = vpack.c.bf16 %v4411, %v4410
        %v4559 = vpack.c.bf16 %v4413, %v4412
        %v4560 = vpack.c.bf16 %v4415, %v4414
        %v4561 = vpack.c.bf16 %v4417, %v4416
        %v4562 = vpack.c.bf16 %v4419, %v4418
        %v4563 = vpack.c.bf16 %v4421, %v4420
        %v4564 = vpack.c.bf16 %v4423, %v4422
        %v4565 = vpack.c.bf16 %v4425, %v4424
        %v4566 = vpack.c.bf16 %v4427, %v4426
        %v4567 = vpack.c.bf16 %v4429, %v4428
        %v4568 = vpack.c.bf16 %v4431, %v4430
        %v4569 = vpack.c.bf16 %v4433, %v4432
        %v4570 = vpack.c.bf16 %v4435, %v4434
        %v4571 = vpack.c.bf16 %v4437, %v4436
        %v4572 = vpack.c.bf16 %v4439, %v4438
        %v4573 = vpack.c.bf16 %v4441, %v4440
        %v4574 = vpack.c.bf16 %v4443, %v4442
        %v4575 = vpack.c.bf16 %v4445, %v4444
        %v4576 = vpack.c.bf16 %v4447, %v4446
        %v4577 = vpack.c.bf16 %v4449, %v4448
        %v4706 = vunpack.c.l.b16 %v4450
        %v4707 = vunpack.c.h.b16 %v4450
        %v4708 = vunpack.c.l.b16 %v4451
        %v4709 = vunpack.c.h.b16 %v4451
        %v4710 = vunpack.c.l.b16 %v4452
        %v4711 = vunpack.c.h.b16 %v4452
        %v4712 = vunpack.c.l.b16 %v4453
        %v4713 = vunpack.c.h.b16 %v4453
        %v4714 = vunpack.c.l.b16 %v4454
        %v4715 = vunpack.c.h.b16 %v4454
        %v4716 = vunpack.c.l.b16 %v4455
        %v4717 = vunpack.c.h.b16 %v4455
        %v4718 = vunpack.c.l.b16 %v4456
        %v4719 = vunpack.c.h.b16 %v4456
        %v4720 = vunpack.c.l.b16 %v4457
        %v4721 = vunpack.c.h.b16 %v4457
        %v4722 = vunpack.c.l.b16 %v4458
        %v4723 = vunpack.c.h.b16 %v4458
        %v4724 = vunpack.c.l.b16 %v4459
        %v4725 = vunpack.c.h.b16 %v4459
        %v4726 = vunpack.c.l.b16 %v4460
        %v4727 = vunpack.c.h.b16 %v4460
        %v4728 = vunpack.c.l.b16 %v4461
        %v4729 = vunpack.c.h.b16 %v4461
        %v4730 = vunpack.c.l.b16 %v4462
        %v4731 = vunpack.c.h.b16 %v4462
        %v4732 = vunpack.c.l.b16 %v4463
        %v4733 = vunpack.c.h.b16 %v4463
        %v4734 = vunpack.c.l.b16 %v4464
        %v4735 = vunpack.c.h.b16 %v4464
        %v4736 = vunpack.c.l.b16 %v4465
        %v4737 = vunpack.c.h.b16 %v4465
        %v4738 = vunpack.c.l.b16 %v4466
        %v4739 = vunpack.c.h.b16 %v4466
        %v4740 = vunpack.c.l.b16 %v4467
        %v4741 = vunpack.c.h.b16 %v4467
        %v4742 = vunpack.c.l.b16 %v4468
        %v4743 = vunpack.c.h.b16 %v4468
        %v4744 = vunpack.c.l.b16 %v4469
        %v4745 = vunpack.c.h.b16 %v4469
        %v4746 = vunpack.c.l.b16 %v4470
        %v4747 = vunpack.c.h.b16 %v4470
        %v4748 = vunpack.c.l.b16 %v4471
        %v4749 = vunpack.c.h.b16 %v4471
        %v4750 = vunpack.c.l.b16 %v4472
        %v4751 = vunpack.c.h.b16 %v4472
        %v4752 = vunpack.c.l.b16 %v4473
        %v4753 = vunpack.c.h.b16 %v4473
        %v4754 = vunpack.c.l.b16 %v4474
        %v4755 = vunpack.c.h.b16 %v4474
        %v4756 = vunpack.c.l.b16 %v4475
        %v4757 = vunpack.c.h.b16 %v4475
        %v4758 = vunpack.c.l.b16 %v4476
        %v4759 = vunpack.c.h.b16 %v4476
        %v4760 = vunpack.c.l.b16 %v4477
        %v4761 = vunpack.c.h.b16 %v4477
        %v4762 = vunpack.c.l.b16 %v4478
        %v4763 = vunpack.c.h.b16 %v4478
        %v4764 = vunpack.c.l.b16 %v4479
        %v4765 = vunpack.c.h.b16 %v4479
        %v4766 = vunpack.c.l.b16 %v4480
        %v4767 = vunpack.c.h.b16 %v4480
        %v4768 = vunpack.c.l.b16 %v4481
        %v4769 = vunpack.c.h.b16 %v4481
        %v4770 = vunpack.c.l.b16 %v4482
        %v4771 = vunpack.c.h.b16 %v4482
        %v4772 = vunpack.c.l.b16 %v4483
        %v4773 = vunpack.c.h.b16 %v4483
        %v4774 = vunpack.c.l.b16 %v4484
        %v4775 = vunpack.c.h.b16 %v4484
        %v4776 = vunpack.c.l.b16 %v4485
        %v4777 = vunpack.c.h.b16 %v4485
        %v4778 = vunpack.c.l.b16 %v4486
        %v4779 = vunpack.c.h.b16 %v4486
        %v4780 = vunpack.c.l.b16 %v4487
        %v4781 = vunpack.c.h.b16 %v4487
        %v4782 = vunpack.c.l.b16 %v4488
        %v4783 = vunpack.c.h.b16 %v4488
        %v4784 = vunpack.c.l.b16 %v4489
        %v4785 = vunpack.c.h.b16 %v4489
        %v4786 = vunpack.c.l.b16 %v4490
        %v4787 = vunpack.c.h.b16 %v4490
        %v4788 = vunpack.c.l.b16 %v4491
        %v4789 = vunpack.c.h.b16 %v4491
        %v4790 = vunpack.c.l.b16 %v4492
        %v4791 = vunpack.c.h.b16 %v4492
        %v4792 = vunpack.c.l.b16 %v4493
        %v4793 = vunpack.c.h.b16 %v4493
        %v4794 = vunpack.c.l.b16 %v4494
        %v4795 = vunpack.c.h.b16 %v4494
        %v4796 = vunpack.c.l.b16 %v4495
        %v4797 = vunpack.c.h.b16 %v4495
        %v4798 = vunpack.c.l.b16 %v4496
        %v4799 = vunpack.c.h.b16 %v4496
        %v4800 = vunpack.c.l.b16 %v4497
        %v4801 = vunpack.c.h.b16 %v4497
        %v4802 = vunpack.c.l.b16 %v4498
        %v4803 = vunpack.c.h.b16 %v4498
        %v4804 = vunpack.c.l.b16 %v4499
        %v4805 = vunpack.c.h.b16 %v4499
        %v4806 = vunpack.c.l.b16 %v4500
        %v4807 = vunpack.c.h.b16 %v4500
        %v4808 = vunpack.c.l.b16 %v4501
        %v4809 = vunpack.c.h.b16 %v4501
        %v4810 = vunpack.c.l.b16 %v4502
        %v4811 = vunpack.c.h.b16 %v4502
        %v4812 = vunpack.c.l.b16 %v4503
        %v4813 = vunpack.c.h.b16 %v4503
        %v4814 = vunpack.c.l.b16 %v4504
        %v4815 = vunpack.c.h.b16 %v4504
        %v4816 = vunpack.c.l.b16 %v4505
        %v4817 = vunpack.c.h.b16 %v4505
        %v4818 = vunpack.c.l.b16 %v4506
        %v4819 = vunpack.c.h.b16 %v4506
        %v4820 = vunpack.c.l.b16 %v4507
        %v4821 = vunpack.c.h.b16 %v4507
        %v4822 = vunpack.c.l.b16 %v4508
        %v4823 = vunpack.c.h.b16 %v4508
        %v4824 = vunpack.c.l.b16 %v4509
        %v4825 = vunpack.c.h.b16 %v4509
        %v4826 = vunpack.c.l.b16 %v4510
        %v4827 = vunpack.c.h.b16 %v4510
        %v4828 = vunpack.c.l.b16 %v4511
        %v4829 = vunpack.c.h.b16 %v4511
        %v4830 = vunpack.c.l.b16 %v4512
        %v4831 = vunpack.c.h.b16 %v4512
        %v4832 = vunpack.c.l.b16 %v4513
        %v4833 = vunpack.c.h.b16 %v4513
        %v4834 = vunpack.c.l.b16 %v4514
        %v4835 = vunpack.c.h.b16 %v4514
        %v4836 = vunpack.c.l.b16 %v4515
        %v4837 = vunpack.c.h.b16 %v4515
        %v4838 = vunpack.c.l.b16 %v4516
        %v4839 = vunpack.c.h.b16 %v4516
        %v4840 = vunpack.c.l.b16 %v4517
        %v4841 = vunpack.c.h.b16 %v4517
        %v4842 = vunpack.c.l.b16 %v4518
        %v4843 = vunpack.c.h.b16 %v4518
        %v4844 = vunpack.c.l.b16 %v4519
        %v4845 = vunpack.c.h.b16 %v4519
        %v4846 = vunpack.c.l.b16 %v4520
        %v4847 = vunpack.c.h.b16 %v4520
        %v4848 = vunpack.c.l.b16 %v4521
        %v4849 = vunpack.c.h.b16 %v4521
        %v4850 = vunpack.c.l.b16 %v4522
        %v4851 = vunpack.c.h.b16 %v4522
        %v4852 = vunpack.c.l.b16 %v4523
        %v4853 = vunpack.c.h.b16 %v4523
        %v4854 = vunpack.c.l.b16 %v4524
        %v4855 = vunpack.c.h.b16 %v4524
        %v4856 = vunpack.c.l.b16 %v4525
        %v4857 = vunpack.c.h.b16 %v4525
        %v4858 = vunpack.c.l.b16 %v4526
        %v4859 = vunpack.c.h.b16 %v4526
        %v4860 = vunpack.c.l.b16 %v4527
        %v4861 = vunpack.c.h.b16 %v4527
        %v4862 = vunpack.c.l.b16 %v4528
        %v4863 = vunpack.c.h.b16 %v4528
        %v4864 = vunpack.c.l.b16 %v4529
        %v4865 = vunpack.c.h.b16 %v4529
        %v4866 = vunpack.c.l.b16 %v4530
        %v4867 = vunpack.c.h.b16 %v4530
        %v4868 = vunpack.c.l.b16 %v4531
        %v4869 = vunpack.c.h.b16 %v4531
        %v4870 = vunpack.c.l.b16 %v4532
        %v4871 = vunpack.c.h.b16 %v4532
        %v4872 = vunpack.c.l.b16 %v4533
        %v4873 = vunpack.c.h.b16 %v4533
        %v4874 = vunpack.c.l.b16 %v4534
        %v4875 = vunpack.c.h.b16 %v4534
        %v4876 = vunpack.c.l.b16 %v4535
        %v4877 = vunpack.c.h.b16 %v4535
        %v4878 = vunpack.c.l.b16 %v4536
        %v4879 = vunpack.c.h.b16 %v4536
        %v4880 = vunpack.c.l.b16 %v4537
        %v4881 = vunpack.c.h.b16 %v4537
        %v4882 = vunpack.c.l.b16 %v4538
        %v4883 = vunpack.c.h.b16 %v4538
        %v4884 = vunpack.c.l.b16 %v4539
        %v4885 = vunpack.c.h.b16 %v4539
        %v4886 = vunpack.c.l.b16 %v4540
        %v4887 = vunpack.c.h.b16 %v4540
        %v4888 = vunpack.c.l.b16 %v4541
        %v4889 = vunpack.c.h.b16 %v4541
        %v4890 = vunpack.c.l.b16 %v4542
        %v4891 = vunpack.c.h.b16 %v4542
        %v4892 = vunpack.c.l.b16 %v4543
        %v4893 = vunpack.c.h.b16 %v4543
        %v4894 = vunpack.c.l.b16 %v4544
        %v4895 = vunpack.c.h.b16 %v4544
        %v4896 = vunpack.c.l.b16 %v4545
        %v4897 = vunpack.c.h.b16 %v4545
        %v4898 = vunpack.c.l.b16 %v4546
        %v4899 = vunpack.c.h.b16 %v4546
        %v4900 = vunpack.c.l.b16 %v4547
        %v4901 = vunpack.c.h.b16 %v4547
        %v4902 = vunpack.c.l.b16 %v4548
        %v4903 = vunpack.c.h.b16 %v4548
        %v4904 = vunpack.c.l.b16 %v4549
        %v4905 = vunpack.c.h.b16 %v4549
        %v4906 = vunpack.c.l.b16 %v4550
        %v4907 = vunpack.c.h.b16 %v4550
        %v4908 = vunpack.c.l.b16 %v4551
        %v4909 = vunpack.c.h.b16 %v4551
        %v4910 = vunpack.c.l.b16 %v4552
        %v4911 = vunpack.c.h.b16 %v4552
        %v4912 = vunpack.c.l.b16 %v4553
        %v4913 = vunpack.c.h.b16 %v4553
        %v4914 = vunpack.c.l.b16 %v4554
        %v4915 = vunpack.c.h.b16 %v4554
        %v4916 = vunpack.c.l.b16 %v4555
        %v4917 = vunpack.c.h.b16 %v4555
        %v4918 = vunpack.c.l.b16 %v4556
        %v4919 = vunpack.c.h.b16 %v4556
        %v4920 = vunpack.c.l.b16 %v4557
        %v4921 = vunpack.c.h.b16 %v4557
        %v4922 = vunpack.c.l.b16 %v4558
        %v4923 = vunpack.c.h.b16 %v4558
        %v4924 = vunpack.c.l.b16 %v4559
        %v4925 = vunpack.c.h.b16 %v4559
        %v4926 = vunpack.c.l.b16 %v4560
        %v4927 = vunpack.c.h.b16 %v4560
        %v4928 = vunpack.c.l.b16 %v4561
        %v4929 = vunpack.c.h.b16 %v4561
        %v4930 = vunpack.c.l.b16 %v4562
        %v4931 = vunpack.c.h.b16 %v4562
        %v4932 = vunpack.c.l.b16 %v4563
        %v4933 = vunpack.c.h.b16 %v4563
        %v4934 = vunpack.c.l.b16 %v4564
        %v4935 = vunpack.c.h.b16 %v4564
        %v4936 = vunpack.c.l.b16 %v4565
        %v4937 = vunpack.c.h.b16 %v4565
        %v4938 = vunpack.c.l.b16 %v4566
        %v4939 = vunpack.c.h.b16 %v4566
        %v4940 = vunpack.c.l.b16 %v4567
        %v4941 = vunpack.c.h.b16 %v4567
        %v4942 = vunpack.c.l.b16 %v4568
        %v4943 = vunpack.c.h.b16 %v4568
        %v4944 = vunpack.c.l.b16 %v4569
        %v4945 = vunpack.c.h.b16 %v4569
        %v4946 = vunpack.c.l.b16 %v4570
        %v4947 = vunpack.c.h.b16 %v4570
        %v4948 = vunpack.c.l.b16 %v4571
        %v4949 = vunpack.c.h.b16 %v4571
        %v4950 = vunpack.c.l.b16 %v4572
        %v4951 = vunpack.c.h.b16 %v4572
        %v4952 = vunpack.c.l.b16 %v4573
        %v4953 = vunpack.c.h.b16 %v4573
        %v4954 = vunpack.c.l.b16 %v4574
        %v4955 = vunpack.c.h.b16 %v4574
        %v4956 = vunpack.c.l.b16 %v4575
        %v4957 = vunpack.c.h.b16 %v4575
        %v4958 = vunpack.c.l.b16 %v4576
        %v4959 = vunpack.c.h.b16 %v4576
        %v4960 = vunpack.c.l.b16 %v4577
        %v4961 = vunpack.c.h.b16 %v4577
        %v4962 = vpack.c.b16 %v4706, %v4706
        %v4963 = vpack.c.b16 %v4707, %v4707
        %v4964 = vpack.c.b16 %v4708, %v4708
        %v4965 = vpack.c.b16 %v4709, %v4709
        %v4966 = vpack.c.b16 %v4710, %v4710
        %v4967 = vpack.c.b16 %v4711, %v4711
        %v4968 = vpack.c.b16 %v4712, %v4712
        %v4969 = vpack.c.b16 %v4713, %v4713
        %v4970 = vpack.c.b16 %v4714, %v4714
        %v4971 = vpack.c.b16 %v4715, %v4715
        %v4972 = vpack.c.b16 %v4716, %v4716
        %v4973 = vpack.c.b16 %v4717, %v4717
        %v4974 = vpack.c.b16 %v4718, %v4718
        %v4975 = vpack.c.b16 %v4719, %v4719
        %v4976 = vpack.c.b16 %v4720, %v4720
        %v4977 = vpack.c.b16 %v4721, %v4721
        %v4978 = vpack.c.b16 %v4722, %v4722
        %v4979 = vpack.c.b16 %v4723, %v4723
        %v4980 = vpack.c.b16 %v4724, %v4724
        %v4981 = vpack.c.b16 %v4725, %v4725
        %v4982 = vpack.c.b16 %v4726, %v4726
        %v4983 = vpack.c.b16 %v4727, %v4727
        %v4984 = vpack.c.b16 %v4728, %v4728
        %v4985 = vpack.c.b16 %v4729, %v4729
        %v4986 = vpack.c.b16 %v4730, %v4730
        %v4987 = vpack.c.b16 %v4731, %v4731
        %v4988 = vpack.c.b16 %v4732, %v4732
        %v4989 = vpack.c.b16 %v4733, %v4733
        %v4990 = vpack.c.b16 %v4734, %v4734
        %v4991 = vpack.c.b16 %v4735, %v4735
        %v4992 = vpack.c.b16 %v4736, %v4736
        %v4993 = vpack.c.b16 %v4737, %v4737
        %v4994 = vpack.c.b16 %v4738, %v4738
        %v4995 = vpack.c.b16 %v4739, %v4739
        %v4996 = vpack.c.b16 %v4740, %v4740
        %v4997 = vpack.c.b16 %v4741, %v4741
        %v4998 = vpack.c.b16 %v4742, %v4742
        %v4999 = vpack.c.b16 %v4743, %v4743
        %v5000 = vpack.c.b16 %v4744, %v4744
        %v5001 = vpack.c.b16 %v4745, %v4745
        %v5002 = vpack.c.b16 %v4746, %v4746
        %v5003 = vpack.c.b16 %v4747, %v4747
        %v5004 = vpack.c.b16 %v4748, %v4748
        %v5005 = vpack.c.b16 %v4749, %v4749
        %v5006 = vpack.c.b16 %v4750, %v4750
        %v5007 = vpack.c.b16 %v4751, %v4751
        %v5008 = vpack.c.b16 %v4752, %v4752
        %v5009 = vpack.c.b16 %v4753, %v4753
        %v5010 = vpack.c.b16 %v4754, %v4754
        %v5011 = vpack.c.b16 %v4755, %v4755
        %v5012 = vpack.c.b16 %v4756, %v4756
        %v5013 = vpack.c.b16 %v4757, %v4757
        %v5014 = vpack.c.b16 %v4758, %v4758
        %v5015 = vpack.c.b16 %v4759, %v4759
        %v5016 = vpack.c.b16 %v4760, %v4760
        %v5017 = vpack.c.b16 %v4761, %v4761
        %v5018 = vpack.c.b16 %v4762, %v4762
        %v5019 = vpack.c.b16 %v4763, %v4763
        %v5020 = vpack.c.b16 %v4764, %v4764
        %v5021 = vpack.c.b16 %v4765, %v4765
        %v5022 = vpack.c.b16 %v4766, %v4766
        %v5023 = vpack.c.b16 %v4767, %v4767
        %v5024 = vpack.c.b16 %v4768, %v4768
        %v5025 = vpack.c.b16 %v4769, %v4769
        %v5026 = vpack.c.b16 %v4770, %v4770
        %v5027 = vpack.c.b16 %v4771, %v4771
        %v5028 = vpack.c.b16 %v4772, %v4772
        %v5029 = vpack.c.b16 %v4773, %v4773
        %v5030 = vpack.c.b16 %v4774, %v4774
        %v5031 = vpack.c.b16 %v4775, %v4775
        %v5032 = vpack.c.b16 %v4776, %v4776
        %v5033 = vpack.c.b16 %v4777, %v4777
        %v5034 = vpack.c.b16 %v4778, %v4778
        %v5035 = vpack.c.b16 %v4779, %v4779
        %v5036 = vpack.c.b16 %v4780, %v4780
        %v5037 = vpack.c.b16 %v4781, %v4781
        %v5038 = vpack.c.b16 %v4782, %v4782
        %v5039 = vpack.c.b16 %v4783, %v4783
        %v5040 = vpack.c.b16 %v4784, %v4784
        %v5041 = vpack.c.b16 %v4785, %v4785
        %v5042 = vpack.c.b16 %v4786, %v4786
        %v5043 = vpack.c.b16 %v4787, %v4787
        %v5044 = vpack.c.b16 %v4788, %v4788
        %v5045 = vpack.c.b16 %v4789, %v4789
        %v5046 = vpack.c.b16 %v4790, %v4790
        %v5047 = vpack.c.b16 %v4791, %v4791
        %v5048 = vpack.c.b16 %v4792, %v4792
        %v5049 = vpack.c.b16 %v4793, %v4793
        %v5050 = vpack.c.b16 %v4794, %v4794
        %v5051 = vpack.c.b16 %v4795, %v4795
        %v5052 = vpack.c.b16 %v4796, %v4796
        %v5053 = vpack.c.b16 %v4797, %v4797
        %v5054 = vpack.c.b16 %v4798, %v4798
        %v5055 = vpack.c.b16 %v4799, %v4799
        %v5056 = vpack.c.b16 %v4800, %v4800
        %v5057 = vpack.c.b16 %v4801, %v4801
        %v5058 = vpack.c.b16 %v4802, %v4802
        %v5059 = vpack.c.b16 %v4803, %v4803
        %v5060 = vpack.c.b16 %v4804, %v4804
        %v5061 = vpack.c.b16 %v4805, %v4805
        %v5062 = vpack.c.b16 %v4806, %v4806
        %v5063 = vpack.c.b16 %v4807, %v4807
        %v5064 = vpack.c.b16 %v4808, %v4808
        %v5065 = vpack.c.b16 %v4809, %v4809
        %v5066 = vpack.c.b16 %v4810, %v4810
        %v5067 = vpack.c.b16 %v4811, %v4811
        %v5068 = vpack.c.b16 %v4812, %v4812
        %v5069 = vpack.c.b16 %v4813, %v4813
        %v5070 = vpack.c.b16 %v4814, %v4814
        %v5071 = vpack.c.b16 %v4815, %v4815
        %v5072 = vpack.c.b16 %v4816, %v4816
        %v5073 = vpack.c.b16 %v4817, %v4817
        %v5074 = vpack.c.b16 %v4818, %v4818
        %v5075 = vpack.c.b16 %v4819, %v4819
        %v5076 = vpack.c.b16 %v4820, %v4820
        %v5077 = vpack.c.b16 %v4821, %v4821
        %v5078 = vpack.c.b16 %v4822, %v4822
        %v5079 = vpack.c.b16 %v4823, %v4823
        %v5080 = vpack.c.b16 %v4824, %v4824
        %v5081 = vpack.c.b16 %v4825, %v4825
        %v5082 = vpack.c.b16 %v4826, %v4826
        %v5083 = vpack.c.b16 %v4827, %v4827
        %v5084 = vpack.c.b16 %v4828, %v4828
        %v5085 = vpack.c.b16 %v4829, %v4829
        %v5086 = vpack.c.b16 %v4830, %v4830
        %v5087 = vpack.c.b16 %v4831, %v4831
        %v5088 = vpack.c.b16 %v4832, %v4832
        %v5089 = vpack.c.b16 %v4833, %v4833
        %v5090 = vpack.c.b16 %v4834, %v4834
        %v5091 = vpack.c.b16 %v4835, %v4835
        %v5092 = vpack.c.b16 %v4836, %v4836
        %v5093 = vpack.c.b16 %v4837, %v4837
        %v5094 = vpack.c.b16 %v4838, %v4838
        %v5095 = vpack.c.b16 %v4839, %v4839
        %v5096 = vpack.c.b16 %v4840, %v4840
        %v5097 = vpack.c.b16 %v4841, %v4841
        %v5098 = vpack.c.b16 %v4842, %v4842
        %v5099 = vpack.c.b16 %v4843, %v4843
        %v5100 = vpack.c.b16 %v4844, %v4844
        %v5101 = vpack.c.b16 %v4845, %v4845
        %v5102 = vpack.c.b16 %v4846, %v4846
        %v5103 = vpack.c.b16 %v4847, %v4847
        %v5104 = vpack.c.b16 %v4848, %v4848
        %v5105 = vpack.c.b16 %v4849, %v4849
        %v5106 = vpack.c.b16 %v4850, %v4850
        %v5107 = vpack.c.b16 %v4851, %v4851
        %v5108 = vpack.c.b16 %v4852, %v4852
        %v5109 = vpack.c.b16 %v4853, %v4853
        %v5110 = vpack.c.b16 %v4854, %v4854
        %v5111 = vpack.c.b16 %v4855, %v4855
        %v5112 = vpack.c.b16 %v4856, %v4856
        %v5113 = vpack.c.b16 %v4857, %v4857
        %v5114 = vpack.c.b16 %v4858, %v4858
        %v5115 = vpack.c.b16 %v4859, %v4859
        %v5116 = vpack.c.b16 %v4860, %v4860
        %v5117 = vpack.c.b16 %v4861, %v4861
        %v5118 = vpack.c.b16 %v4862, %v4862
        %v5119 = vpack.c.b16 %v4863, %v4863
        %v5120 = vpack.c.b16 %v4864, %v4864
        %v5121 = vpack.c.b16 %v4865, %v4865
        %v5122 = vpack.c.b16 %v4866, %v4866
        %v5123 = vpack.c.b16 %v4867, %v4867
        %v5124 = vpack.c.b16 %v4868, %v4868
        %v5125 = vpack.c.b16 %v4869, %v4869
        %v5126 = vpack.c.b16 %v4870, %v4870
        %v5127 = vpack.c.b16 %v4871, %v4871
        %v5128 = vpack.c.b16 %v4872, %v4872
        %v5129 = vpack.c.b16 %v4873, %v4873
        %v5130 = vpack.c.b16 %v4874, %v4874
        %v5131 = vpack.c.b16 %v4875, %v4875
        %v5132 = vpack.c.b16 %v4876, %v4876
        %v5133 = vpack.c.b16 %v4877, %v4877
        %v5134 = vpack.c.b16 %v4878, %v4878
        %v5135 = vpack.c.b16 %v4879, %v4879
        %v5136 = vpack.c.b16 %v4880, %v4880
        %v5137 = vpack.c.b16 %v4881, %v4881
        %v5138 = vpack.c.b16 %v4882, %v4882
        %v5139 = vpack.c.b16 %v4883, %v4883
        %v5140 = vpack.c.b16 %v4884, %v4884
        %v5141 = vpack.c.b16 %v4885, %v4885
        %v5142 = vpack.c.b16 %v4886, %v4886
        %v5143 = vpack.c.b16 %v4887, %v4887
        %v5144 = vpack.c.b16 %v4888, %v4888
        %v5145 = vpack.c.b16 %v4889, %v4889
        %v5146 = vpack.c.b16 %v4890, %v4890
        %v5147 = vpack.c.b16 %v4891, %v4891
        %v5148 = vpack.c.b16 %v4892, %v4892
        %v5149 = vpack.c.b16 %v4893, %v4893
        %v5150 = vpack.c.b16 %v4894, %v4894
        %v5151 = vpack.c.b16 %v4895, %v4895
        %v5152 = vpack.c.b16 %v4896, %v4896
        %v5153 = vpack.c.b16 %v4897, %v4897
        %v5154 = vpack.c.b16 %v4898, %v4898
        %v5155 = vpack.c.b16 %v4899, %v4899
        %v5156 = vpack.c.b16 %v4900, %v4900
        %v5157 = vpack.c.b16 %v4901, %v4901
        %v5158 = vpack.c.b16 %v4902, %v4902
        %v5159 = vpack.c.b16 %v4903, %v4903
        %v5160 = vpack.c.b16 %v4904, %v4904
        %v5161 = vpack.c.b16 %v4905, %v4905
        %v5162 = vpack.c.b16 %v4906, %v4906
        %v5163 = vpack.c.b16 %v4907, %v4907
        %v5164 = vpack.c.b16 %v4908, %v4908
        %v5165 = vpack.c.b16 %v4909, %v4909
        %v5166 = vpack.c.b16 %v4910, %v4910
        %v5167 = vpack.c.b16 %v4911, %v4911
        %v5168 = vpack.c.b16 %v4912, %v4912
        %v5169 = vpack.c.b16 %v4913, %v4913
        %v5170 = vpack.c.b16 %v4914, %v4914
        %v5171 = vpack.c.b16 %v4915, %v4915
        %v5172 = vpack.c.b16 %v4916, %v4916
        %v5173 = vpack.c.b16 %v4917, %v4917
        %v5174 = vpack.c.b16 %v4918, %v4918
        %v5175 = vpack.c.b16 %v4919, %v4919
        %v5176 = vpack.c.b16 %v4920, %v4920
        %v5177 = vpack.c.b16 %v4921, %v4921
        %v5178 = vpack.c.b16 %v4922, %v4922
        %v5179 = vpack.c.b16 %v4923, %v4923
        %v5180 = vpack.c.b16 %v4924, %v4924
        %v5181 = vpack.c.b16 %v4925, %v4925
        %v5182 = vpack.c.b16 %v4926, %v4926
        %v5183 = vpack.c.b16 %v4927, %v4927
        %v5184 = vpack.c.b16 %v4928, %v4928
        %v5185 = vpack.c.b16 %v4929, %v4929
        %v5186 = vpack.c.b16 %v4930, %v4930
        %v5187 = vpack.c.b16 %v4931, %v4931
        %v5188 = vpack.c.b16 %v4932, %v4932
        %v5189 = vpack.c.b16 %v4933, %v4933
        %v5190 = vpack.c.b16 %v4934, %v4934
        %v5191 = vpack.c.b16 %v4935, %v4935
        %v5192 = vpack.c.b16 %v4936, %v4936
        %v5193 = vpack.c.b16 %v4937, %v4937
        %v5194 = vpack.c.b16 %v4938, %v4938
        %v5195 = vpack.c.b16 %v4939, %v4939
        %v5196 = vpack.c.b16 %v4940, %v4940
        %v5197 = vpack.c.b16 %v4941, %v4941
        %v5198 = vpack.c.b16 %v4942, %v4942
        %v5199 = vpack.c.b16 %v4943, %v4943
        %v5200 = vpack.c.b16 %v4944, %v4944
        %v5201 = vpack.c.b16 %v4945, %v4945
        %v5202 = vpack.c.b16 %v4946, %v4946
        %v5203 = vpack.c.b16 %v4947, %v4947
        %v5204 = vpack.c.b16 %v4948, %v4948
        %v5205 = vpack.c.b16 %v4949, %v4949
        %v5206 = vpack.c.b16 %v4950, %v4950
        %v5207 = vpack.c.b16 %v4951, %v4951
        %v5208 = vpack.c.b16 %v4952, %v4952
        %v5209 = vpack.c.b16 %v4953, %v4953
        %v5210 = vpack.c.b16 %v4954, %v4954
        %v5211 = vpack.c.b16 %v4955, %v4955
        %v5212 = vpack.c.b16 %v4956, %v4956
        %v5213 = vpack.c.b16 %v4957, %v4957
        %v5214 = vpack.c.b16 %v4958, %v4958
        %v5215 = vpack.c.b16 %v4959, %v4959
        %v5216 = vpack.c.b16 %v4960, %v4960
        %v5217 = vpack.c.b16 %v4961, %v4961
        %vm5474 = vcmask 519168
        %5475 = vst.msk [vmem:[%s280] sm:$0xf] %vm5474, %v4962
        %5476 = vst.msk [vmem:[%s280 + $0x4] sm:$0xf] %vm5474, %v4963
        %5477 = vst.msk [vmem:[%s280 + $0x8] sm:$0xf] %vm5474, %v4964
        %5478 = vst.msk [vmem:[%s280 + $0xc] sm:$0xf] %vm5474, %v4965
        %5479 = vst.msk [vmem:[%s280 + $0x10] sm:$0xf] %vm5474, %v4966
        %5480 = vst.msk [vmem:[%s280 + $0x14] sm:$0xf] %vm5474, %v4967
        %5481 = vst.msk [vmem:[%s280 + $0x18] sm:$0xf] %vm5474, %v4968
        %5482 = vst.msk [vmem:[%s280 + $0x1c] sm:$0xf] %vm5474, %v4969
        %5483 = vst.msk [vmem:[%s280 + $0x20] sm:$0xf] %vm5474, %v4970
        %5484 = vst.msk [vmem:[%s280 + $0x24] sm:$0xf] %vm5474, %v4971
        %5485 = vst.msk [vmem:[%s280 + $0x28] sm:$0xf] %vm5474, %v4972
        %5486 = vst.msk [vmem:[%s280 + $0x2c] sm:$0xf] %vm5474, %v4973
        %5487 = vst.msk [vmem:[%s280 + $0x30] sm:$0xf] %vm5474, %v4974
        %5488 = vst.msk [vmem:[%s280 + $0x34] sm:$0xf] %vm5474, %v4975
        %5489 = vst.msk [vmem:[%s280 + $0x38] sm:$0xf] %vm5474, %v4976
        %5490 = vst.msk [vmem:[%s280 + $0x3c] sm:$0xf] %vm5474, %v4977
        %5491 = vst.msk [vmem:[%s280 + $0x40] sm:$0xf] %vm5474, %v4978
        %5492 = vst.msk [vmem:[%s280 + $0x44] sm:$0xf] %vm5474, %v4979
        %5493 = vst.msk [vmem:[%s280 + $0x48] sm:$0xf] %vm5474, %v4980
        %5494 = vst.msk [vmem:[%s280 + $0x4c] sm:$0xf] %vm5474, %v4981
        %5495 = vst.msk [vmem:[%s280 + $0x50] sm:$0xf] %vm5474, %v4982
        %5496 = vst.msk [vmem:[%s280 + $0x54] sm:$0xf] %vm5474, %v4983
        %5497 = vst.msk [vmem:[%s280 + $0x58] sm:$0xf] %vm5474, %v4984
        %5498 = vst.msk [vmem:[%s280 + $0x5c] sm:$0xf] %vm5474, %v4985
        %5499 = vst.msk [vmem:[%s280 + $0x60] sm:$0xf] %vm5474, %v4986
        %5500 = vst.msk [vmem:[%s280 + $0x64] sm:$0xf] %vm5474, %v4987
        %5501 = vst.msk [vmem:[%s280 + $0x68] sm:$0xf] %vm5474, %v4988
        %5502 = vst.msk [vmem:[%s280 + $0x6c] sm:$0xf] %vm5474, %v4989
        %5503 = vst.msk [vmem:[%s280 + $0x70] sm:$0xf] %vm5474, %v4990
        %5504 = vst.msk [vmem:[%s280 + $0x74] sm:$0xf] %vm5474, %v4991
        %5505 = vst.msk [vmem:[%s280 + $0x78] sm:$0xf] %vm5474, %v4992
        %5506 = vst.msk [vmem:[%s280 + $0x7c] sm:$0xf] %vm5474, %v4993
        %5507 = vst.msk [vmem:[%s280 + $0x80] sm:$0xf] %vm5474, %v4994
        %5508 = vst.msk [vmem:[%s280 + $0x84] sm:$0xf] %vm5474, %v4995
        %5509 = vst.msk [vmem:[%s280 + $0x88] sm:$0xf] %vm5474, %v4996
        %5510 = vst.msk [vmem:[%s280 + $0x8c] sm:$0xf] %vm5474, %v4997
        %5511 = vst.msk [vmem:[%s280 + $0x90] sm:$0xf] %vm5474, %v4998
        %5512 = vst.msk [vmem:[%s280 + $0x94] sm:$0xf] %vm5474, %v4999
        %5513 = vst.msk [vmem:[%s280 + $0x98] sm:$0xf] %vm5474, %v5000
        %5514 = vst.msk [vmem:[%s280 + $0x9c] sm:$0xf] %vm5474, %v5001
        %5515 = vst.msk [vmem:[%s280 + $0xa0] sm:$0xf] %vm5474, %v5002
        %5516 = vst.msk [vmem:[%s280 + $0xa4] sm:$0xf] %vm5474, %v5003
        %5517 = vst.msk [vmem:[%s280 + $0xa8] sm:$0xf] %vm5474, %v5004
        %5518 = vst.msk [vmem:[%s280 + $0xac] sm:$0xf] %vm5474, %v5005
        %5519 = vst.msk [vmem:[%s280 + $0xb0] sm:$0xf] %vm5474, %v5006
        %5520 = vst.msk [vmem:[%s280 + $0xb4] sm:$0xf] %vm5474, %v5007
        %5521 = vst.msk [vmem:[%s280 + $0xb8] sm:$0xf] %vm5474, %v5008
        %5522 = vst.msk [vmem:[%s280 + $0xbc] sm:$0xf] %vm5474, %v5009
        %5523 = vst.msk [vmem:[%s280 + $0xc0] sm:$0xf] %vm5474, %v5010
        %5524 = vst.msk [vmem:[%s280 + $0xc4] sm:$0xf] %vm5474, %v5011
        %5525 = vst.msk [vmem:[%s280 + $0xc8] sm:$0xf] %vm5474, %v5012
        %5526 = vst.msk [vmem:[%s280 + $0xcc] sm:$0xf] %vm5474, %v5013
        %5527 = vst.msk [vmem:[%s280 + $0xd0] sm:$0xf] %vm5474, %v5014
        %5528 = vst.msk [vmem:[%s280 + $0xd4] sm:$0xf] %vm5474, %v5015
        %5529 = vst.msk [vmem:[%s280 + $0xd8] sm:$0xf] %vm5474, %v5016
        %5530 = vst.msk [vmem:[%s280 + $0xdc] sm:$0xf] %vm5474, %v5017
        %5531 = vst.msk [vmem:[%s280 + $0xe0] sm:$0xf] %vm5474, %v5018
        %5532 = vst.msk [vmem:[%s280 + $0xe4] sm:$0xf] %vm5474, %v5019
        %5533 = vst.msk [vmem:[%s280 + $0xe8] sm:$0xf] %vm5474, %v5020
        %5534 = vst.msk [vmem:[%s280 + $0xec] sm:$0xf] %vm5474, %v5021
        %5535 = vst.msk [vmem:[%s280 + $0xf0] sm:$0xf] %vm5474, %v5022
        %5536 = vst.msk [vmem:[%s280 + $0xf4] sm:$0xf] %vm5474, %v5023
        %5537 = vst.msk [vmem:[%s280 + $0xf8] sm:$0xf] %vm5474, %v5024
        %5538 = vst.msk [vmem:[%s280 + $0xfc] sm:$0xf] %vm5474, %v5025
        %5539 = vst.msk [vmem:[%s280 + $0x100] sm:$0xf] %vm5474, %v5026
        %5540 = vst.msk [vmem:[%s280 + $0x104] sm:$0xf] %vm5474, %v5027
        %5541 = vst.msk [vmem:[%s280 + $0x108] sm:$0xf] %vm5474, %v5028
        %5542 = vst.msk [vmem:[%s280 + $0x10c] sm:$0xf] %vm5474, %v5029
        %5543 = vst.msk [vmem:[%s280 + $0x110] sm:$0xf] %vm5474, %v5030
        %5544 = vst.msk [vmem:[%s280 + $0x114] sm:$0xf] %vm5474, %v5031
        %5545 = vst.msk [vmem:[%s280 + $0x118] sm:$0xf] %vm5474, %v5032
        %5546 = vst.msk [vmem:[%s280 + $0x11c] sm:$0xf] %vm5474, %v5033
        %5547 = vst.msk [vmem:[%s280 + $0x120] sm:$0xf] %vm5474, %v5034
        %5548 = vst.msk [vmem:[%s280 + $0x124] sm:$0xf] %vm5474, %v5035
        %5549 = vst.msk [vmem:[%s280 + $0x128] sm:$0xf] %vm5474, %v5036
        %5550 = vst.msk [vmem:[%s280 + $0x12c] sm:$0xf] %vm5474, %v5037
        %5551 = vst.msk [vmem:[%s280 + $0x130] sm:$0xf] %vm5474, %v5038
        %5552 = vst.msk [vmem:[%s280 + $0x134] sm:$0xf] %vm5474, %v5039
        %5553 = vst.msk [vmem:[%s280 + $0x138] sm:$0xf] %vm5474, %v5040
        %5554 = vst.msk [vmem:[%s280 + $0x13c] sm:$0xf] %vm5474, %v5041
        %5555 = vst.msk [vmem:[%s280 + $0x140] sm:$0xf] %vm5474, %v5042
        %5556 = vst.msk [vmem:[%s280 + $0x144] sm:$0xf] %vm5474, %v5043
        %5557 = vst.msk [vmem:[%s280 + $0x148] sm:$0xf] %vm5474, %v5044
        %5558 = vst.msk [vmem:[%s280 + $0x14c] sm:$0xf] %vm5474, %v5045
        %5559 = vst.msk [vmem:[%s280 + $0x150] sm:$0xf] %vm5474, %v5046
        %5560 = vst.msk [vmem:[%s280 + $0x154] sm:$0xf] %vm5474, %v5047
        %5561 = vst.msk [vmem:[%s280 + $0x158] sm:$0xf] %vm5474, %v5048
        %5562 = vst.msk [vmem:[%s280 + $0x15c] sm:$0xf] %vm5474, %v5049
        %5563 = vst.msk [vmem:[%s280 + $0x160] sm:$0xf] %vm5474, %v5050
        %5564 = vst.msk [vmem:[%s280 + $0x164] sm:$0xf] %vm5474, %v5051
        %5565 = vst.msk [vmem:[%s280 + $0x168] sm:$0xf] %vm5474, %v5052
        %5566 = vst.msk [vmem:[%s280 + $0x16c] sm:$0xf] %vm5474, %v5053
        %5567 = vst.msk [vmem:[%s280 + $0x170] sm:$0xf] %vm5474, %v5054
        %5568 = vst.msk [vmem:[%s280 + $0x174] sm:$0xf] %vm5474, %v5055
        %5569 = vst.msk [vmem:[%s280 + $0x178] sm:$0xf] %vm5474, %v5056
        %5570 = vst.msk [vmem:[%s280 + $0x17c] sm:$0xf] %vm5474, %v5057
        %5571 = vst.msk [vmem:[%s280 + $0x180] sm:$0xf] %vm5474, %v5058
        %5572 = vst.msk [vmem:[%s280 + $0x184] sm:$0xf] %vm5474, %v5059
        %5573 = vst.msk [vmem:[%s280 + $0x188] sm:$0xf] %vm5474, %v5060
        %5574 = vst.msk [vmem:[%s280 + $0x18c] sm:$0xf] %vm5474, %v5061
        %5575 = vst.msk [vmem:[%s280 + $0x190] sm:$0xf] %vm5474, %v5062
        %5576 = vst.msk [vmem:[%s280 + $0x194] sm:$0xf] %vm5474, %v5063
        %5577 = vst.msk [vmem:[%s280 + $0x198] sm:$0xf] %vm5474, %v5064
        %5578 = vst.msk [vmem:[%s280 + $0x19c] sm:$0xf] %vm5474, %v5065
        %5579 = vst.msk [vmem:[%s280 + $0x1a0] sm:$0xf] %vm5474, %v5066
        %5580 = vst.msk [vmem:[%s280 + $0x1a4] sm:$0xf] %vm5474, %v5067
        %5581 = vst.msk [vmem:[%s280 + $0x1a8] sm:$0xf] %vm5474, %v5068
        %5582 = vst.msk [vmem:[%s280 + $0x1ac] sm:$0xf] %vm5474, %v5069
        %5583 = vst.msk [vmem:[%s280 + $0x1b0] sm:$0xf] %vm5474, %v5070
        %5584 = vst.msk [vmem:[%s280 + $0x1b4] sm:$0xf] %vm5474, %v5071
        %5585 = vst.msk [vmem:[%s280 + $0x1b8] sm:$0xf] %vm5474, %v5072
        %5586 = vst.msk [vmem:[%s280 + $0x1bc] sm:$0xf] %vm5474, %v5073
        %5587 = vst.msk [vmem:[%s280 + $0x1c0] sm:$0xf] %vm5474, %v5074
        %5588 = vst.msk [vmem:[%s280 + $0x1c4] sm:$0xf] %vm5474, %v5075
        %5589 = vst.msk [vmem:[%s280 + $0x1c8] sm:$0xf] %vm5474, %v5076
        %5590 = vst.msk [vmem:[%s280 + $0x1cc] sm:$0xf] %vm5474, %v5077
        %5591 = vst.msk [vmem:[%s280 + $0x1d0] sm:$0xf] %vm5474, %v5078
        %5592 = vst.msk [vmem:[%s280 + $0x1d4] sm:$0xf] %vm5474, %v5079
        %5593 = vst.msk [vmem:[%s280 + $0x1d8] sm:$0xf] %vm5474, %v5080
        %5594 = vst.msk [vmem:[%s280 + $0x1dc] sm:$0xf] %vm5474, %v5081
        %5595 = vst.msk [vmem:[%s280 + $0x1e0] sm:$0xf] %vm5474, %v5082
        %5596 = vst.msk [vmem:[%s280 + $0x1e4] sm:$0xf] %vm5474, %v5083
        %5597 = vst.msk [vmem:[%s280 + $0x1e8] sm:$0xf] %vm5474, %v5084
        %5598 = vst.msk [vmem:[%s280 + $0x1ec] sm:$0xf] %vm5474, %v5085
        %5599 = vst.msk [vmem:[%s280 + $0x1f0] sm:$0xf] %vm5474, %v5086
        %5600 = vst.msk [vmem:[%s280 + $0x1f4] sm:$0xf] %vm5474, %v5087
        %5601 = vst.msk [vmem:[%s280 + $0x1f8] sm:$0xf] %vm5474, %v5088
        %5602 = vst.msk [vmem:[%s280 + $0x1fc] sm:$0xf] %vm5474, %v5089
        %5603 = vst.msk [vmem:[%s280 + $0x200] sm:$0xf] %vm5474, %v5090
        %5604 = vst.msk [vmem:[%s280 + $0x204] sm:$0xf] %vm5474, %v5091
        %5605 = vst.msk [vmem:[%s280 + $0x208] sm:$0xf] %vm5474, %v5092
        %5606 = vst.msk [vmem:[%s280 + $0x20c] sm:$0xf] %vm5474, %v5093
        %5607 = vst.msk [vmem:[%s280 + $0x210] sm:$0xf] %vm5474, %v5094
        %5608 = vst.msk [vmem:[%s280 + $0x214] sm:$0xf] %vm5474, %v5095
        %5609 = vst.msk [vmem:[%s280 + $0x218] sm:$0xf] %vm5474, %v5096
        %5610 = vst.msk [vmem:[%s280 + $0x21c] sm:$0xf] %vm5474, %v5097
        %5611 = vst.msk [vmem:[%s280 + $0x220] sm:$0xf] %vm5474, %v5098
        %5612 = vst.msk [vmem:[%s280 + $0x224] sm:$0xf] %vm5474, %v5099
        %5613 = vst.msk [vmem:[%s280 + $0x228] sm:$0xf] %vm5474, %v5100
        %5614 = vst.msk [vmem:[%s280 + $0x22c] sm:$0xf] %vm5474, %v5101
        %5615 = vst.msk [vmem:[%s280 + $0x230] sm:$0xf] %vm5474, %v5102
        %5616 = vst.msk [vmem:[%s280 + $0x234] sm:$0xf] %vm5474, %v5103
        %5617 = vst.msk [vmem:[%s280 + $0x238] sm:$0xf] %vm5474, %v5104
        %5618 = vst.msk [vmem:[%s280 + $0x23c] sm:$0xf] %vm5474, %v5105
        %5619 = vst.msk [vmem:[%s280 + $0x240] sm:$0xf] %vm5474, %v5106
        %5620 = vst.msk [vmem:[%s280 + $0x244] sm:$0xf] %vm5474, %v5107
        %5621 = vst.msk [vmem:[%s280 + $0x248] sm:$0xf] %vm5474, %v5108
        %5622 = vst.msk [vmem:[%s280 + $0x24c] sm:$0xf] %vm5474, %v5109
        %5623 = vst.msk [vmem:[%s280 + $0x250] sm:$0xf] %vm5474, %v5110
        %5624 = vst.msk [vmem:[%s280 + $0x254] sm:$0xf] %vm5474, %v5111
        %5625 = vst.msk [vmem:[%s280 + $0x258] sm:$0xf] %vm5474, %v5112
        %5626 = vst.msk [vmem:[%s280 + $0x25c] sm:$0xf] %vm5474, %v5113
        %5627 = vst.msk [vmem:[%s280 + $0x260] sm:$0xf] %vm5474, %v5114
        %5628 = vst.msk [vmem:[%s280 + $0x264] sm:$0xf] %vm5474, %v5115
        %5629 = vst.msk [vmem:[%s280 + $0x268] sm:$0xf] %vm5474, %v5116
        %5630 = vst.msk [vmem:[%s280 + $0x26c] sm:$0xf] %vm5474, %v5117
        %5631 = vst.msk [vmem:[%s280 + $0x270] sm:$0xf] %vm5474, %v5118
        %5632 = vst.msk [vmem:[%s280 + $0x274] sm:$0xf] %vm5474, %v5119
        %5633 = vst.msk [vmem:[%s280 + $0x278] sm:$0xf] %vm5474, %v5120
        %5634 = vst.msk [vmem:[%s280 + $0x27c] sm:$0xf] %vm5474, %v5121
        %5635 = vst.msk [vmem:[%s280 + $0x280] sm:$0xf] %vm5474, %v5122
        %5636 = vst.msk [vmem:[%s280 + $0x284] sm:$0xf] %vm5474, %v5123
        %5637 = vst.msk [vmem:[%s280 + $0x288] sm:$0xf] %vm5474, %v5124
        %5638 = vst.msk [vmem:[%s280 + $0x28c] sm:$0xf] %vm5474, %v5125
        %5639 = vst.msk [vmem:[%s280 + $0x290] sm:$0xf] %vm5474, %v5126
        %5640 = vst.msk [vmem:[%s280 + $0x294] sm:$0xf] %vm5474, %v5127
        %5641 = vst.msk [vmem:[%s280 + $0x298] sm:$0xf] %vm5474, %v5128
        %5642 = vst.msk [vmem:[%s280 + $0x29c] sm:$0xf] %vm5474, %v5129
        %5643 = vst.msk [vmem:[%s280 + $0x2a0] sm:$0xf] %vm5474, %v5130
        %5644 = vst.msk [vmem:[%s280 + $0x2a4] sm:$0xf] %vm5474, %v5131
        %5645 = vst.msk [vmem:[%s280 + $0x2a8] sm:$0xf] %vm5474, %v5132
        %5646 = vst.msk [vmem:[%s280 + $0x2ac] sm:$0xf] %vm5474, %v5133
        %5647 = vst.msk [vmem:[%s280 + $0x2b0] sm:$0xf] %vm5474, %v5134
        %5648 = vst.msk [vmem:[%s280 + $0x2b4] sm:$0xf] %vm5474, %v5135
        %5649 = vst.msk [vmem:[%s280 + $0x2b8] sm:$0xf] %vm5474, %v5136
        %5650 = vst.msk [vmem:[%s280 + $0x2bc] sm:$0xf] %vm5474, %v5137
        %5651 = vst.msk [vmem:[%s280 + $0x2c0] sm:$0xf] %vm5474, %v5138
        %5652 = vst.msk [vmem:[%s280 + $0x2c4] sm:$0xf] %vm5474, %v5139
        %5653 = vst.msk [vmem:[%s280 + $0x2c8] sm:$0xf] %vm5474, %v5140
        %5654 = vst.msk [vmem:[%s280 + $0x2cc] sm:$0xf] %vm5474, %v5141
        %5655 = vst.msk [vmem:[%s280 + $0x2d0] sm:$0xf] %vm5474, %v5142
        %5656 = vst.msk [vmem:[%s280 + $0x2d4] sm:$0xf] %vm5474, %v5143
        %5657 = vst.msk [vmem:[%s280 + $0x2d8] sm:$0xf] %vm5474, %v5144
        %5658 = vst.msk [vmem:[%s280 + $0x2dc] sm:$0xf] %vm5474, %v5145
        %5659 = vst.msk [vmem:[%s280 + $0x2e0] sm:$0xf] %vm5474, %v5146
        %5660 = vst.msk [vmem:[%s280 + $0x2e4] sm:$0xf] %vm5474, %v5147
        %5661 = vst.msk [vmem:[%s280 + $0x2e8] sm:$0xf] %vm5474, %v5148
        %5662 = vst.msk [vmem:[%s280 + $0x2ec] sm:$0xf] %vm5474, %v5149
        %5663 = vst.msk [vmem:[%s280 + $0x2f0] sm:$0xf] %vm5474, %v5150
        %5664 = vst.msk [vmem:[%s280 + $0x2f4] sm:$0xf] %vm5474, %v5151
        %5665 = vst.msk [vmem:[%s280 + $0x2f8] sm:$0xf] %vm5474, %v5152
        %5666 = vst.msk [vmem:[%s280 + $0x2fc] sm:$0xf] %vm5474, %v5153
        %5667 = vst.msk [vmem:[%s280 + $0x300] sm:$0xf] %vm5474, %v5154
        %5668 = vst.msk [vmem:[%s280 + $0x304] sm:$0xf] %vm5474, %v5155
        %5669 = vst.msk [vmem:[%s280 + $0x308] sm:$0xf] %vm5474, %v5156
        %5670 = vst.msk [vmem:[%s280 + $0x30c] sm:$0xf] %vm5474, %v5157
        %5671 = vst.msk [vmem:[%s280 + $0x310] sm:$0xf] %vm5474, %v5158
        %5672 = vst.msk [vmem:[%s280 + $0x314] sm:$0xf] %vm5474, %v5159
        %5673 = vst.msk [vmem:[%s280 + $0x318] sm:$0xf] %vm5474, %v5160
        %5674 = vst.msk [vmem:[%s280 + $0x31c] sm:$0xf] %vm5474, %v5161
        %5675 = vst.msk [vmem:[%s280 + $0x320] sm:$0xf] %vm5474, %v5162
        %5676 = vst.msk [vmem:[%s280 + $0x324] sm:$0xf] %vm5474, %v5163
        %5677 = vst.msk [vmem:[%s280 + $0x328] sm:$0xf] %vm5474, %v5164
        %5678 = vst.msk [vmem:[%s280 + $0x32c] sm:$0xf] %vm5474, %v5165
        %5679 = vst.msk [vmem:[%s280 + $0x330] sm:$0xf] %vm5474, %v5166
        %5680 = vst.msk [vmem:[%s280 + $0x334] sm:$0xf] %vm5474, %v5167
        %5681 = vst.msk [vmem:[%s280 + $0x338] sm:$0xf] %vm5474, %v5168
        %5682 = vst.msk [vmem:[%s280 + $0x33c] sm:$0xf] %vm5474, %v5169
        %5683 = vst.msk [vmem:[%s280 + $0x340] sm:$0xf] %vm5474, %v5170
        %5684 = vst.msk [vmem:[%s280 + $0x344] sm:$0xf] %vm5474, %v5171
        %5685 = vst.msk [vmem:[%s280 + $0x348] sm:$0xf] %vm5474, %v5172
        %5686 = vst.msk [vmem:[%s280 + $0x34c] sm:$0xf] %vm5474, %v5173
        %5687 = vst.msk [vmem:[%s280 + $0x350] sm:$0xf] %vm5474, %v5174
        %5688 = vst.msk [vmem:[%s280 + $0x354] sm:$0xf] %vm5474, %v5175
        %5689 = vst.msk [vmem:[%s280 + $0x358] sm:$0xf] %vm5474, %v5176
        %5690 = vst.msk [vmem:[%s280 + $0x35c] sm:$0xf] %vm5474, %v5177
        %5691 = vst.msk [vmem:[%s280 + $0x360] sm:$0xf] %vm5474, %v5178
        %5692 = vst.msk [vmem:[%s280 + $0x364] sm:$0xf] %vm5474, %v5179
        %5693 = vst.msk [vmem:[%s280 + $0x368] sm:$0xf] %vm5474, %v5180
        %5694 = vst.msk [vmem:[%s280 + $0x36c] sm:$0xf] %vm5474, %v5181
        %5695 = vst.msk [vmem:[%s280 + $0x370] sm:$0xf] %vm5474, %v5182
        %5696 = vst.msk [vmem:[%s280 + $0x374] sm:$0xf] %vm5474, %v5183
        %5697 = vst.msk [vmem:[%s280 + $0x378] sm:$0xf] %vm5474, %v5184
        %5698 = vst.msk [vmem:[%s280 + $0x37c] sm:$0xf] %vm5474, %v5185
        %5699 = vst.msk [vmem:[%s280 + $0x380] sm:$0xf] %vm5474, %v5186
        %5700 = vst.msk [vmem:[%s280 + $0x384] sm:$0xf] %vm5474, %v5187
        %5701 = vst.msk [vmem:[%s280 + $0x388] sm:$0xf] %vm5474, %v5188
        %5702 = vst.msk [vmem:[%s280 + $0x38c] sm:$0xf] %vm5474, %v5189
        %5703 = vst.msk [vmem:[%s280 + $0x390] sm:$0xf] %vm5474, %v5190
        %5704 = vst.msk [vmem:[%s280 + $0x394] sm:$0xf] %vm5474, %v5191
        %5705 = vst.msk [vmem:[%s280 + $0x398] sm:$0xf] %vm5474, %v5192
        %5706 = vst.msk [vmem:[%s280 + $0x39c] sm:$0xf] %vm5474, %v5193
        %5707 = vst.msk [vmem:[%s280 + $0x3a0] sm:$0xf] %vm5474, %v5194
        %5708 = vst.msk [vmem:[%s280 + $0x3a4] sm:$0xf] %vm5474, %v5195
        %5709 = vst.msk [vmem:[%s280 + $0x3a8] sm:$0xf] %vm5474, %v5196
        %5710 = vst.msk [vmem:[%s280 + $0x3ac] sm:$0xf] %vm5474, %v5197
        %5711 = vst.msk [vmem:[%s280 + $0x3b0] sm:$0xf] %vm5474, %v5198
        %5712 = vst.msk [vmem:[%s280 + $0x3b4] sm:$0xf] %vm5474, %v5199
        %5713 = vst.msk [vmem:[%s280 + $0x3b8] sm:$0xf] %vm5474, %v5200
        %5714 = vst.msk [vmem:[%s280 + $0x3bc] sm:$0xf] %vm5474, %v5201
        %5715 = vst.msk [vmem:[%s280 + $0x3c0] sm:$0xf] %vm5474, %v5202
        %5716 = vst.msk [vmem:[%s280 + $0x3c4] sm:$0xf] %vm5474, %v5203
        %5717 = vst.msk [vmem:[%s280 + $0x3c8] sm:$0xf] %vm5474, %v5204
        %5718 = vst.msk [vmem:[%s280 + $0x3cc] sm:$0xf] %vm5474, %v5205
        %5719 = vst.msk [vmem:[%s280 + $0x3d0] sm:$0xf] %vm5474, %v5206
        %5720 = vst.msk [vmem:[%s280 + $0x3d4] sm:$0xf] %vm5474, %v5207
        %5721 = vst.msk [vmem:[%s280 + $0x3d8] sm:$0xf] %vm5474, %v5208
        %5722 = vst.msk [vmem:[%s280 + $0x3dc] sm:$0xf] %vm5474, %v5209
        %5723 = vst.msk [vmem:[%s280 + $0x3e0] sm:$0xf] %vm5474, %v5210
        %5724 = vst.msk [vmem:[%s280 + $0x3e4] sm:$0xf] %vm5474, %v5211
        %5725 = vst.msk [vmem:[%s280 + $0x3e8] sm:$0xf] %vm5474, %v5212
        %5726 = vst.msk [vmem:[%s280 + $0x3ec] sm:$0xf] %vm5474, %v5213
        %5727 = vst.msk [vmem:[%s280 + $0x3f0] sm:$0xf] %vm5474, %v5214
        %5728 = vst.msk [vmem:[%s280 + $0x3f4] sm:$0xf] %vm5474, %v5215
        %5729 = vst.msk [vmem:[%s280 + $0x3f8] sm:$0xf] %vm5474, %v5216
        %5730 = vst.msk [vmem:[%s280 + $0x3fc] sm:$0xf] %vm5474, %v5217
      $region40: #{tpu_custom_call.1} parent=31 // pred_fallthru
        _
      %p5731 = scmp.lt.s32.totalorder %s19, 4
      %s5732 = scalar_select %p5731, %s19, 4
      %p5733 = scmp.lt.s32.totalorder %s20, 0
      %s5734 = scalar_select %p5733, %s20, 0
      %s5735 = smul.addr %s5732, 256
      %s5736 = sadd.s32 %s5734, %s5735
      %s5737 = smul.addr %s5736, 4
      %s5738 = scalar_lea.vmem %s3, %s5737
      // Predicated region
      $region41: #{tpu_custom_call.1} parent=31 // pred_check
        %p5739 = pneg %p139
      $region42: #{tpu_custom_call.1} parent=31 // pred_check_branch
        %5741 = sbr.rel (%p5739) target = $region44
      $region43: #{tpu_custom_call.1} parent=31 // pred_region
        _
      $region44: #{tpu_custom_call.1} parent=31 // pred_fallthru
        _
    $region32: #{tpu_custom_call.1} parent=5 // pred_fallthru
      _
    %p5742 = scmp.le.s32.totalorder 2, %s9
    // Predicated region
    $region45: #{tpu_custom_call.1} parent=5 // pred_check
      %p5743 = pneg %p5742
    $region46: #{tpu_custom_call.1} parent=5 // pred_check_branch
      %5745 = sbr.rel (%p5743) target = $region48
    $region47: #{tpu_custom_call.1} parent=5 // pred_region
      %s5746 = ssub.s32 %s9, 2
      // Predicated region
      $region49: #{tpu_custom_call.1} parent=47 // pred_check
        %p5747 = pneg %p145
      $region50: #{tpu_custom_call.1} parent=47 // pred_check_branch
        %5749 = sbr.rel (%p5747) target = $region52
      $region51: #{tpu_custom_call.1} parent=47 // pred_region
        %p5750 = scmp.lt.s32.totalorder %s22, 4
        %s5751 = scalar_select %p5750, %s22, 4
        %p5752 = scmp.lt.s32.totalorder %s23, 0
        %s5753 = scalar_select %p5752, %s23, 0
        %s5754 = smul.addr %s5751, 256
        %s5755 = sadd.s32 %s5753, %s5754
        %s5756 = smul.addr %s5755, 4
        %s5757 = scalar_lea.vmem %s3, %s5756
      $region52: #{tpu_custom_call.1} parent=47 // pred_fallthru
        _
    $region48: #{tpu_custom_call.1} parent=5 // pred_fallthru
      _
  $region6: #{tpu_custom_call.1} parent=0 // loop_footer
    %s13 = sadd.s32 1, %s9
  $region7: #{tpu_custom_call.1} parent=0 // loop_footer_branch
    %8 = sbr.rel target = $region3
  $region8: #{tpu_custom_call.1} parent=0 // loop_exit
    _

</llo_original>
